<compile_context>
chip_gen: v7x
topology: tpu7x:2x2x1
jax: 0.10.0
libtpu: 0.0.40
codegen_flags: <defaults>
</compile_context>

<pallas_src>
import jax
import jax.numpy as jnp
import numpy as np
from jax.experimental import pallas as pl
from jax.experimental.pallas import tpu as pltpu

LANE = 128


def _toeplitz_conv_matrix(w, width):
    """(3,3,Cin,Cout) HWIO conv kernel -> (3*width*Cin, width*Cout) block-Toeplitz
    matrix.  Row index = (dy, in_col, cin); col index = (out_col, cout).
    Horizontal 'SAME' zero padding is folded into the matrix structure; vertical
    padding is handled by the kernel's two halo rows."""
    kh, kw, cin, cout = w.shape
    ind = np.zeros((width, width, kw), np.float32)
    for j in range(width):
        for dj in range(kw):
            jp = j + dj - 1
            if 0 <= jp < width:
                ind[jp, j, dj] = 1.0
    # WT[dy, in_col, cin, out_col, cout] = w[dy, in_col-out_col+1, cin, cout]
    wt = jnp.einsum('abio,pqb->apiqo', w.astype(jnp.float32), jnp.asarray(ind))
    return wt.reshape(kh * width * cin, width * cout)


def anil_kernel(x_ref, w1_ref, b1_ref, w2_ref, b2_ref, wh_ref, bh_ref,
                out_ref, p1_ref, p2_ref):
    TB, H, WCin = x_ref.shape
    WC1 = w1_ref.shape[1]
    WC2 = w2_ref.shape[1]
    act_dt = p1_ref.dtype        # MXU operand dtype (bf16 or f32); acc is f32

    # Zero ONLY the two vertical-halo rows of each scratch (interior is fully
    # rewritten every grid step; horizontal zero padding lives inside the
    # block-Toeplitz weights).  Done every step -> safe under megacore/2-TC
    # splitting of the "parallel" batch axis.
    p1_ref[:, 0:1, :] = jnp.zeros((TB, 1, WCin), act_dt)
    p1_ref[:, H + 1:H + 2, :] = jnp.zeros((TB, 1, WCin), act_dt)
    p2_ref[:, 0:1, :] = jnp.zeros((TB, 1, WC1), act_dt)
    p2_ref[:, H + 1:H + 2, :] = jnp.zeros((TB, 1, WC1), act_dt)

    # conv1 input interior (rows 1..H); lanes = (width, channel) channel-minor.
    p1_ref[:, 1:H + 1, :] = x_ref[...]           # already in act_dt

    def conv3x3_relu(p_ref, w_ref, b_ref):
        # 3 accumulating MXU matmuls (K = W*C each) against static 1/3
        # row-slices of the Toeplitz weight; no concatenated patch slab,
        # no extra store/reload/cast traffic.  f32 accumulate, f32 bias+ReLU.
        WC = p_ref.shape[2]
        WCo = w_ref.shape[1]
        acc = jnp.zeros((TB * H, WCo), jnp.float32)
        for d in range(3):                              # static unroll
            tap = p_ref[:, d:d + H, :].reshape(TB * H, WC)
            acc = acc + jnp.dot(tap, w_ref[d * WC:(d + 1) * WC, :],
                                preferred_element_type=jnp.float32)
        return jnp.maximum(acc + b_ref[...], 0.0)

    h1 = conv3x3_relu(p1_ref, w1_ref, b1_ref)            # (TB*H, W*C1) f32
    # single f32->act_dt cast on the conv2-input write (instead of 3x on taps)
    p2_ref[:, 1:H + 1, :] = h1.reshape(TB, H, WC1).astype(act_dt)
    h2 = conv3x3_relu(p2_ref, w2_ref, b2_ref)            # (TB*H, W*C2) f32

    # Global average pool + head.  1/(H*W) and the (width, channel) sum are
    # folded into wh_ref (tiled + 128-lane padded in the wrapper); only the
    # height sum happens here (f32), and the output store is a lane-dense
    # (TB, 128) slab.  Head operands in MXU dtype to avoid f32 MXU emulation.
    rowsum = jnp.sum(h2.reshape(TB, H, WC2), axis=1)     # (TB, W*C2) f32
    out_ref[...] = (jnp.dot(rowsum.astype(wh_ref.dtype), wh_ref[...],
                            preferred_element_type=jnp.float32) + bh_ref[...])


def _pick_batch_tile(batch, cap=32):
    """Batch tile: whole batch for B<=8; otherwise the largest multiple-of-8
    divisor of B that is <= min(cap, B//2) so that (a) the (8,128) block rule
    holds on the (TB,128) output and (b) there are always >= 2 grid steps for
    v7x's two TensorCores ('parallel' axis sharding)."""
    if batch <= 8:
        return batch
    limit = min(cap, batch // 2)
    for tb in range(limit - limit % 8, 0, -8):
        if batch % tb == 0:
            return tb
    return batch


def anil_forward(x_nchw, params, *, mxu_dtype=jnp.bfloat16, batch_tile=32):
    """ANILModel.forward: head(features(x)).  x_nchw: (B, Cin, H, W) float32.
    Returns (B, num_classes) float32 logits."""
    w1, b1, w2, b2, wh, bh = params
    B, Cin, H, W = x_nchw.shape
    C1 = w1.shape[-1]
    C2 = w2.shape[-1]
    ncls = wh.shape[-1]
    npad = ((ncls + LANE - 1) // LANE) * LANE

    # ---- wrapper glue: layout + parameter packing (trace-time / tiny) ----
    x = jnp.transpose(x_nchw, (0, 2, 3, 1)).reshape(B, H, W * Cin)
    x = x.astype(mxu_dtype)                               # bf16 halves x DMA
    w1t = _toeplitz_conv_matrix(w1, W).astype(mxu_dtype)  # (3*W*Cin, W*C1)
    w2t = _toeplitz_conv_matrix(w2, W).astype(mxu_dtype)  # (3*W*C1, W*C2)
    b1t = jnp.tile(b1.astype(jnp.float32), W).reshape(1, W * C1)
    b2t = jnp.tile(b2.astype(jnp.float32), W).reshape(1, W * C2)
    # head: fold 1/(H*W) + the (width, channel) sum into wh; pad classes -> 128.
    wht = jnp.tile(wh.astype(jnp.float32) / float(H * W), (W, 1))  # (W*C2, ncls)
    wht = jnp.pad(wht, ((0, 0), (0, npad - ncls))).astype(mxu_dtype)
    bht = jnp.pad(bh.astype(jnp.float32), (0, npad - ncls)).reshape(1, npad)

    TB = _pick_batch_tile(B, batch_tile)
    grid = (B // TB,)

    # Advisory cost hint so XLA schedules the wrapper glue around the kernel.
    flops = int(2 * B * H * ((3 * W * Cin) * (W * C1) + (3 * W * C1) * (W * C2))
                + 2 * B * (W * C2) * npad)
    bytes_accessed = int(sum(a.size * a.dtype.itemsize
                             for a in (x, w1t, b1t, w2t, b2t, wht, bht))
                         + B * npad * 4)
    cost = pl.CostEstimate(flops=flops, transcendentals=0,
                           bytes_accessed=bytes_accessed)

    out = pl.pallas_call(
        anil_kernel,
        out_shape=jax.ShapeDtypeStruct((B, npad), jnp.float32),
        grid=grid,
        in_specs=[
            pl.BlockSpec((TB, H, W * Cin), lambda b: (b, 0, 0)),  # batch-tiled x
            pl.BlockSpec(w1t.shape, lambda b: (0, 0)),
            pl.BlockSpec(b1t.shape, lambda b: (0, 0)),
            pl.BlockSpec(w2t.shape, lambda b: (0, 0)),
            pl.BlockSpec(b2t.shape, lambda b: (0, 0)),
            pl.BlockSpec(wht.shape, lambda b: (0, 0)),
            pl.BlockSpec(bht.shape, lambda b: (0, 0)),
        ],
        out_specs=pl.BlockSpec((TB, npad), lambda b: (b, 0)),
        scratch_shapes=[
            pltpu.VMEM((TB, H + 2, W * Cin), mxu_dtype),  # conv1 in + v-halo
            pltpu.VMEM((TB, H + 2, W * C1), mxu_dtype),   # conv2 in + v-halo
        ],
        compiler_params=pltpu.CompilerParams(
            dimension_semantics=("parallel",),
            vmem_limit_bytes=32 * 1024 * 1024,
        ),
        cost_estimate=cost,
    )(x, w1t, b1t, w2t, b2t, wht, bht)
    return out[:, :ncls]


def reference_forward(x_nchw, params):
    """Pure-JAX reference (mirrors the PyTorch module semantics)."""
    w1, b1, w2, b2, wh, bh = params
    x = jnp.transpose(x_nchw, (0, 2, 3, 1)).astype(jnp.float32)
    y = jax.lax.conv_general_dilated(
        x, w1, (1, 1), "SAME", dimension_numbers=("NHWC", "HWIO", "NHWC")) + b1
    y = jnp.maximum(y, 0.0)
    y = jax.lax.conv_general_dilated(
        y, w2, (1, 1), "SAME", dimension_numbers=("NHWC", "HWIO", "NHWC")) + b2
    y = jnp.maximum(y, 0.0)
    feat = jnp.mean(y, axis=(1, 2))
    return feat @ wh + bh


if __name__ == "__main__":
    Cin, H, W = 4, 16, 16
    C1, C2, ncls = 32, 32, 5

    key = jax.random.PRNGKey(0)
    k1, k2, k3, k4, k5, k6, kx = jax.random.split(key, 7)

    # deterministic synthetic parameters (shapes follow the module's layers)
    w1 = jax.random.normal(k1, (3, 3, Cin, C1), jnp.float32) / np.sqrt(9 * Cin)
    b1 = 0.01 * jax.random.normal(k2, (C1,), jnp.float32)
    w2 = jax.random.normal(k3, (3, 3, C1, C2), jnp.float32) / np.sqrt(9 * C1)
    b2 = 0.01 * jax.random.normal(k4, (C2,), jnp.float32)
    wh = jax.random.normal(k5, (C2, ncls), jnp.float32) / np.sqrt(C2)
    bh = 0.01 * jax.random.normal(k6, (ncls,), jnp.float32)
    params = (w1, b1, w2, b2, wh, bh)

    # --- check 1: module shapes (B=2), exact f32 MXU path, tight tolerance ---
    x2 = jax.random.normal(kx, (2, Cin, H, W), jnp.float32)
    ref2 = jax.block_until_ready(reference_forward(x2, params))
    out_f32 = jax.block_until_ready(
        anil_forward(x2, params, mxu_dtype=jnp.float32))
    np.testing.assert_allclose(np.asarray(out_f32), np.asarray(ref2),
                               rtol=2e-3, atol=2e-3)

    # --- check 2: bf16 MXU operands + bf16 activation scratch (f32 accumulate
    #     / elementwise), B=2 ---
    out_bf16 = jax.block_until_ready(
        anil_forward(x2, params, mxu_dtype=jnp.bfloat16))
    np.testing.assert_allclose(np.asarray(out_bf16), np.asarray(ref2),
                               rtol=5e-2, atol=5e-2)

    # --- check 3: batch-tiled "parallel" grid iterating (B=16 -> TB=8,
    #     grid=(2,)); validates per-step halo handling / scratch reuse ---
    x16 = jax.random.normal(kx, (16, Cin, H, W), jnp.float32)
    ref16 = jax.block_until_ready(reference_forward(x16, params))
    out16 = jax.block_until_ready(
        anil_forward(x16, params, mxu_dtype=jnp.float32))
    np.testing.assert_allclose(np.asarray(out16), np.asarray(ref16),
                               rtol=2e-3, atol=2e-3)

    # --- check 4: raised batch tile (B=64 -> TB=32, grid=(2,)) on the bf16
    #     path; exercises the larger M=512 matmuls + bf16 scratch ---
    x64 = jax.random.normal(kx, (64, Cin, H, W), jnp.float32)
    ref64 = jax.block_until_ready(reference_forward(x64, params))
    out64 = jax.block_until_ready(
        anil_forward(x64, params, mxu_dtype=jnp.bfloat16))
    np.testing.assert_allclose(np.asarray(out64), np.asarray(ref64),
                               rtol=5e-2, atol=5e-2)

    print("KERNEL_OK")
</pallas_src>

<mosaic_0001>
module attributes {stable_mosaic.version = 11 : i64} {
  func.func @anil_kernel(%arg0: i32, %arg1: memref<2x16x64xf32, #tpu.memory_space<vmem>>, %arg2: memref<192x512xf32, #tpu.memory_space<vmem>>, %arg3: memref<1x512xf32, #tpu.memory_space<vmem>>, %arg4: memref<1536x512xf32, #tpu.memory_space<vmem>>, %arg5: memref<1x512xf32, #tpu.memory_space<vmem>>, %arg6: memref<512x128xf32, #tpu.memory_space<vmem>>, %arg7: memref<1x128xf32, #tpu.memory_space<vmem>>, %arg8: memref<2x128xf32, #tpu.memory_space<vmem>>, %arg9: memref<2x18x64xf32, #tpu.memory_space<vmem>>, %arg10: memref<2x18x512xf32, #tpu.memory_space<vmem>>) attributes {dimension_semantics = [#tpu.dimension_semantics<parallel>], iteration_bounds = array<i64: 1>, scalar_prefetch = 0 : i64, scratch_operands = 2 : i64, tpu.core_type = #tpu.core_type<tc>, window_params = [{transform_indices = @transform_0, window_bounds = array<i64: 2, 16, 64>}, {pipeline_mode = #tpu.pipeline_mode<synchronous>, transform_indices = @transform_1, window_bounds = array<i64: 192, 512>}, {pipeline_mode = #tpu.pipeline_mode<synchronous>, transform_indices = @transform_2, window_bounds = array<i64: 1, 512>}, {pipeline_mode = #tpu.pipeline_mode<synchronous>, transform_indices = @transform_3, window_bounds = array<i64: 1536, 512>}, {pipeline_mode = #tpu.pipeline_mode<synchronous>, transform_indices = @transform_4, window_bounds = array<i64: 1, 512>}, {pipeline_mode = #tpu.pipeline_mode<synchronous>, transform_indices = @transform_5, window_bounds = array<i64: 512, 128>}, {pipeline_mode = #tpu.pipeline_mode<synchronous>, transform_indices = @transform_6, window_bounds = array<i64: 1, 128>}, {transform_indices = @transform_7, window_bounds = array<i64: 2, 128>}]} {
    %cst = arith.constant 0.000000e+00 : f32
    %0 = vector.broadcast %cst : f32 to vector<2x1x64xf32>
    %c0 = arith.constant 0 : index
    %c0_0 = arith.constant 0 : index
    %c0_1 = arith.constant 0 : index
    %1 = vector.load %arg9[%c0, %c0_0, %c0_1] : memref<2x18x64xf32, #tpu.memory_space<vmem>>, vector<2x1x64xf32>
    tpu.vector_store %arg9[%c0, %c0_0, %c0_1], %0 {strides = array<i32>} : memref<2x18x64xf32, #tpu.memory_space<vmem>>, vector<2x1x64xf32>,
    %cst_2 = arith.constant 0.000000e+00 : f32
    %2 = vector.broadcast %cst_2 : f32 to vector<2x1x64xf32>
    %c0_3 = arith.constant 0 : index
    %c17 = arith.constant 17 : index
    %c0_4 = arith.constant 0 : index
    %3 = vector.load %arg9[%c0_3, %c17, %c0_4] : memref<2x18x64xf32, #tpu.memory_space<vmem>>, vector<2x1x64xf32>
    tpu.vector_store %arg9[%c0_3, %c17, %c0_4], %2 {strides = array<i32>} : memref<2x18x64xf32, #tpu.memory_space<vmem>>, vector<2x1x64xf32>,
    %cst_5 = arith.constant 0.000000e+00 : f32
    %4 = vector.broadcast %cst_5 : f32 to vector<2x1x512xf32>
    %c0_6 = arith.constant 0 : index
    %c0_7 = arith.constant 0 : index
    %c0_8 = arith.constant 0 : index
    %5 = vector.load %arg10[%c0_6, %c0_7, %c0_8] : memref<2x18x512xf32, #tpu.memory_space<vmem>>, vector<2x1x512xf32>
    tpu.vector_store %arg10[%c0_6, %c0_7, %c0_8], %4 {strides = array<i32>} : memref<2x18x512xf32, #tpu.memory_space<vmem>>, vector<2x1x512xf32>,
    %cst_9 = arith.constant 0.000000e+00 : f32
    %6 = vector.broadcast %cst_9 : f32 to vector<2x1x512xf32>
    %c0_10 = arith.constant 0 : index
    %c17_11 = arith.constant 17 : index
    %c0_12 = arith.constant 0 : index
    %7 = vector.load %arg10[%c0_10, %c17_11, %c0_12] : memref<2x18x512xf32, #tpu.memory_space<vmem>>, vector<2x1x512xf32>
    tpu.vector_store %arg10[%c0_10, %c17_11, %c0_12], %6 {strides = array<i32>} : memref<2x18x512xf32, #tpu.memory_space<vmem>>, vector<2x1x512xf32>,
    %c0_13 = arith.constant 0 : index
    %c0_14 = arith.constant 0 : index
    %c0_15 = arith.constant 0 : index
    %8 = vector.load %arg1[%c0_13, %c0_14, %c0_15] : memref<2x16x64xf32, #tpu.memory_space<vmem>>, vector<2x16x64xf32>
    %c0_16 = arith.constant 0 : index
    %c1 = arith.constant 1 : index
    %c0_17 = arith.constant 0 : index
    %9 = vector.load %arg9[%c0_16, %c1, %c0_17] : memref<2x18x64xf32, #tpu.memory_space<vmem>>, vector<2x16x64xf32>
    tpu.vector_store %arg9[%c0_16, %c1, %c0_17], %8 {strides = array<i32>} : memref<2x18x64xf32, #tpu.memory_space<vmem>>, vector<2x16x64xf32>,
    %cst_18 = arith.constant 0.000000e+00 : f32
    %10 = vector.broadcast %cst_18 : f32 to vector<32x512xf32>
    %c0_19 = arith.constant 0 : index
    %c0_20 = arith.constant 0 : index
    %c0_21 = arith.constant 0 : index
    %11 = vector.load %arg9[%c0_19, %c0_20, %c0_21] : memref<2x18x64xf32, #tpu.memory_space<vmem>>, vector<2x16x64xf32>
    %12 = vector.shape_cast %11 : vector<2x16x64xf32> to vector<32x64xf32>
    %c0_22 = arith.constant 0 : index
    %c0_23 = arith.constant 0 : index
    %13 = vector.load %arg2[%c0_22, %c0_23] : memref<192x512xf32, #tpu.memory_space<vmem>>, vector<64x512xf32>
    %cst_24 = arith.constant dense<0.000000e+00> : vector<32x512xf32>
    %14 = tpu.matmul %12, %13, %cst_24 {dimension_numbers = #tpu.dot_dimension_numbers<[1], [0], [0], [1], [0, 0, 1, 1], [], []>} : vector<32x64xf32>, vector<64x512xf32>, vector<32x512xf32> -> vector<32x512xf32>
    %15 = arith.addf %10, %14 : vector<32x512xf32>
    %c0_25 = arith.constant 0 : index
    %c1_26 = arith.constant 1 : index
    %c0_27 = arith.constant 0 : index
    %16 = vector.load %arg9[%c0_25, %c1_26, %c0_27] : memref<2x18x64xf32, #tpu.memory_space<vmem>>, vector<2x16x64xf32>
    %17 = vector.shape_cast %16 : vector<2x16x64xf32> to vector<32x64xf32>
    %c64 = arith.constant 64 : index
    %c0_28 = arith.constant 0 : index
    %18 = vector.load %arg2[%c64, %c0_28] : memref<192x512xf32, #tpu.memory_space<vmem>>, vector<64x512xf32>
    %cst_29 = arith.constant dense<0.000000e+00> : vector<32x512xf32>
    %19 = tpu.matmul %17, %18, %cst_29 {dimension_numbers = #tpu.dot_dimension_numbers<[1], [0], [0], [1], [0, 0, 1, 1], [], []>} : vector<32x64xf32>, vector<64x512xf32>, vector<32x512xf32> -> vector<32x512xf32>
    %20 = arith.addf %15, %19 : vector<32x512xf32>
    %c0_30 = arith.constant 0 : index
    %c2 = arith.constant 2 : index
    %c0_31 = arith.constant 0 : index
    %21 = vector.load %arg9[%c0_30, %c2, %c0_31] : memref<2x18x64xf32, #tpu.memory_space<vmem>>, vector<2x16x64xf32>
    %22 = vector.shape_cast %21 : vector<2x16x64xf32> to vector<32x64xf32>
    %c128 = arith.constant 128 : index
    %c0_32 = arith.constant 0 : index
    %23 = vector.load %arg2[%c128, %c0_32] : memref<192x512xf32, #tpu.memory_space<vmem>>, vector<64x512xf32>
    %cst_33 = arith.constant dense<0.000000e+00> : vector<32x512xf32>
    %24 = tpu.matmul %22, %23, %cst_33 {dimension_numbers = #tpu.dot_dimension_numbers<[1], [0], [0], [1], [0, 0, 1, 1], [], []>} : vector<32x64xf32>, vector<64x512xf32>, vector<32x512xf32> -> vector<32x512xf32>
    %25 = arith.addf %20, %24 : vector<32x512xf32>
    %c0_34 = arith.constant 0 : index
    %c0_35 = arith.constant 0 : index
    %26 = vector.load %arg3[%c0_34, %c0_35] : memref<1x512xf32, #tpu.memory_space<vmem>>, vector<1x512xf32>
    %27 = vector.broadcast %26 : vector<1x512xf32> to vector<32x512xf32>
    %28 = arith.addf %25, %27 : vector<32x512xf32>
    %cst_36 = arith.constant 0.000000e+00 : f32
    %29 = vector.broadcast %cst_36 : f32 to vector<32x512xf32>
    %30 = arith.maximumf %28, %29 : vector<32x512xf32>
    %31 = vector.shape_cast %30 : vector<32x512xf32> to vector<2x16x512xf32>
    %c0_37 = arith.constant 0 : index
    %c1_38 = arith.constant 1 : index
    %c0_39 = arith.constant 0 : index
    %32 = vector.load %arg10[%c0_37, %c1_38, %c0_39] : memref<2x18x512xf32, #tpu.memory_space<vmem>>, vector<2x16x512xf32>
    tpu.vector_store %arg10[%c0_37, %c1_38, %c0_39], %31 {strides = array<i32>} : memref<2x18x512xf32, #tpu.memory_space<vmem>>, vector<2x16x512xf32>,
    %cst_40 = arith.constant 0.000000e+00 : f32
    %33 = vector.broadcast %cst_40 : f32 to vector<32x512xf32>
    %c0_41 = arith.constant 0 : index
    %c0_42 = arith.constant 0 : index
    %c0_43 = arith.constant 0 : index
    %34 = vector.load %arg10[%c0_41, %c0_42, %c0_43] : memref<2x18x512xf32, #tpu.memory_space<vmem>>, vector<2x16x512xf32>
    %35 = vector.shape_cast %34 : vector<2x16x512xf32> to vector<32x512xf32>
    %c0_44 = arith.constant 0 : index
    %c0_45 = arith.constant 0 : index
    %36 = vector.load %arg4[%c0_44, %c0_45] : memref<1536x512xf32, #tpu.memory_space<vmem>>, vector<512x512xf32>
    %cst_46 = arith.constant dense<0.000000e+00> : vector<32x512xf32>
    %37 = tpu.matmul %35, %36, %cst_46 {dimension_numbers = #tpu.dot_dimension_numbers<[1], [0], [0], [1], [0, 0, 1, 1], [], []>} : vector<32x512xf32>, vector<512x512xf32>, vector<32x512xf32> -> vector<32x512xf32>
    %38 = arith.addf %33, %37 : vector<32x512xf32>
    %c0_47 = arith.constant 0 : index
    %c1_48 = arith.constant 1 : index
    %c0_49 = arith.constant 0 : index
    %39 = vector.load %arg10[%c0_47, %c1_48, %c0_49] : memref<2x18x512xf32, #tpu.memory_space<vmem>>, vector<2x16x512xf32>
    %40 = vector.shape_cast %39 : vector<2x16x512xf32> to vector<32x512xf32>
    %c512 = arith.constant 512 : index
    %c0_50 = arith.constant 0 : index
    %41 = vector.load %arg4[%c512, %c0_50] : memref<1536x512xf32, #tpu.memory_space<vmem>>, vector<512x512xf32>
    %cst_51 = arith.constant dense<0.000000e+00> : vector<32x512xf32>
    %42 = tpu.matmul %40, %41, %cst_51 {dimension_numbers = #tpu.dot_dimension_numbers<[1], [0], [0], [1], [0, 0, 1, 1], [], []>} : vector<32x512xf32>, vector<512x512xf32>, vector<32x512xf32> -> vector<32x512xf32>
    %43 = arith.addf %38, %42 : vector<32x512xf32>
    %c0_52 = arith.constant 0 : index
    %c2_53 = arith.constant 2 : index
    %c0_54 = arith.constant 0 : index
    %44 = vector.load %arg10[%c0_52, %c2_53, %c0_54] : memref<2x18x512xf32, #tpu.memory_space<vmem>>, vector<2x16x512xf32>
    %45 = vector.shape_cast %44 : vector<2x16x512xf32> to vector<32x512xf32>
    %c1024 = arith.constant 1024 : index
    %c0_55 = arith.constant 0 : index
    %46 = vector.load %arg4[%c1024, %c0_55] : memref<1536x512xf32, #tpu.memory_space<vmem>>, vector<512x512xf32>
    %cst_56 = arith.constant dense<0.000000e+00> : vector<32x512xf32>
    %47 = tpu.matmul %45, %46, %cst_56 {dimension_numbers = #tpu.dot_dimension_numbers<[1], [0], [0], [1], [0, 0, 1, 1], [], []>} : vector<32x512xf32>, vector<512x512xf32>, vector<32x512xf32> -> vector<32x512xf32>
    %48 = arith.addf %43, %47 : vector<32x512xf32>
    %c0_57 = arith.constant 0 : index
    %c0_58 = arith.constant 0 : index
    %49 = vector.load %arg5[%c0_57, %c0_58] : memref<1x512xf32, #tpu.memory_space<vmem>>, vector<1x512xf32>
    %50 = vector.broadcast %49 : vector<1x512xf32> to vector<32x512xf32>
    %51 = arith.addf %48, %50 : vector<32x512xf32>
    %cst_59 = arith.constant 0.000000e+00 : f32
    %52 = vector.broadcast %cst_59 : f32 to vector<32x512xf32>
    %53 = arith.maximumf %51, %52 : vector<32x512xf32>
    %54 = vector.shape_cast %53 : vector<32x512xf32> to vector<2x16x512xf32>
    %cst_60 = arith.constant dense<0.000000e+00> : vector<2x512xf32>
    %55 = vector.multi_reduction <add>, %54, %cst_60 [1] : vector<2x16x512xf32> to vector<2x512xf32>
    %c0_61 = arith.constant 0 : index
    %c0_62 = arith.constant 0 : index
    %56 = vector.load %arg6[%c0_61, %c0_62] : memref<512x128xf32, #tpu.memory_space<vmem>>, vector<512x128xf32>
    %cst_63 = arith.constant dense<0.000000e+00> : vector<2x128xf32>
    %57 = tpu.matmul %55, %56, %cst_63 {dimension_numbers = #tpu.dot_dimension_numbers<[1], [0], [0], [1], [0, 0, 1, 1], [], []>} : vector<2x512xf32>, vector<512x128xf32>, vector<2x128xf32> -> vector<2x128xf32>
    %c0_64 = arith.constant 0 : index
    %c0_65 = arith.constant 0 : index
    %58 = vector.load %arg7[%c0_64, %c0_65] : memref<1x128xf32, #tpu.memory_space<vmem>>, vector<1x128xf32>
    %59 = vector.broadcast %58 : vector<1x128xf32> to vector<2x128xf32>
    %60 = arith.addf %57, %59 : vector<2x128xf32>
    %c0_66 = arith.constant 0 : index
    %c0_67 = arith.constant 0 : index
    %61 = vector.load %arg8[%c0_66, %c0_67] : memref<2x128xf32, #tpu.memory_space<vmem>>, vector<2x128xf32>
    tpu.vector_store %arg8[%c0_66, %c0_67], %60 {strides = array<i32>} : memref<2x128xf32, #tpu.memory_space<vmem>>, vector<2x128xf32>,
    return
  }
  func.func @transform_0(%arg0: i32) -> (i32, i32, i32) {
    %c0_i32 = arith.constant 0 : i32
    %c0_i32_0 = arith.constant 0 : i32
    %c0_i32_1 = arith.constant 0 : i32
    return %arg0, %c0_i32, %c0_i32_0 : i32, i32, i32
  }
  func.func @transform_1(%arg0: i32) -> (i32, i32) {
    %c0_i32 = arith.constant 0 : i32
    %c0_i32_0 = arith.constant 0 : i32
    %c0_i32_1 = arith.constant 0 : i32
    return %c0_i32, %c0_i32_0 : i32, i32
  }
  func.func @transform_2(%arg0: i32) -> (i32, i32) {
    %c0_i32 = arith.constant 0 : i32
    %c0_i32_0 = arith.constant 0 : i32
    %c0_i32_1 = arith.constant 0 : i32
    return %c0_i32, %c0_i32_0 : i32, i32
  }
  func.func @transform_3(%arg0: i32) -> (i32, i32) {
    %c0_i32 = arith.constant 0 : i32
    %c0_i32_0 = arith.constant 0 : i32
    %c0_i32_1 = arith.constant 0 : i32
    return %c0_i32, %c0_i32_0 : i32, i32
  }
  func.func @transform_4(%arg0: i32) -> (i32, i32) {
    %c0_i32 = arith.constant 0 : i32
    %c0_i32_0 = arith.constant 0 : i32
    %c0_i32_1 = arith.constant 0 : i32
    return %c0_i32, %c0_i32_0 : i32, i32
  }
  func.func @transform_5(%arg0: i32) -> (i32, i32) {
    %c0_i32 = arith.constant 0 : i32
    %c0_i32_0 = arith.constant 0 : i32
    %c0_i32_1 = arith.constant 0 : i32
    return %c0_i32, %c0_i32_0 : i32, i32
  }
  func.func @transform_6(%arg0: i32) -> (i32, i32) {
    %c0_i32 = arith.constant 0 : i32
    %c0_i32_0 = arith.constant 0 : i32
    %c0_i32_1 = arith.constant 0 : i32
    return %c0_i32, %c0_i32_0 : i32, i32
  }
  func.func @transform_7(%arg0: i32) -> (i32, i32) {
    %c0_i32 = arith.constant 0 : i32
    %c0_i32_0 = arith.constant 0 : i32
    return %arg0, %c0_i32 : i32, i32
  }
}

</mosaic_0001>

<llo_original>
// kernel: tpu_custom_call.1
$region0: #{tpu_custom_call.1}
  #allocation0 [shape = 'u32[]', space=smem, size = 0x4, offset = 0x4, fixed_abs, tag = 'smem constant byte address 0x4 - core index']
  #allocation1 [shape = 'u32[144,128]{1,0:T(1,128)}', space=vmem, size = 0x12000, scoped, tag = 'internal scratch']
  #allocation2 [shape = 'f32[2,18,64]{2,1,0:T(8,128)}', space=vmem, size = 0x6000, scoped, tag = 'scratch operand']
  #allocation3 [shape = 'f32[2,18,512]{2,1,0:T(8,128)}', space=vmem, size = 0x18000, scoped, tag = 'scratch operand']
  %s0 = inlined_call_operand.hbm [shape: f32[2,16,64], index: 0, kind: input, shape index: {}]
  %s1 = inlined_call_operand.hbm [shape: f32[192,512], index: 1, kind: input, shape index: {}]
  %s2 = inlined_call_operand.hbm [shape: f32[1,512], index: 2, kind: input, shape index: {}]
  %s3 = inlined_call_operand.hbm [shape: f32[1536,512], index: 3, kind: input, shape index: {}]
  %s4 = inlined_call_operand.hbm [shape: f32[1,512], index: 4, kind: input, shape index: {}]
  %s5 = inlined_call_operand.hbm [shape: f32[512,128], index: 5, kind: input, shape index: {}]
  %s6 = inlined_call_operand.hbm [shape: f32[1,128], index: 6, kind: input, shape index: {}]
  %s7 = inlined_call_operand.hbm [shape: f32[2,128], index: 7, kind: output, shape index: {}]
  %s8 = sld [smem:[#allocation0]]
  $region66: #{tpu_custom_call.1} parent=0
    _
  %s10 = ssub.s32 1, %s8
  %s11 = scalar_select 0, %s10, %s8
  $region1: #{tpu_custom_call.1} parent=0
    #allocation4 [shape = 'u8[16384]{0}', space=vmem, size = 0x4000, scoped, tag = 'input window, operand 0, single buffered']
    #allocation5 [shape = 's32[1]{0}', space=sflag, size = 0x4, scoped, tag = 'scoped memory for tpu_custom_call.1']
    #allocation6 [shape = 's32[1]{0}', space=sflag, size = 0x4, scoped, tag = 'scoped memory for tpu_custom_call.1']
    #allocation7 [shape = 'u8[393216]{0}', space=vmem, size = 0x60000, scoped, tag = 'input window, operand 1, single buffered']
    #allocation8 [shape = 's32[1]{0}', space=sflag, size = 0x4, scoped, tag = 'scoped memory for tpu_custom_call.1']
    #allocation9 [shape = 'u8[2048]{0}', space=vmem, size = 0x800, scoped, tag = 'input window, operand 2, single buffered']
    #allocation10 [shape = 'u8[3145728]{0}', space=vmem, size = 0x300000, scoped, tag = 'input window, operand 3, single buffered']
    #allocation11 [shape = 's32[1]{0}', space=sflag, size = 0x4, scoped, tag = 'scoped memory for tpu_custom_call.1']
    #allocation12 [shape = 'u8[2048]{0}', space=vmem, size = 0x800, scoped, tag = 'input window, operand 4, single buffered']
    #allocation13 [shape = 'u8[262144]{0}', space=vmem, size = 0x40000, scoped, tag = 'input window, operand 5, single buffered']
    #allocation14 [shape = 's32[1]{0}', space=sflag, size = 0x4, scoped, tag = 'scoped memory for tpu_custom_call.1']
    #allocation15 [shape = 'u8[512]{0}', space=vmem, size = 0x400, scoped, tag = 'input window, operand 6, single buffered']
    #allocation16 [shape = 'u8[1024]{0}', space=vmem, size = 0x400, scoped, tag = 'output window, operand 0, single buffered']
    %12 = vsyncpa [#allocation5], 0
    %13 = vsyncpa [#allocation8], 0
    %14 = vsyncpa [#allocation11], 0
    %15 = vsyncpa [#allocation14], 0
    %16 = vsyncpa [#allocation6], 0
    // Predicated region
    $region2: #{tpu_custom_call.1} parent=1 // pred_check
      _
    $region3: #{tpu_custom_call.1} parent=1 // pred_check_branch
      %18 = sbr.rel (0) target = $region5
    $region4: #{tpu_custom_call.1} parent=1 // pred_region
      %s20 = ssub.s32 512, 512
      %21 = vsyncadd [#allocation5], %s20
      %s22 = sshll.u32 [#allocation4], 4
      %s23 = int_to_ptr.vmem [resolvable:$true] %s22
      %28 = dma.hbm_to_vmem [thread:$0]  %s0, 512, %s23, [#allocation5], 128, 128, 8
    $region5: #{tpu_custom_call.1} parent=1 // pred_fallthru
      _
    // Predicated region
    $region6: #{tpu_custom_call.1} parent=1 // pred_check
      _
    $region7: #{tpu_custom_call.1} parent=1 // pred_check_branch
      %30 = sbr.rel (0) target = $region9
    $region8: #{tpu_custom_call.1} parent=1 // pred_region
      %s32 = ssub.s32 12288, 12288
      %33 = vsyncadd [#allocation8], %s32
      %s34 = sshll.u32 [#allocation7], 4
      %s35 = int_to_ptr.vmem [resolvable:$true] %s34
      %40 = dma.hbm_to_vmem [thread:$0]  %s1, 12288, %s35, [#allocation8], 512, 512, 32
    $region9: #{tpu_custom_call.1} parent=1 // pred_fallthru
      _
    // Predicated region
    $region10: #{tpu_custom_call.1} parent=1 // pred_check
      _
    $region11: #{tpu_custom_call.1} parent=1 // pred_check_branch
      %42 = sbr.rel (0) target = $region13
    $region12: #{tpu_custom_call.1} parent=1 // pred_region
      %s44 = ssub.s32 64, 64
      %45 = vsyncadd [#allocation8], %s44
      %s47 = sshll.u32 [#allocation9], 4
      %s48 = int_to_ptr.vmem [resolvable:$true] %s47
      %50 = dma.hbm_to_vmem [thread:$0]  %s2, 64, %s48, [#allocation8]
    $region13: #{tpu_custom_call.1} parent=1 // pred_fallthru
      _
    // Predicated region
    $region14: #{tpu_custom_call.1} parent=1 // pred_check
      _
    $region15: #{tpu_custom_call.1} parent=1 // pred_check_branch
      %52 = sbr.rel (0) target = $region17
    $region16: #{tpu_custom_call.1} parent=1 // pred_region
      %s54 = ssub.s32 98304, 98304
      %55 = vsyncadd [#allocation11], %s54
      %s56 = sshll.u32 [#allocation10], 4
      %s57 = int_to_ptr.vmem [resolvable:$true] %s56
      %62 = dma.hbm_to_vmem [thread:$0]  %s3, 98304, %s57, [#allocation11], 512, 512, 32
    $region17: #{tpu_custom_call.1} parent=1 // pred_fallthru
      _
    // Predicated region
    $region18: #{tpu_custom_call.1} parent=1 // pred_check
      _
    $region19: #{tpu_custom_call.1} parent=1 // pred_check_branch
      %64 = sbr.rel (0) target = $region21
    $region20: #{tpu_custom_call.1} parent=1 // pred_region
      %s66 = ssub.s32 64, 64
      %67 = vsyncadd [#allocation11], %s66
      %s69 = sshll.u32 [#allocation12], 4
      %s70 = int_to_ptr.vmem [resolvable:$true] %s69
      %72 = dma.hbm_to_vmem [thread:$0]  %s4, 64, %s70, [#allocation11]
    $region21: #{tpu_custom_call.1} parent=1 // pred_fallthru
      _
    // Predicated region
    $region22: #{tpu_custom_call.1} parent=1 // pred_check
      _
    $region23: #{tpu_custom_call.1} parent=1 // pred_check_branch
      %74 = sbr.rel (0) target = $region25
    $region24: #{tpu_custom_call.1} parent=1 // pred_region
      %s76 = ssub.s32 8192, 8192
      %77 = vsyncadd [#allocation14], %s76
      %s78 = sshll.u32 [#allocation13], 4
      %s79 = int_to_ptr.vmem [resolvable:$true] %s78
      %84 = dma.hbm_to_vmem [thread:$0]  %s5, 8192, %s79, [#allocation14], 128, 128, 8
    $region25: #{tpu_custom_call.1} parent=1 // pred_fallthru
      _
    // Predicated region
    $region26: #{tpu_custom_call.1} parent=1 // pred_check
      _
    $region27: #{tpu_custom_call.1} parent=1 // pred_check_branch
      %86 = sbr.rel (0) target = $region29
    $region28: #{tpu_custom_call.1} parent=1 // pred_region
      %s88 = ssub.s32 16, 16
      %89 = vsyncadd [#allocation14], %s88
      %s91 = sshll.u32 [#allocation15], 4
      %s92 = int_to_ptr.vmem [resolvable:$true] %s91
      %94 = dma.hbm_to_vmem [thread:$0]  %s6, 16, %s92, [#allocation14]
    $region29: #{tpu_custom_call.1} parent=1 // pred_fallthru
      _
    // Predicated region
    $region30: #{tpu_custom_call.1} parent=1 // pred_check
      _
    $region31: #{tpu_custom_call.1} parent=1 // pred_check_branch
      %96 = sbr.rel (0) target = $region33
    $region32: #{tpu_custom_call.1} parent=1 // pred_region
      %97 = dma.done [#allocation5], 512
    $region33: #{tpu_custom_call.1} parent=1 // pred_fallthru
      _
    // Predicated region
    $region34: #{tpu_custom_call.1} parent=1 // pred_check
      _
    $region35: #{tpu_custom_call.1} parent=1 // pred_check_branch
      %99 = sbr.rel (0) target = $region37
    $region36: #{tpu_custom_call.1} parent=1 // pred_region
      %100 = dma.done [#allocation8], 12288
    $region37: #{tpu_custom_call.1} parent=1 // pred_fallthru
      _
    // Predicated region
    $region38: #{tpu_custom_call.1} parent=1 // pred_check
      _
    $region39: #{tpu_custom_call.1} parent=1 // pred_check_branch
      %102 = sbr.rel (0) target = $region41
    $region40: #{tpu_custom_call.1} parent=1 // pred_region
      %103 = dma.done [#allocation8], 64
    $region41: #{tpu_custom_call.1} parent=1 // pred_fallthru
      _
    // Predicated region
    $region42: #{tpu_custom_call.1} parent=1 // pred_check
      _
    $region43: #{tpu_custom_call.1} parent=1 // pred_check_branch
      %105 = sbr.rel (0) target = $region45
    $region44: #{tpu_custom_call.1} parent=1 // pred_region
      %106 = dma.done [#allocation11], 98304
    $region45: #{tpu_custom_call.1} parent=1 // pred_fallthru
      _
    // Predicated region
    $region46: #{tpu_custom_call.1} parent=1 // pred_check
      _
    $region47: #{tpu_custom_call.1} parent=1 // pred_check_branch
      %108 = sbr.rel (0) target = $region49
    $region48: #{tpu_custom_call.1} parent=1 // pred_region
      %109 = dma.done [#allocation11], 64
    $region49: #{tpu_custom_call.1} parent=1 // pred_fallthru
      _
    // Predicated region
    $region50: #{tpu_custom_call.1} parent=1 // pred_check
      _
    $region51: #{tpu_custom_call.1} parent=1 // pred_check_branch
      %111 = sbr.rel (0) target = $region53
    $region52: #{tpu_custom_call.1} parent=1 // pred_region
      %112 = dma.done [#allocation14], 8192
    $region53: #{tpu_custom_call.1} parent=1 // pred_fallthru
      _
    // Predicated region
    $region54: #{tpu_custom_call.1} parent=1 // pred_check
      _
    $region55: #{tpu_custom_call.1} parent=1 // pred_check_branch
      %114 = sbr.rel (0) target = $region57
    $region56: #{tpu_custom_call.1} parent=1 // pred_region
      %115 = dma.done [#allocation14], 16
    $region57: #{tpu_custom_call.1} parent=1 // pred_fallthru
      _
    %vm116 = vcmask 516096
    %117 = vst.msk [vmem:[#allocation2] sm:$0x1] %vm116, 0.0
    %118 = vst.msk [vmem:[#allocation2 + $0x18] sm:$0x1] %vm116, 0.0
    %119 = vst.msk [vmem:[#allocation2 + $0x11] sm:$0x1] %vm116, 0.0
    %120 = vst.msk [vmem:[#allocation2 + $0x29] sm:$0x1] %vm116, 0.0
    %v121 = vlaneseq
    %vm122 = vcmp.ge.s32.totalorder %v121, 0
    %vm123 = vcmp.lt.s32.totalorder %v121, 512
    %vm124 = vmand %vm122, %vm123
    %125 = vst.msk [vmem:[#allocation3] ss:$8 sm:$0xf] %vm124, 0.0
    %126 = vst.msk [vmem:[#allocation3] ss:$8 sm:$0x0] %vm124, 0.0
    %s127 = scalar_lea.vmem [#allocation3], 96
    %128 = vst.msk [vmem:[%s127] ss:$8 sm:$0xf] %vm124, 0.0
    %129 = vst.msk [vmem:[%s127] ss:$8 sm:$0x0] %vm124, 0.0
    %s130 = scalar_lea.vmem [#allocation3], 65
    %131 = vst.msk [vmem:[%s130] ss:$8 sm:$0xf] %vm124, 0.0
    %132 = vst.msk [vmem:[%s130] ss:$8 sm:$0x0] %vm124, 0.0
    %s133 = scalar_lea.vmem [#allocation3], 161
    %134 = vst.msk [vmem:[%s133] ss:$8 sm:$0xf] %vm124, 0.0
    %135 = vst.msk [vmem:[%s133] ss:$8 sm:$0x0] %vm124, 0.0
    %v136 = vld [vmem:[#allocation4] sm:$0xff]
    %v137 = vld [vmem:[#allocation4 + $0x8] sm:$0xff]
    %v138 = vld [vmem:[#allocation4 + $0x10] sm:$0xff]
    %v139 = vld [vmem:[#allocation4 + $0x18] sm:$0xff]
    %vm140 = vcmask 523264
    %141 = vst.msk [vmem:[#allocation2 + $0x1] sm:$0xff] %vm140, %v136
    %142 = vst.msk [vmem:[#allocation2 + $0x9] sm:$0xff] %vm140, %v137
    %143 = vst.msk [vmem:[#allocation2 + $0x19] sm:$0xff] %vm140, %v138
    %144 = vst.msk [vmem:[#allocation2 + $0x21] sm:$0xff] %vm140, %v139
    %v145 = vld [vmem:[#allocation2] sm:$0xff]
    %v146 = vld [vmem:[#allocation2 + $0x8] sm:$0xff]
    %v147 = vld [vmem:[#allocation2 + $0x18] sm:$0xff]
    %v148 = vld [vmem:[#allocation2 + $0x20] sm:$0xff]
    %v149 = vld [vmem:[#allocation7] sm:$0xff]
    %v150 = vld [vmem:[#allocation7 + $0x8] sm:$0xff]
    %v151 = vld [vmem:[#allocation7 + $0x10] sm:$0xff]
    %v152 = vld [vmem:[#allocation7 + $0x18] sm:$0xff]
    %v153 = vld [vmem:[#allocation7 + $0x20] sm:$0xff]
    %v154 = vld [vmem:[#allocation7 + $0x28] sm:$0xff]
    %v155 = vld [vmem:[#allocation7 + $0x30] sm:$0xff]
    %v156 = vld [vmem:[#allocation7 + $0x38] sm:$0xff]
    %v157 = vld [vmem:[#allocation7 + $0x40] sm:$0xff]
    %v158 = vld [vmem:[#allocation7 + $0x48] sm:$0xff]
    %v159 = vld [vmem:[#allocation7 + $0x50] sm:$0xff]
    %v160 = vld [vmem:[#allocation7 + $0x58] sm:$0xff]
    %v161 = vld [vmem:[#allocation7 + $0x60] sm:$0xff]
    %v162 = vld [vmem:[#allocation7 + $0x68] sm:$0xff]
    %v163 = vld [vmem:[#allocation7 + $0x70] sm:$0xff]
    %v164 = vld [vmem:[#allocation7 + $0x78] sm:$0xff]
    %v165 = vld [vmem:[#allocation7 + $0x80] sm:$0xff]
    %v166 = vld [vmem:[#allocation7 + $0x88] sm:$0xff]
    %v167 = vld [vmem:[#allocation7 + $0x90] sm:$0xff]
    %v168 = vld [vmem:[#allocation7 + $0x98] sm:$0xff]
    %v169 = vld [vmem:[#allocation7 + $0xa0] sm:$0xff]
    %v170 = vld [vmem:[#allocation7 + $0xa8] sm:$0xff]
    %v171 = vld [vmem:[#allocation7 + $0xb0] sm:$0xff]
    %v172 = vld [vmem:[#allocation7 + $0xb8] sm:$0xff]
    %v173 = vld [vmem:[#allocation7 + $0xc0] sm:$0xff]
    %v174 = vld [vmem:[#allocation7 + $0xc8] sm:$0xff]
    %v175 = vld [vmem:[#allocation7 + $0xd0] sm:$0xff]
    %v176 = vld [vmem:[#allocation7 + $0xd8] sm:$0xff]
    %v177 = vld [vmem:[#allocation7 + $0xe0] sm:$0xff]
    %v178 = vld [vmem:[#allocation7 + $0xe8] sm:$0xff]
    %v179 = vld [vmem:[#allocation7 + $0xf0] sm:$0xff]
    %v180 = vld [vmem:[#allocation7 + $0xf8] sm:$0xff]
    %v181 = vld [vmem:[#allocation2 + $0x1] sm:$0xff]
    %v182 = vld [vmem:[#allocation2 + $0x9] sm:$0xff]
    %v183 = vld [vmem:[#allocation2 + $0x19] sm:$0xff]
    %v184 = vld [vmem:[#allocation2 + $0x21] sm:$0xff]
    %v185 = vld [vmem:[#allocation7 + $0x100] sm:$0xff]
    %v186 = vld [vmem:[#allocation7 + $0x108] sm:$0xff]
    %v187 = vld [vmem:[#allocation7 + $0x110] sm:$0xff]
    %v188 = vld [vmem:[#allocation7 + $0x118] sm:$0xff]
    %v189 = vld [vmem:[#allocation7 + $0x120] sm:$0xff]
    %v190 = vld [vmem:[#allocation7 + $0x128] sm:$0xff]
    %v191 = vld [vmem:[#allocation7 + $0x130] sm:$0xff]
    %v192 = vld [vmem:[#allocation7 + $0x138] sm:$0xff]
    %v193 = vld [vmem:[#allocation7 + $0x140] sm:$0xff]
    %v194 = vld [vmem:[#allocation7 + $0x148] sm:$0xff]
    %v195 = vld [vmem:[#allocation7 + $0x150] sm:$0xff]
    %v196 = vld [vmem:[#allocation7 + $0x158] sm:$0xff]
    %v197 = vld [vmem:[#allocation7 + $0x160] sm:$0xff]
    %v198 = vld [vmem:[#allocation7 + $0x168] sm:$0xff]
    %v199 = vld [vmem:[#allocation7 + $0x170] sm:$0xff]
    %v200 = vld [vmem:[#allocation7 + $0x178] sm:$0xff]
    %v201 = vld [vmem:[#allocation7 + $0x180] sm:$0xff]
    %v202 = vld [vmem:[#allocation7 + $0x188] sm:$0xff]
    %v203 = vld [vmem:[#allocation7 + $0x190] sm:$0xff]
    %v204 = vld [vmem:[#allocation7 + $0x198] sm:$0xff]
    %v205 = vld [vmem:[#allocation7 + $0x1a0] sm:$0xff]
    %v206 = vld [vmem:[#allocation7 + $0x1a8] sm:$0xff]
    %v207 = vld [vmem:[#allocation7 + $0x1b0] sm:$0xff]
    %v208 = vld [vmem:[#allocation7 + $0x1b8] sm:$0xff]
    %v209 = vld [vmem:[#allocation7 + $0x1c0] sm:$0xff]
    %v210 = vld [vmem:[#allocation7 + $0x1c8] sm:$0xff]
    %v211 = vld [vmem:[#allocation7 + $0x1d0] sm:$0xff]
    %v212 = vld [vmem:[#allocation7 + $0x1d8] sm:$0xff]
    %v213 = vld [vmem:[#allocation7 + $0x1e0] sm:$0xff]
    %v214 = vld [vmem:[#allocation7 + $0x1e8] sm:$0xff]
    %v215 = vld [vmem:[#allocation7 + $0x1f0] sm:$0xff]
    %v216 = vld [vmem:[#allocation7 + $0x1f8] sm:$0xff]
    %v218 = vsel %vm140, %v181, 0
    %v221 = vsel %vm140, %v182, 0
    %v224 = vsel %vm140, %v183, 0
    %v227 = vsel %vm140, %v184, 0
    %229 = vmatprep.subr.mxu0 %v186
    %230 = vmatpush1.msra.mxu0 %v185
    %231 = vmatprep.subr.mxu0 %v190
    %232 = vmatpush1.msra.mxu0 %v189
    %233 = vmatprep.subr.mxu0 %v194
    %234 = vmatpush1.msra.mxu0 %v193
    %235 = vmatprep.subr.mxu0 %v198
    %236 = vmatpush1.msra.mxu0 %v197
    %237 = vmatprep.subr.mxu0 %v202
    %238 = vmatpush1.msra.mxu0 %v201
    %239 = vmatprep.subr.mxu0 %v206
    %240 = vmatpush1.msra.mxu0 %v205
    %241 = vmatprep.subr.mxu0 %v210
    %242 = vmatpush1.msra.mxu0 %v209
    %243 = vmatprep.subr.mxu0 %v214
    %244 = vmatpush1.msra.mxu0 %v213
    %245 = vmatprep.subr.mxu0 0.0
    %246 = vmatpush1.msra.mxu0 0.0
    %247 = vmatprep.subr.mxu0 0.0
    %248 = vmatpush1.msra.mxu0 0.0
    %249 = vmatprep.subr.mxu0 0.0
    %250 = vmatpush1.msra.mxu0 0.0
    %251 = vmatprep.subr.mxu0 0.0
    %252 = vmatpush1.msra.mxu0 0.0
    %253 = vmatprep.subr.mxu0 0.0
    %254 = vmatpush1.msra.mxu0 0.0
    %255 = vmatprep.subr.mxu0 0.0
    %256 = vmatpush1.msra.mxu0 0.0
    %257 = vmatprep.subr.mxu0 0.0
    %258 = vmatpush1.msra.mxu0 0.0
    %259 = vmatprep.subr.mxu0 0.0
    %260 = vmatpush1.msra.mxu0 0.0
    %261 = vmatprep.subr.mxu0 0.0
    %262 = vmatpush1.msra.mxu0 0.0
    %263 = vmatprep.subr.mxu0 0.0
    %264 = vmatpush1.msra.mxu0 0.0
    %265 = vmatprep.subr.mxu0 0.0
    %266 = vmatpush1.msra.mxu0 0.0
    %267 = vmatprep.subr.mxu0 0.0
    %268 = vmatpush1.msra.mxu0 0.0
    %269 = vmatprep.subr.mxu0 0.0
    %270 = vmatpush1.msra.mxu0 0.0
    %271 = vmatprep.subr.mxu0 0.0
    %272 = vmatpush1.msra.mxu0 0.0
    %273 = vmatprep.subr.mxu0 0.0
    %274 = vmatpush1.msra.mxu0 0.0
    %275 = vmatprep.subr.mxu0 0.0
    %276 = vmatpush1.msra.mxu0 0.0
    %277 = vmatprep.subr.mxu0 0.0
    %278 = vmatpush1.msra.mxu0 0.0
    %279 = vmatprep.subr.mxu0 0.0
    %280 = vmatpush1.msra.mxu0 0.0
    %281 = vmatprep.subr.mxu0 0.0
    %282 = vmatpush1.msra.mxu0 0.0
    %283 = vmatprep.subr.mxu0 0.0
    %284 = vmatpush1.msra.mxu0 0.0
    %285 = vmatprep.subr.mxu0 0.0
    %286 = vmatpush1.msra.mxu0 0.0
    %287 = vmatprep.subr.mxu0 0.0
    %288 = vmatpush1.msra.mxu0 0.0
    %289 = vmatprep.subr.mxu0 0.0
    %290 = vmatpush1.msra.mxu0 0.0
    %291 = vmatprep.subr.mxu0 0.0
    %292 = vmatpush1.msra.mxu0 0.0
    %293 = vmatprep.mubr.f32.mxu0 0.0
    %294 = vmatmul.mubr.f32.gmra.mrb[0].mxu0 %v218
    %v295 = vpop.f32.mrb[0].mxu0
    %v296 = vadd.f32 0.0, %v295
    %v297 = vpop.f32.mrb[0].mxu0
    %v298 = vadd.f32 0.0, %v297
    %299 = vmatprep.mubr.f32.mxu0 0.0
    %300 = vmatmul.mubr.f32.gmra.mrb[0].mxu0 %v221
    %v301 = vpop.f32.mrb[0].mxu0
    %v302 = vadd.f32 0.0, %v301
    %v303 = vpop.f32.mrb[0].mxu0
    %v304 = vadd.f32 0.0, %v303
    %305 = vmatprep.mubr.f32.mxu0 0.0
    %306 = vmatmul.mubr.f32.gmra.mrb[0].mxu0 %v224
    %v307 = vpop.f32.mrb[0].mxu0
    %v308 = vadd.f32 0.0, %v307
    %v309 = vpop.f32.mrb[0].mxu0
    %v310 = vadd.f32 0.0, %v309
    %311 = vmatprep.mubr.f32.mxu0 0.0
    %312 = vmatmul.mubr.f32.gmra.mrb[0].mxu0 %v227
    %v313 = vpop.f32.mrb[0].mxu0
    %v314 = vadd.f32 0.0, %v313
    %v315 = vpop.f32.mrb[0].mxu0
    %v316 = vadd.f32 0.0, %v315
    %317 = vdwg.mxu0
    %318 = vmatprep.subr.mxu0 %v188
    %319 = vmatpush1.msra.mxu0 %v187
    %320 = vmatprep.subr.mxu0 %v192
    %321 = vmatpush1.msra.mxu0 %v191
    %322 = vmatprep.subr.mxu0 %v196
    %323 = vmatpush1.msra.mxu0 %v195
    %324 = vmatprep.subr.mxu0 %v200
    %325 = vmatpush1.msra.mxu0 %v199
    %326 = vmatprep.subr.mxu0 %v204
    %327 = vmatpush1.msra.mxu0 %v203
    %328 = vmatprep.subr.mxu0 %v208
    %329 = vmatpush1.msra.mxu0 %v207
    %330 = vmatprep.subr.mxu0 %v212
    %331 = vmatpush1.msra.mxu0 %v211
    %332 = vmatprep.subr.mxu0 %v216
    %333 = vmatpush1.msra.mxu0 %v215
    %334 = vmatprep.subr.mxu0 0.0
    %335 = vmatpush1.msra.mxu0 0.0
    %336 = vmatprep.subr.mxu0 0.0
    %337 = vmatpush1.msra.mxu0 0.0
    %338 = vmatprep.subr.mxu0 0.0
    %339 = vmatpush1.msra.mxu0 0.0
    %340 = vmatprep.subr.mxu0 0.0
    %341 = vmatpush1.msra.mxu0 0.0
    %342 = vmatprep.subr.mxu0 0.0
    %343 = vmatpush1.msra.mxu0 0.0
    %344 = vmatprep.subr.mxu0 0.0
    %345 = vmatpush1.msra.mxu0 0.0
    %346 = vmatprep.subr.mxu0 0.0
    %347 = vmatpush1.msra.mxu0 0.0
    %348 = vmatprep.subr.mxu0 0.0
    %349 = vmatpush1.msra.mxu0 0.0
    %350 = vmatprep.subr.mxu0 0.0
    %351 = vmatpush1.msra.mxu0 0.0
    %352 = vmatprep.subr.mxu0 0.0
    %353 = vmatpush1.msra.mxu0 0.0
    %354 = vmatprep.subr.mxu0 0.0
    %355 = vmatpush1.msra.mxu0 0.0
    %356 = vmatprep.subr.mxu0 0.0
    %357 = vmatpush1.msra.mxu0 0.0
    %358 = vmatprep.subr.mxu0 0.0
    %359 = vmatpush1.msra.mxu0 0.0
    %360 = vmatprep.subr.mxu0 0.0
    %361 = vmatpush1.msra.mxu0 0.0
    %362 = vmatprep.subr.mxu0 0.0
    %363 = vmatpush1.msra.mxu0 0.0
    %364 = vmatprep.subr.mxu0 0.0
    %365 = vmatpush1.msra.mxu0 0.0
    %366 = vmatprep.subr.mxu0 0.0
    %367 = vmatpush1.msra.mxu0 0.0
    %368 = vmatprep.subr.mxu0 0.0
    %369 = vmatpush1.msra.mxu0 0.0
    %370 = vmatprep.subr.mxu0 0.0
    %371 = vmatpush1.msra.mxu0 0.0
    %372 = vmatprep.subr.mxu0 0.0
    %373 = vmatpush1.msra.mxu0 0.0
    %374 = vmatprep.subr.mxu0 0.0
    %375 = vmatpush1.msra.mxu0 0.0
    %376 = vmatprep.subr.mxu0 0.0
    %377 = vmatpush1.msra.mxu0 0.0
    %378 = vmatprep.subr.mxu0 0.0
    %379 = vmatpush1.msra.mxu0 0.0
    %380 = vmatprep.subr.mxu0 0.0
    %381 = vmatpush1.msra.mxu0 0.0
    %382 = vmatprep.mubr.f32.mxu0 0.0
    %383 = vmatmul.mubr.f32.gmra.mrb[0].mxu0 %v218
    %v384 = vpop.f32.mrb[0].mxu0
    %v385 = vadd.f32 0.0, %v384
    %v386 = vpop.f32.mrb[0].mxu0
    %v387 = vadd.f32 0.0, %v386
    %388 = vmatprep.mubr.f32.mxu0 0.0
    %389 = vmatmul.mubr.f32.gmra.mrb[0].mxu0 %v221
    %v390 = vpop.f32.mrb[0].mxu0
    %v391 = vadd.f32 0.0, %v390
    %v392 = vpop.f32.mrb[0].mxu0
    %v393 = vadd.f32 0.0, %v392
    %394 = vmatprep.mubr.f32.mxu0 0.0
    %395 = vmatmul.mubr.f32.gmra.mrb[0].mxu0 %v224
    %v396 = vpop.f32.mrb[0].mxu0
    %v397 = vadd.f32 0.0, %v396
    %v398 = vpop.f32.mrb[0].mxu0
    %v399 = vadd.f32 0.0, %v398
    %400 = vmatprep.mubr.f32.mxu0 0.0
    %401 = vmatmul.mubr.f32.gmra.mrb[0].mxu0 %v227
    %v402 = vpop.f32.mrb[0].mxu0
    %v403 = vadd.f32 0.0, %v402
    %v404 = vpop.f32.mrb[0].mxu0
    %v405 = vadd.f32 0.0, %v404
    %406 = vdwg.mxu0
    %v408 = vsel %vm140, %v145, 0
    %v411 = vsel %vm140, %v146, 0
    %v414 = vsel %vm140, %v147, 0
    %v417 = vsel %vm140, %v148, 0
    %419 = vmatprep.subr.mxu0 %v150
    %420 = vmatpush1.msra.mxu0 %v149
    %421 = vmatprep.subr.mxu0 %v154
    %422 = vmatpush1.msra.mxu0 %v153
    %423 = vmatprep.subr.mxu0 %v158
    %424 = vmatpush1.msra.mxu0 %v157
    %425 = vmatprep.subr.mxu0 %v162
    %426 = vmatpush1.msra.mxu0 %v161
    %427 = vmatprep.subr.mxu0 %v166
    %428 = vmatpush1.msra.mxu0 %v165
    %429 = vmatprep.subr.mxu0 %v170
    %430 = vmatpush1.msra.mxu0 %v169
    %431 = vmatprep.subr.mxu0 %v174
    %432 = vmatpush1.msra.mxu0 %v173
    %433 = vmatprep.subr.mxu0 %v178
    %434 = vmatpush1.msra.mxu0 %v177
    %435 = vmatprep.subr.mxu0 0.0
    %436 = vmatpush1.msra.mxu0 0.0
    %437 = vmatprep.subr.mxu0 0.0
    %438 = vmatpush1.msra.mxu0 0.0
    %439 = vmatprep.subr.mxu0 0.0
    %440 = vmatpush1.msra.mxu0 0.0
    %441 = vmatprep.subr.mxu0 0.0
    %442 = vmatpush1.msra.mxu0 0.0
    %443 = vmatprep.subr.mxu0 0.0
    %444 = vmatpush1.msra.mxu0 0.0
    %445 = vmatprep.subr.mxu0 0.0
    %446 = vmatpush1.msra.mxu0 0.0
    %447 = vmatprep.subr.mxu0 0.0
    %448 = vmatpush1.msra.mxu0 0.0
    %449 = vmatprep.subr.mxu0 0.0
    %450 = vmatpush1.msra.mxu0 0.0
    %451 = vmatprep.subr.mxu0 0.0
    %452 = vmatpush1.msra.mxu0 0.0
    %453 = vmatprep.subr.mxu0 0.0
    %454 = vmatpush1.msra.mxu0 0.0
    %455 = vmatprep.subr.mxu0 0.0
    %456 = vmatpush1.msra.mxu0 0.0
    %457 = vmatprep.subr.mxu0 0.0
    %458 = vmatpush1.msra.mxu0 0.0
    %459 = vmatprep.subr.mxu0 0.0
    %460 = vmatpush1.msra.mxu0 0.0
    %461 = vmatprep.subr.mxu0 0.0
    %462 = vmatpush1.msra.mxu0 0.0
    %463 = vmatprep.subr.mxu0 0.0
    %464 = vmatpush1.msra.mxu0 0.0
    %465 = vmatprep.subr.mxu0 0.0
    %466 = vmatpush1.msra.mxu0 0.0
    %467 = vmatprep.subr.mxu0 0.0
    %468 = vmatpush1.msra.mxu0 0.0
    %469 = vmatprep.subr.mxu0 0.0
    %470 = vmatpush1.msra.mxu0 0.0
    %471 = vmatprep.subr.mxu0 0.0
    %472 = vmatpush1.msra.mxu0 0.0
    %473 = vmatprep.subr.mxu0 0.0
    %474 = vmatpush1.msra.mxu0 0.0
    %475 = vmatprep.subr.mxu0 0.0
    %476 = vmatpush1.msra.mxu0 0.0
    %477 = vmatprep.subr.mxu0 0.0
    %478 = vmatpush1.msra.mxu0 0.0
    %479 = vmatprep.subr.mxu0 0.0
    %480 = vmatpush1.msra.mxu0 0.0
    %481 = vmatprep.subr.mxu0 0.0
    %482 = vmatpush1.msra.mxu0 0.0
    %483 = vmatprep.mubr.f32.mxu0 0.0
    %484 = vmatmul.mubr.f32.gmra.mrb[0].mxu0 %v408
    %v485 = vpop.f32.mrb[0].mxu0
    %v486 = vadd.f32 %v296, %v485
    %v487 = vpop.f32.mrb[0].mxu0
    %v488 = vadd.f32 %v298, %v487
    %489 = vmatprep.mubr.f32.mxu0 0.0
    %490 = vmatmul.mubr.f32.gmra.mrb[0].mxu0 %v411
    %v491 = vpop.f32.mrb[0].mxu0
    %v492 = vadd.f32 %v302, %v491
    %v493 = vpop.f32.mrb[0].mxu0
    %v494 = vadd.f32 %v304, %v493
    %495 = vmatprep.mubr.f32.mxu0 0.0
    %496 = vmatmul.mubr.f32.gmra.mrb[0].mxu0 %v414
    %v497 = vpop.f32.mrb[0].mxu0
    %v498 = vadd.f32 %v308, %v497
    %v499 = vpop.f32.mrb[0].mxu0
    %v500 = vadd.f32 %v310, %v499
    %501 = vmatprep.mubr.f32.mxu0 0.0
    %502 = vmatmul.mubr.f32.gmra.mrb[0].mxu0 %v417
    %v503 = vpop.f32.mrb[0].mxu0
    %v504 = vadd.f32 %v314, %v503
    %v505 = vpop.f32.mrb[0].mxu0
    %v506 = vadd.f32 %v316, %v505
    %507 = vdwg.mxu0
    %508 = vmatprep.subr.mxu0 %v152
    %509 = vmatpush1.msra.mxu0 %v151
    %510 = vmatprep.subr.mxu0 %v156
    %511 = vmatpush1.msra.mxu0 %v155
    %512 = vmatprep.subr.mxu0 %v160
    %513 = vmatpush1.msra.mxu0 %v159
    %514 = vmatprep.subr.mxu0 %v164
    %515 = vmatpush1.msra.mxu0 %v163
    %516 = vmatprep.subr.mxu0 %v168
    %517 = vmatpush1.msra.mxu0 %v167
    %518 = vmatprep.subr.mxu0 %v172
    %519 = vmatpush1.msra.mxu0 %v171
    %520 = vmatprep.subr.mxu0 %v176
    %521 = vmatpush1.msra.mxu0 %v175
    %522 = vmatprep.subr.mxu0 %v180
    %523 = vmatpush1.msra.mxu0 %v179
    %524 = vmatprep.subr.mxu0 0.0
    %525 = vmatpush1.msra.mxu0 0.0
    %526 = vmatprep.subr.mxu0 0.0
    %527 = vmatpush1.msra.mxu0 0.0
    %528 = vmatprep.subr.mxu0 0.0
    %529 = vmatpush1.msra.mxu0 0.0
    %530 = vmatprep.subr.mxu0 0.0
    %531 = vmatpush1.msra.mxu0 0.0
    %532 = vmatprep.subr.mxu0 0.0
    %533 = vmatpush1.msra.mxu0 0.0
    %534 = vmatprep.subr.mxu0 0.0
    %535 = vmatpush1.msra.mxu0 0.0
    %536 = vmatprep.subr.mxu0 0.0
    %537 = vmatpush1.msra.mxu0 0.0
    %538 = vmatprep.subr.mxu0 0.0
    %539 = vmatpush1.msra.mxu0 0.0
    %540 = vmatprep.subr.mxu0 0.0
    %541 = vmatpush1.msra.mxu0 0.0
    %542 = vmatprep.subr.mxu0 0.0
    %543 = vmatpush1.msra.mxu0 0.0
    %544 = vmatprep.subr.mxu0 0.0
    %545 = vmatpush1.msra.mxu0 0.0
    %546 = vmatprep.subr.mxu0 0.0
    %547 = vmatpush1.msra.mxu0 0.0
    %548 = vmatprep.subr.mxu0 0.0
    %549 = vmatpush1.msra.mxu0 0.0
    %550 = vmatprep.subr.mxu0 0.0
    %551 = vmatpush1.msra.mxu0 0.0
    %552 = vmatprep.subr.mxu0 0.0
    %553 = vmatpush1.msra.mxu0 0.0
    %554 = vmatprep.subr.mxu0 0.0
    %555 = vmatpush1.msra.mxu0 0.0
    %556 = vmatprep.subr.mxu0 0.0
    %557 = vmatpush1.msra.mxu0 0.0
    %558 = vmatprep.subr.mxu0 0.0
    %559 = vmatpush1.msra.mxu0 0.0
    %560 = vmatprep.subr.mxu0 0.0
    %561 = vmatpush1.msra.mxu0 0.0
    %562 = vmatprep.subr.mxu0 0.0
    %563 = vmatpush1.msra.mxu0 0.0
    %564 = vmatprep.subr.mxu0 0.0
    %565 = vmatpush1.msra.mxu0 0.0
    %566 = vmatprep.subr.mxu0 0.0
    %567 = vmatpush1.msra.mxu0 0.0
    %568 = vmatprep.subr.mxu0 0.0
    %569 = vmatpush1.msra.mxu0 0.0
    %570 = vmatprep.subr.mxu0 0.0
    %571 = vmatpush1.msra.mxu0 0.0
    %572 = vmatprep.mubr.f32.mxu0 0.0
    %573 = vmatmul.mubr.f32.gmra.mrb[0].mxu0 %v408
    %v574 = vpop.f32.mrb[0].mxu0
    %v575 = vadd.f32 %v385, %v574
    %v576 = vpop.f32.mrb[0].mxu0
    %v577 = vadd.f32 %v387, %v576
    %578 = vmatprep.mubr.f32.mxu0 0.0
    %579 = vmatmul.mubr.f32.gmra.mrb[0].mxu0 %v411
    %v580 = vpop.f32.mrb[0].mxu0
    %v581 = vadd.f32 %v391, %v580
    %v582 = vpop.f32.mrb[0].mxu0
    %v583 = vadd.f32 %v393, %v582
    %584 = vmatprep.mubr.f32.mxu0 0.0
    %585 = vmatmul.mubr.f32.gmra.mrb[0].mxu0 %v414
    %v586 = vpop.f32.mrb[0].mxu0
    %v587 = vadd.f32 %v397, %v586
    %v588 = vpop.f32.mrb[0].mxu0
    %v589 = vadd.f32 %v399, %v588
    %590 = vmatprep.mubr.f32.mxu0 0.0
    %591 = vmatmul.mubr.f32.gmra.mrb[0].mxu0 %v417
    %v592 = vpop.f32.mrb[0].mxu0
    %v593 = vadd.f32 %v403, %v592
    %v594 = vpop.f32.mrb[0].mxu0
    %v595 = vadd.f32 %v405, %v594
    %596 = vdwg.mxu0
    %v597 = vld [vmem:[#allocation2 + $0x2] sm:$0xff]
    %v598 = vld [vmem:[#allocation2 + $0xa] sm:$0xff]
    %v599 = vld [vmem:[#allocation2 + $0x1a] sm:$0xff]
    %v600 = vld [vmem:[#allocation2 + $0x22] sm:$0xff]
    %v601 = vld [vmem:[#allocation7 + $0x200] sm:$0xff]
    %v602 = vld [vmem:[#allocation7 + $0x208] sm:$0xff]
    %v603 = vld [vmem:[#allocation7 + $0x210] sm:$0xff]
    %v604 = vld [vmem:[#allocation7 + $0x218] sm:$0xff]
    %v605 = vld [vmem:[#allocation7 + $0x220] sm:$0xff]
    %v606 = vld [vmem:[#allocation7 + $0x228] sm:$0xff]
    %v607 = vld [vmem:[#allocation7 + $0x230] sm:$0xff]
    %v608 = vld [vmem:[#allocation7 + $0x238] sm:$0xff]
    %v609 = vld [vmem:[#allocation7 + $0x240] sm:$0xff]
    %v610 = vld [vmem:[#allocation7 + $0x248] sm:$0xff]
    %v611 = vld [vmem:[#allocation7 + $0x250] sm:$0xff]
    %v612 = vld [vmem:[#allocation7 + $0x258] sm:$0xff]
    %v613 = vld [vmem:[#allocation7 + $0x260] sm:$0xff]
    %v614 = vld [vmem:[#allocation7 + $0x268] sm:$0xff]
    %v615 = vld [vmem:[#allocation7 + $0x270] sm:$0xff]
    %v616 = vld [vmem:[#allocation7 + $0x278] sm:$0xff]
    %v617 = vld [vmem:[#allocation7 + $0x280] sm:$0xff]
    %v618 = vld [vmem:[#allocation7 + $0x288] sm:$0xff]
    %v619 = vld [vmem:[#allocation7 + $0x290] sm:$0xff]
    %v620 = vld [vmem:[#allocation7 + $0x298] sm:$0xff]
    %v621 = vld [vmem:[#allocation7 + $0x2a0] sm:$0xff]
    %v622 = vld [vmem:[#allocation7 + $0x2a8] sm:$0xff]
    %v623 = vld [vmem:[#allocation7 + $0x2b0] sm:$0xff]
    %v624 = vld [vmem:[#allocation7 + $0x2b8] sm:$0xff]
    %v625 = vld [vmem:[#allocation7 + $0x2c0] sm:$0xff]
    %v626 = vld [vmem:[#allocation7 + $0x2c8] sm:$0xff]
    %v627 = vld [vmem:[#allocation7 + $0x2d0] sm:$0xff]
    %v628 = vld [vmem:[#allocation7 + $0x2d8] sm:$0xff]
    %v629 = vld [vmem:[#allocation7 + $0x2e0] sm:$0xff]
    %v630 = vld [vmem:[#allocation7 + $0x2e8] sm:$0xff]
    %v631 = vld [vmem:[#allocation7 + $0x2f0] sm:$0xff]
    %v632 = vld [vmem:[#allocation7 + $0x2f8] sm:$0xff]
    %v634 = vsel %vm140, %v597, 0
    %v637 = vsel %vm140, %v598, 0
    %v640 = vsel %vm140, %v599, 0
    %v643 = vsel %vm140, %v600, 0
    %645 = vmatprep.subr.mxu0 %v602
    %646 = vmatpush1.msra.mxu0 %v601
    %647 = vmatprep.subr.mxu0 %v606
    %648 = vmatpush1.msra.mxu0 %v605
    %649 = vmatprep.subr.mxu0 %v610
    %650 = vmatpush1.msra.mxu0 %v609
    %651 = vmatprep.subr.mxu0 %v614
    %652 = vmatpush1.msra.mxu0 %v613
    %653 = vmatprep.subr.mxu0 %v618
    %654 = vmatpush1.msra.mxu0 %v617
    %655 = vmatprep.subr.mxu0 %v622
    %656 = vmatpush1.msra.mxu0 %v621
    %657 = vmatprep.subr.mxu0 %v626
    %658 = vmatpush1.msra.mxu0 %v625
    %659 = vmatprep.subr.mxu0 %v630
    %660 = vmatpush1.msra.mxu0 %v629
    %661 = vmatprep.subr.mxu0 0.0
    %662 = vmatpush1.msra.mxu0 0.0
    %663 = vmatprep.subr.mxu0 0.0
    %664 = vmatpush1.msra.mxu0 0.0
    %665 = vmatprep.subr.mxu0 0.0
    %666 = vmatpush1.msra.mxu0 0.0
    %667 = vmatprep.subr.mxu0 0.0
    %668 = vmatpush1.msra.mxu0 0.0
    %669 = vmatprep.subr.mxu0 0.0
    %670 = vmatpush1.msra.mxu0 0.0
    %671 = vmatprep.subr.mxu0 0.0
    %672 = vmatpush1.msra.mxu0 0.0
    %673 = vmatprep.subr.mxu0 0.0
    %674 = vmatpush1.msra.mxu0 0.0
    %675 = vmatprep.subr.mxu0 0.0
    %676 = vmatpush1.msra.mxu0 0.0
    %677 = vmatprep.subr.mxu0 0.0
    %678 = vmatpush1.msra.mxu0 0.0
    %679 = vmatprep.subr.mxu0 0.0
    %680 = vmatpush1.msra.mxu0 0.0
    %681 = vmatprep.subr.mxu0 0.0
    %682 = vmatpush1.msra.mxu0 0.0
    %683 = vmatprep.subr.mxu0 0.0
    %684 = vmatpush1.msra.mxu0 0.0
    %685 = vmatprep.subr.mxu0 0.0
    %686 = vmatpush1.msra.mxu0 0.0
    %687 = vmatprep.subr.mxu0 0.0
    %688 = vmatpush1.msra.mxu0 0.0
    %689 = vmatprep.subr.mxu0 0.0
    %690 = vmatpush1.msra.mxu0 0.0
    %691 = vmatprep.subr.mxu0 0.0
    %692 = vmatpush1.msra.mxu0 0.0
    %693 = vmatprep.subr.mxu0 0.0
    %694 = vmatpush1.msra.mxu0 0.0
    %695 = vmatprep.subr.mxu0 0.0
    %696 = vmatpush1.msra.mxu0 0.0
    %697 = vmatprep.subr.mxu0 0.0
    %698 = vmatpush1.msra.mxu0 0.0
    %699 = vmatprep.subr.mxu0 0.0
    %700 = vmatpush1.msra.mxu0 0.0
    %701 = vmatprep.subr.mxu0 0.0
    %702 = vmatpush1.msra.mxu0 0.0
    %703 = vmatprep.subr.mxu0 0.0
    %704 = vmatpush1.msra.mxu0 0.0
    %705 = vmatprep.subr.mxu0 0.0
    %706 = vmatpush1.msra.mxu0 0.0
    %707 = vmatprep.subr.mxu0 0.0
    %708 = vmatpush1.msra.mxu0 0.0
    %709 = vmatprep.mubr.f32.mxu0 0.0
    %710 = vmatmul.mubr.f32.gmra.mrb[0].mxu0 %v634
    %v711 = vpop.f32.mrb[0].mxu0
    %v712 = vadd.f32 0.0, %v711
    %v713 = vpop.f32.mrb[0].mxu0
    %v714 = vadd.f32 0.0, %v713
    %715 = vmatprep.mubr.f32.mxu0 0.0
    %716 = vmatmul.mubr.f32.gmra.mrb[0].mxu0 %v637
    %v717 = vpop.f32.mrb[0].mxu0
    %v718 = vadd.f32 0.0, %v717
    %v719 = vpop.f32.mrb[0].mxu0
    %v720 = vadd.f32 0.0, %v719
    %721 = vmatprep.mubr.f32.mxu0 0.0
    %722 = vmatmul.mubr.f32.gmra.mrb[0].mxu0 %v640
    %v723 = vpop.f32.mrb[0].mxu0
    %v724 = vadd.f32 0.0, %v723
    %v725 = vpop.f32.mrb[0].mxu0
    %v726 = vadd.f32 0.0, %v725
    %727 = vmatprep.mubr.f32.mxu0 0.0
    %728 = vmatmul.mubr.f32.gmra.mrb[0].mxu0 %v643
    %v729 = vpop.f32.mrb[0].mxu0
    %v730 = vadd.f32 0.0, %v729
    %v731 = vpop.f32.mrb[0].mxu0
    %v732 = vadd.f32 0.0, %v731
    %733 = vdwg.mxu0
    %734 = vmatprep.subr.mxu0 %v604
    %735 = vmatpush1.msra.mxu0 %v603
    %736 = vmatprep.subr.mxu0 %v608
    %737 = vmatpush1.msra.mxu0 %v607
    %738 = vmatprep.subr.mxu0 %v612
    %739 = vmatpush1.msra.mxu0 %v611
    %740 = vmatprep.subr.mxu0 %v616
    %741 = vmatpush1.msra.mxu0 %v615
    %742 = vmatprep.subr.mxu0 %v620
    %743 = vmatpush1.msra.mxu0 %v619
    %744 = vmatprep.subr.mxu0 %v624
    %745 = vmatpush1.msra.mxu0 %v623
    %746 = vmatprep.subr.mxu0 %v628
    %747 = vmatpush1.msra.mxu0 %v627
    %748 = vmatprep.subr.mxu0 %v632
    %749 = vmatpush1.msra.mxu0 %v631
    %750 = vmatprep.subr.mxu0 0.0
    %751 = vmatpush1.msra.mxu0 0.0
    %752 = vmatprep.subr.mxu0 0.0
    %753 = vmatpush1.msra.mxu0 0.0
    %754 = vmatprep.subr.mxu0 0.0
    %755 = vmatpush1.msra.mxu0 0.0
    %756 = vmatprep.subr.mxu0 0.0
    %757 = vmatpush1.msra.mxu0 0.0
    %758 = vmatprep.subr.mxu0 0.0
    %759 = vmatpush1.msra.mxu0 0.0
    %760 = vmatprep.subr.mxu0 0.0
    %761 = vmatpush1.msra.mxu0 0.0
    %762 = vmatprep.subr.mxu0 0.0
    %763 = vmatpush1.msra.mxu0 0.0
    %764 = vmatprep.subr.mxu0 0.0
    %765 = vmatpush1.msra.mxu0 0.0
    %766 = vmatprep.subr.mxu0 0.0
    %767 = vmatpush1.msra.mxu0 0.0
    %768 = vmatprep.subr.mxu0 0.0
    %769 = vmatpush1.msra.mxu0 0.0
    %770 = vmatprep.subr.mxu0 0.0
    %771 = vmatpush1.msra.mxu0 0.0
    %772 = vmatprep.subr.mxu0 0.0
    %773 = vmatpush1.msra.mxu0 0.0
    %774 = vmatprep.subr.mxu0 0.0
    %775 = vmatpush1.msra.mxu0 0.0
    %776 = vmatprep.subr.mxu0 0.0
    %777 = vmatpush1.msra.mxu0 0.0
    %778 = vmatprep.subr.mxu0 0.0
    %779 = vmatpush1.msra.mxu0 0.0
    %780 = vmatprep.subr.mxu0 0.0
    %781 = vmatpush1.msra.mxu0 0.0
    %782 = vmatprep.subr.mxu0 0.0
    %783 = vmatpush1.msra.mxu0 0.0
    %784 = vmatprep.subr.mxu0 0.0
    %785 = vmatpush1.msra.mxu0 0.0
    %786 = vmatprep.subr.mxu0 0.0
    %787 = vmatpush1.msra.mxu0 0.0
    %788 = vmatprep.subr.mxu0 0.0
    %789 = vmatpush1.msra.mxu0 0.0
    %790 = vmatprep.subr.mxu0 0.0
    %791 = vmatpush1.msra.mxu0 0.0
    %792 = vmatprep.subr.mxu0 0.0
    %793 = vmatpush1.msra.mxu0 0.0
    %794 = vmatprep.subr.mxu0 0.0
    %795 = vmatpush1.msra.mxu0 0.0
    %796 = vmatprep.subr.mxu0 0.0
    %797 = vmatpush1.msra.mxu0 0.0
    %798 = vmatprep.mubr.f32.mxu0 0.0
    %799 = vmatmul.mubr.f32.gmra.mrb[0].mxu0 %v634
    %v800 = vpop.f32.mrb[0].mxu0
    %v801 = vadd.f32 0.0, %v800
    %v802 = vpop.f32.mrb[0].mxu0
    %v803 = vadd.f32 0.0, %v802
    %804 = vmatprep.mubr.f32.mxu0 0.0
    %805 = vmatmul.mubr.f32.gmra.mrb[0].mxu0 %v637
    %v806 = vpop.f32.mrb[0].mxu0
    %v807 = vadd.f32 0.0, %v806
    %v808 = vpop.f32.mrb[0].mxu0
    %v809 = vadd.f32 0.0, %v808
    %810 = vmatprep.mubr.f32.mxu0 0.0
    %811 = vmatmul.mubr.f32.gmra.mrb[0].mxu0 %v640
    %v812 = vpop.f32.mrb[0].mxu0
    %v813 = vadd.f32 0.0, %v812
    %v814 = vpop.f32.mrb[0].mxu0
    %v815 = vadd.f32 0.0, %v814
    %816 = vmatprep.mubr.f32.mxu0 0.0
    %817 = vmatmul.mubr.f32.gmra.mrb[0].mxu0 %v643
    %v818 = vpop.f32.mrb[0].mxu0
    %v819 = vadd.f32 0.0, %v818
    %v820 = vpop.f32.mrb[0].mxu0
    %v821 = vadd.f32 0.0, %v820
    %822 = vdwg.mxu0
    %v823 = vadd.f32 %v486, %v712
    %v824 = vadd.f32 %v488, %v714
    %v825 = vadd.f32 %v575, %v801
    %v826 = vadd.f32 %v577, %v803
    %v827 = vadd.f32 %v492, %v718
    %v828 = vadd.f32 %v494, %v720
    %v829 = vadd.f32 %v581, %v807
    %v830 = vadd.f32 %v583, %v809
    %v831 = vadd.f32 %v498, %v724
    %v832 = vadd.f32 %v500, %v726
    %v833 = vadd.f32 %v587, %v813
    %v834 = vadd.f32 %v589, %v815
    %v835 = vadd.f32 %v504, %v730
    %v836 = vadd.f32 %v506, %v732
    %v837 = vadd.f32 %v593, %v819
    %v838 = vadd.f32 %v595, %v821
    %v839 = vld [vmem:[#allocation9] sm:$0xf]
    %v841 = vlaneseq
    %v842 = vshrl.u32 %v841, 7
    %v843 = vsub.s32 0, %v842
    %v844 = vrot.slane %v839, %v843
    %v845 = vlaneseq
    %v846 = vshrl.u32 %v845, 7
    %v847 = vsub.s32 1, %v846
    %v848 = vrot.slane %v839, %v847
    %v849 = vlaneseq
    %v850 = vshrl.u32 %v849, 7
    %v851 = vsub.s32 2, %v850
    %v852 = vrot.slane %v839, %v851
    %v853 = vlaneseq
    %v854 = vshrl.u32 %v853, 7
    %v855 = vsub.s32 3, %v854
    %v856 = vrot.slane %v839, %v855
    %v861 = vadd.f32 %v823, %v844
    %v862 = vadd.f32 %v824, %v848
    %v863 = vadd.f32 %v825, %v852
    %v864 = vadd.f32 %v826, %v856
    %v865 = vadd.f32 %v827, %v844
    %v866 = vadd.f32 %v828, %v848
    %v867 = vadd.f32 %v829, %v852
    %v868 = vadd.f32 %v830, %v856
    %v869 = vadd.f32 %v831, %v844
    %v870 = vadd.f32 %v832, %v848
    %v871 = vadd.f32 %v833, %v852
    %v872 = vadd.f32 %v834, %v856
    %v873 = vadd.f32 %v835, %v844
    %v874 = vadd.f32 %v836, %v848
    %v875 = vadd.f32 %v837, %v852
    %v876 = vadd.f32 %v838, %v856
    %v877 = vmax.f32 %v861, 0.0
    %v878 = vmax.f32 %v862, 0.0
    %v879 = vmax.f32 %v863, 0.0
    %v880 = vmax.f32 %v864, 0.0
    %v881 = vmax.f32 %v865, 0.0
    %v882 = vmax.f32 %v866, 0.0
    %v883 = vmax.f32 %v867, 0.0
    %v884 = vmax.f32 %v868, 0.0
    %v885 = vmax.f32 %v869, 0.0
    %v886 = vmax.f32 %v870, 0.0
    %v887 = vmax.f32 %v871, 0.0
    %v888 = vmax.f32 %v872, 0.0
    %v889 = vmax.f32 %v873, 0.0
    %v890 = vmax.f32 %v874, 0.0
    %v891 = vmax.f32 %v875, 0.0
    %v892 = vmax.f32 %v876, 0.0
    %vm909 = vcmask 1040384
    %v910 = vrot.slane %v877, 7
    %v911 = vrot.slane %v878, 7
    %v912 = vrot.slane %v879, 7
    %v913 = vrot.slane %v880, 7
    %v914 = vrot.slane %v881, 7
    %v915 = vsel %vm909, %v910, %v914
    %v916 = vrot.slane %v882, 7
    %v917 = vsel %vm909, %v911, %v916
    %v918 = vrot.slane %v883, 7
    %v919 = vsel %vm909, %v912, %v918
    %v920 = vrot.slane %v884, 7
    %v921 = vsel %vm909, %v913, %v920
    %v922 = vrot.slane %v885, 7
    %v923 = vrot.slane %v886, 7
    %v924 = vrot.slane %v887, 7
    %v925 = vrot.slane %v888, 7
    %v926 = vrot.slane %v889, 7
    %v927 = vsel %vm909, %v922, %v926
    %v928 = vrot.slane %v890, 7
    %v929 = vsel %vm909, %v923, %v928
    %v930 = vrot.slane %v891, 7
    %v931 = vsel %vm909, %v924, %v930
    %v932 = vrot.slane %v892, 7
    %v933 = vsel %vm909, %v925, %v932
    %958 = vst [vmem:[#allocation3] sm:$0xfe] %v910
    %959 = vst [vmem:[#allocation3 + $0x8] sm:$0xfe] %v911
    %960 = vst [vmem:[#allocation3 + $0x10] sm:$0xfe] %v912
    %961 = vst [vmem:[#allocation3 + $0x18] sm:$0xfe] %v913
    %962 = vst [vmem:[#allocation3 + $0x20] sm:$0xff] %v915
    %963 = vst [vmem:[#allocation3 + $0x28] sm:$0xff] %v917
    %964 = vst [vmem:[#allocation3 + $0x30] sm:$0xff] %v919
    %965 = vst [vmem:[#allocation3 + $0x38] sm:$0xff] %v921
    %966 = vst [vmem:[#allocation3 + $0x40] sm:$0x1] %v914
    %967 = vst [vmem:[#allocation3 + $0x48] sm:$0x1] %v916
    %968 = vst [vmem:[#allocation3 + $0x50] sm:$0x1] %v918
    %969 = vst [vmem:[#allocation3 + $0x58] sm:$0x1] %v920
    %970 = vst [vmem:[#allocation3 + $0x60] sm:$0xfe] %v922
    %971 = vst [vmem:[#allocation3 + $0x68] sm:$0xfe] %v923
    %972 = vst [vmem:[#allocation3 + $0x70] sm:$0xfe] %v924
    %973 = vst [vmem:[#allocation3 + $0x78] sm:$0xfe] %v925
    %974 = vst [vmem:[#allocation3 + $0x80] sm:$0xff] %v927
    %975 = vst [vmem:[#allocation3 + $0x88] sm:$0xff] %v929
    %976 = vst [vmem:[#allocation3 + $0x90] sm:$0xff] %v931
    %977 = vst [vmem:[#allocation3 + $0x98] sm:$0xff] %v933
    %978 = vst [vmem:[#allocation3 + $0xa0] sm:$0x1] %v926
    %979 = vst [vmem:[#allocation3 + $0xa8] sm:$0x1] %v928
    %980 = vst [vmem:[#allocation3 + $0xb0] sm:$0x1] %v930
    %981 = vst [vmem:[#allocation3 + $0xb8] sm:$0x1] %v932
    %v982 = vld [vmem:[#allocation3] sm:$0xff]
    %v983 = vld [vmem:[#allocation3 + $0x8] sm:$0xff]
    %v984 = vld [vmem:[#allocation3 + $0x10] sm:$0xff]
    %v985 = vld [vmem:[#allocation3 + $0x18] sm:$0xff]
    %v986 = vld [vmem:[#allocation3 + $0x20] sm:$0xff]
    %v987 = vld [vmem:[#allocation3 + $0x28] sm:$0xff]
    %v988 = vld [vmem:[#allocation3 + $0x30] sm:$0xff]
    %v989 = vld [vmem:[#allocation3 + $0x38] sm:$0xff]
    %v990 = vld [vmem:[#allocation3 + $0x60] sm:$0xff]
    %v991 = vld [vmem:[#allocation3 + $0x68] sm:$0xff]
    %v992 = vld [vmem:[#allocation3 + $0x70] sm:$0xff]
    %v993 = vld [vmem:[#allocation3 + $0x78] sm:$0xff]
    %v994 = vld [vmem:[#allocation3 + $0x80] sm:$0xff]
    %v995 = vld [vmem:[#allocation3 + $0x88] sm:$0xff]
    %v996 = vld [vmem:[#allocation3 + $0x90] sm:$0xff]
    %v997 = vld [vmem:[#allocation3 + $0x98] sm:$0xff]
    %v998 = vld [vmem:[#allocation10] sm:$0xff]
    %v999 = vld [vmem:[#allocation10 + $0x8] sm:$0xff]
    %v1000 = vld [vmem:[#allocation10 + $0x10] sm:$0xff]
    %v1001 = vld [vmem:[#allocation10 + $0x18] sm:$0xff]
    %v1002 = vld [vmem:[#allocation10 + $0x20] sm:$0xff]
    %v1003 = vld [vmem:[#allocation10 + $0x28] sm:$0xff]
    %v1004 = vld [vmem:[#allocation10 + $0x30] sm:$0xff]
    %v1005 = vld [vmem:[#allocation10 + $0x38] sm:$0xff]
    %v1006 = vld [vmem:[#allocation10 + $0x40] sm:$0xff]
    %v1007 = vld [vmem:[#allocation10 + $0x48] sm:$0xff]
    %v1008 = vld [vmem:[#allocation10 + $0x50] sm:$0xff]
    %v1009 = vld [vmem:[#allocation10 + $0x58] sm:$0xff]
    %v1010 = vld [vmem:[#allocation10 + $0x60] sm:$0xff]
    %v1011 = vld [vmem:[#allocation10 + $0x68] sm:$0xff]
    %v1012 = vld [vmem:[#allocation10 + $0x70] sm:$0xff]
    %v1013 = vld [vmem:[#allocation10 + $0x78] sm:$0xff]
    %v1014 = vld [vmem:[#allocation10 + $0x80] sm:$0xff]
    %v1015 = vld [vmem:[#allocation10 + $0x88] sm:$0xff]
    %v1016 = vld [vmem:[#allocation10 + $0x90] sm:$0xff]
    %v1017 = vld [vmem:[#allocation10 + $0x98] sm:$0xff]
    %v1018 = vld [vmem:[#allocation10 + $0xa0] sm:$0xff]
    %v1019 = vld [vmem:[#allocation10 + $0xa8] sm:$0xff]
    %v1020 = vld [vmem:[#allocation10 + $0xb0] sm:$0xff]
    %v1021 = vld [vmem:[#allocation10 + $0xb8] sm:$0xff]
    %v1022 = vld [vmem:[#allocation10 + $0xc0] sm:$0xff]
    %v1023 = vld [vmem:[#allocation10 + $0xc8] sm:$0xff]
    %v1024 = vld [vmem:[#allocation10 + $0xd0] sm:$0xff]
    %v1025 = vld [vmem:[#allocation10 + $0xd8] sm:$0xff]
    %v1026 = vld [vmem:[#allocation10 + $0xe0] sm:$0xff]
    %v1027 = vld [vmem:[#allocation10 + $0xe8] sm:$0xff]
    %v1028 = vld [vmem:[#allocation10 + $0xf0] sm:$0xff]
    %v1029 = vld [vmem:[#allocation10 + $0xf8] sm:$0xff]
    %v1030 = vld [vmem:[#allocation10 + $0x100] sm:$0xff]
    %v1031 = vld [vmem:[#allocation10 + $0x108] sm:$0xff]
    %v1032 = vld [vmem:[#allocation10 + $0x110] sm:$0xff]
    %v1033 = vld [vmem:[#allocation10 + $0x118] sm:$0xff]
    %v1034 = vld [vmem:[#allocation10 + $0x120] sm:$0xff]
    %v1035 = vld [vmem:[#allocation10 + $0x128] sm:$0xff]
    %v1036 = vld [vmem:[#allocation10 + $0x130] sm:$0xff]
    %v1037 = vld [vmem:[#allocation10 + $0x138] sm:$0xff]
    %v1038 = vld [vmem:[#allocation10 + $0x140] sm:$0xff]
    %v1039 = vld [vmem:[#allocation10 + $0x148] sm:$0xff]
    %v1040 = vld [vmem:[#allocation10 + $0x150] sm:$0xff]
    %v1041 = vld [vmem:[#allocation10 + $0x158] sm:$0xff]
    %v1042 = vld [vmem:[#allocation10 + $0x160] sm:$0xff]
    %v1043 = vld [vmem:[#allocation10 + $0x168] sm:$0xff]
    %v1044 = vld [vmem:[#allocation10 + $0x170] sm:$0xff]
    %v1045 = vld [vmem:[#allocation10 + $0x178] sm:$0xff]
    %v1046 = vld [vmem:[#allocation10 + $0x180] sm:$0xff]
    %v1047 = vld [vmem:[#allocation10 + $0x188] sm:$0xff]
    %v1048 = vld [vmem:[#allocation10 + $0x190] sm:$0xff]
    %v1049 = vld [vmem:[#allocation10 + $0x198] sm:$0xff]
    %v1050 = vld [vmem:[#allocation10 + $0x1a0] sm:$0xff]
    %v1051 = vld [vmem:[#allocation10 + $0x1a8] sm:$0xff]
    %v1052 = vld [vmem:[#allocation10 + $0x1b0] sm:$0xff]
    %v1053 = vld [vmem:[#allocation10 + $0x1b8] sm:$0xff]
    %v1054 = vld [vmem:[#allocation10 + $0x1c0] sm:$0xff]
    %v1055 = vld [vmem:[#allocation10 + $0x1c8] sm:$0xff]
    %v1056 = vld [vmem:[#allocation10 + $0x1d0] sm:$0xff]
    %v1057 = vld [vmem:[#allocation10 + $0x1d8] sm:$0xff]
    %v1058 = vld [vmem:[#allocation10 + $0x1e0] sm:$0xff]
    %v1059 = vld [vmem:[#allocation10 + $0x1e8] sm:$0xff]
    %v1060 = vld [vmem:[#allocation10 + $0x1f0] sm:$0xff]
    %v1061 = vld [vmem:[#allocation10 + $0x1f8] sm:$0xff]
    %v1062 = vld [vmem:[#allocation10 + $0x200] sm:$0xff]
    %v1063 = vld [vmem:[#allocation10 + $0x208] sm:$0xff]
    %v1064 = vld [vmem:[#allocation10 + $0x210] sm:$0xff]
    %v1065 = vld [vmem:[#allocation10 + $0x218] sm:$0xff]
    %v1066 = vld [vmem:[#allocation10 + $0x220] sm:$0xff]
    %v1067 = vld [vmem:[#allocation10 + $0x228] sm:$0xff]
    %v1068 = vld [vmem:[#allocation10 + $0x230] sm:$0xff]
    %v1069 = vld [vmem:[#allocation10 + $0x238] sm:$0xff]
    %v1070 = vld [vmem:[#allocation10 + $0x240] sm:$0xff]
    %v1071 = vld [vmem:[#allocation10 + $0x248] sm:$0xff]
    %v1072 = vld [vmem:[#allocation10 + $0x250] sm:$0xff]
    %v1073 = vld [vmem:[#allocation10 + $0x258] sm:$0xff]
    %v1074 = vld [vmem:[#allocation10 + $0x260] sm:$0xff]
    %v1075 = vld [vmem:[#allocation10 + $0x268] sm:$0xff]
    %v1076 = vld [vmem:[#allocation10 + $0x270] sm:$0xff]
    %v1077 = vld [vmem:[#allocation10 + $0x278] sm:$0xff]
    %v1078 = vld [vmem:[#allocation10 + $0x280] sm:$0xff]
    %v1079 = vld [vmem:[#allocation10 + $0x288] sm:$0xff]
    %v1080 = vld [vmem:[#allocation10 + $0x290] sm:$0xff]
    %v1081 = vld [vmem:[#allocation10 + $0x298] sm:$0xff]
    %v1082 = vld [vmem:[#allocation10 + $0x2a0] sm:$0xff]
    %v1083 = vld [vmem:[#allocation10 + $0x2a8] sm:$0xff]
    %v1084 = vld [vmem:[#allocation10 + $0x2b0] sm:$0xff]
    %v1085 = vld [vmem:[#allocation10 + $0x2b8] sm:$0xff]
    %v1086 = vld [vmem:[#allocation10 + $0x2c0] sm:$0xff]
    %v1087 = vld [vmem:[#allocation10 + $0x2c8] sm:$0xff]
    %v1088 = vld [vmem:[#allocation10 + $0x2d0] sm:$0xff]
    %v1089 = vld [vmem:[#allocation10 + $0x2d8] sm:$0xff]
    %v1090 = vld [vmem:[#allocation10 + $0x2e0] sm:$0xff]
    %v1091 = vld [vmem:[#allocation10 + $0x2e8] sm:$0xff]
    %v1092 = vld [vmem:[#allocation10 + $0x2f0] sm:$0xff]
    %v1093 = vld [vmem:[#allocation10 + $0x2f8] sm:$0xff]
    %v1094 = vld [vmem:[#allocation10 + $0x300] sm:$0xff]
    %v1095 = vld [vmem:[#allocation10 + $0x308] sm:$0xff]
    %v1096 = vld [vmem:[#allocation10 + $0x310] sm:$0xff]
    %v1097 = vld [vmem:[#allocation10 + $0x318] sm:$0xff]
    %v1098 = vld [vmem:[#allocation10 + $0x320] sm:$0xff]
    %v1099 = vld [vmem:[#allocation10 + $0x328] sm:$0xff]
    %v1100 = vld [vmem:[#allocation10 + $0x330] sm:$0xff]
    %v1101 = vld [vmem:[#allocation10 + $0x338] sm:$0xff]
    %v1102 = vld [vmem:[#allocation10 + $0x340] sm:$0xff]
    %v1103 = vld [vmem:[#allocation10 + $0x348] sm:$0xff]
    %v1104 = vld [vmem:[#allocation10 + $0x350] sm:$0xff]
    %v1105 = vld [vmem:[#allocation10 + $0x358] sm:$0xff]
    %v1106 = vld [vmem:[#allocation10 + $0x360] sm:$0xff]
    %v1107 = vld [vmem:[#allocation10 + $0x368] sm:$0xff]
    %v1108 = vld [vmem:[#allocation10 + $0x370] sm:$0xff]
    %v1109 = vld [vmem:[#allocation10 + $0x378] sm:$0xff]
    %v1110 = vld [vmem:[#allocation10 + $0x380] sm:$0xff]
    %v1111 = vld [vmem:[#allocation10 + $0x388] sm:$0xff]
    %v1112 = vld [vmem:[#allocation10 + $0x390] sm:$0xff]
    %v1113 = vld [vmem:[#allocation10 + $0x398] sm:$0xff]
    %v1114 = vld [vmem:[#allocation10 + $0x3a0] sm:$0xff]
    %v1115 = vld [vmem:[#allocation10 + $0x3a8] sm:$0xff]
    %v1116 = vld [vmem:[#allocation10 + $0x3b0] sm:$0xff]
    %v1117 = vld [vmem:[#allocation10 + $0x3b8] sm:$0xff]
    %v1118 = vld [vmem:[#allocation10 + $0x3c0] sm:$0xff]
    %v1119 = vld [vmem:[#allocation10 + $0x3c8] sm:$0xff]
    %v1120 = vld [vmem:[#allocation10 + $0x3d0] sm:$0xff]
    %v1121 = vld [vmem:[#allocation10 + $0x3d8] sm:$0xff]
    %v1122 = vld [vmem:[#allocation10 + $0x3e0] sm:$0xff]
    %v1123 = vld [vmem:[#allocation10 + $0x3e8] sm:$0xff]
    %v1124 = vld [vmem:[#allocation10 + $0x3f0] sm:$0xff]
    %v1125 = vld [vmem:[#allocation10 + $0x3f8] sm:$0xff]
    %v1126 = vld [vmem:[#allocation10 + $0x400] sm:$0xff]
    %v1127 = vld [vmem:[#allocation10 + $0x408] sm:$0xff]
    %v1128 = vld [vmem:[#allocation10 + $0x410] sm:$0xff]
    %v1129 = vld [vmem:[#allocation10 + $0x418] sm:$0xff]
    %v1130 = vld [vmem:[#allocation10 + $0x420] sm:$0xff]
    %v1131 = vld [vmem:[#allocation10 + $0x428] sm:$0xff]
    %v1132 = vld [vmem:[#allocation10 + $0x430] sm:$0xff]
    %v1133 = vld [vmem:[#allocation10 + $0x438] sm:$0xff]
    %v1134 = vld [vmem:[#allocation10 + $0x440] sm:$0xff]
    %v1135 = vld [vmem:[#allocation10 + $0x448] sm:$0xff]
    %v1136 = vld [vmem:[#allocation10 + $0x450] sm:$0xff]
    %v1137 = vld [vmem:[#allocation10 + $0x458] sm:$0xff]
    %v1138 = vld [vmem:[#allocation10 + $0x460] sm:$0xff]
    %v1139 = vld [vmem:[#allocation10 + $0x468] sm:$0xff]
    %v1140 = vld [vmem:[#allocation10 + $0x470] sm:$0xff]
    %v1141 = vld [vmem:[#allocation10 + $0x478] sm:$0xff]
    %v1142 = vld [vmem:[#allocation10 + $0x480] sm:$0xff]
    %v1143 = vld [vmem:[#allocation10 + $0x488] sm:$0xff]
    %v1144 = vld [vmem:[#allocation10 + $0x490] sm:$0xff]
    %v1145 = vld [vmem:[#allocation10 + $0x498] sm:$0xff]
    %v1146 = vld [vmem:[#allocation10 + $0x4a0] sm:$0xff]
    %v1147 = vld [vmem:[#allocation10 + $0x4a8] sm:$0xff]
    %v1148 = vld [vmem:[#allocation10 + $0x4b0] sm:$0xff]
    %v1149 = vld [vmem:[#allocation10 + $0x4b8] sm:$0xff]
    %v1150 = vld [vmem:[#allocation10 + $0x4c0] sm:$0xff]
    %v1151 = vld [vmem:[#allocation10 + $0x4c8] sm:$0xff]
    %v1152 = vld [vmem:[#allocation10 + $0x4d0] sm:$0xff]
    %v1153 = vld [vmem:[#allocation10 + $0x4d8] sm:$0xff]
    %v1154 = vld [vmem:[#allocation10 + $0x4e0] sm:$0xff]
    %v1155 = vld [vmem:[#allocation10 + $0x4e8] sm:$0xff]
    %v1156 = vld [vmem:[#allocation10 + $0x4f0] sm:$0xff]
    %v1157 = vld [vmem:[#allocation10 + $0x4f8] sm:$0xff]
    %v1158 = vld [vmem:[#allocation10 + $0x500] sm:$0xff]
    %v1159 = vld [vmem:[#allocation10 + $0x508] sm:$0xff]
    %v1160 = vld [vmem:[#allocation10 + $0x510] sm:$0xff]
    %v1161 = vld [vmem:[#allocation10 + $0x518] sm:$0xff]
    %v1162 = vld [vmem:[#allocation10 + $0x520] sm:$0xff]
    %v1163 = vld [vmem:[#allocation10 + $0x528] sm:$0xff]
    %v1164 = vld [vmem:[#allocation10 + $0x530] sm:$0xff]
    %v1165 = vld [vmem:[#allocation10 + $0x538] sm:$0xff]
    %v1166 = vld [vmem:[#allocation10 + $0x540] sm:$0xff]
    %v1167 = vld [vmem:[#allocation10 + $0x548] sm:$0xff]
    %v1168 = vld [vmem:[#allocation10 + $0x550] sm:$0xff]
    %v1169 = vld [vmem:[#allocation10 + $0x558] sm:$0xff]
    %v1170 = vld [vmem:[#allocation10 + $0x560] sm:$0xff]
    %v1171 = vld [vmem:[#allocation10 + $0x568] sm:$0xff]
    %v1172 = vld [vmem:[#allocation10 + $0x570] sm:$0xff]
    %v1173 = vld [vmem:[#allocation10 + $0x578] sm:$0xff]
    %v1174 = vld [vmem:[#allocation10 + $0x580] sm:$0xff]
    %v1175 = vld [vmem:[#allocation10 + $0x588] sm:$0xff]
    %v1176 = vld [vmem:[#allocation10 + $0x590] sm:$0xff]
    %v1177 = vld [vmem:[#allocation10 + $0x598] sm:$0xff]
    %v1178 = vld [vmem:[#allocation10 + $0x5a0] sm:$0xff]
    %v1179 = vld [vmem:[#allocation10 + $0x5a8] sm:$0xff]
    %v1180 = vld [vmem:[#allocation10 + $0x5b0] sm:$0xff]
    %v1181 = vld [vmem:[#allocation10 + $0x5b8] sm:$0xff]
    %v1182 = vld [vmem:[#allocation10 + $0x5c0] sm:$0xff]
    %v1183 = vld [vmem:[#allocation10 + $0x5c8] sm:$0xff]
    %v1184 = vld [vmem:[#allocation10 + $0x5d0] sm:$0xff]
    %v1185 = vld [vmem:[#allocation10 + $0x5d8] sm:$0xff]
    %v1186 = vld [vmem:[#allocation10 + $0x5e0] sm:$0xff]
    %v1187 = vld [vmem:[#allocation10 + $0x5e8] sm:$0xff]
    %v1188 = vld [vmem:[#allocation10 + $0x5f0] sm:$0xff]
    %v1189 = vld [vmem:[#allocation10 + $0x5f8] sm:$0xff]
    %v1190 = vld [vmem:[#allocation10 + $0x600] sm:$0xff]
    %v1191 = vld [vmem:[#allocation10 + $0x608] sm:$0xff]
    %v1192 = vld [vmem:[#allocation10 + $0x610] sm:$0xff]
    %v1193 = vld [vmem:[#allocation10 + $0x618] sm:$0xff]
    %v1194 = vld [vmem:[#allocation10 + $0x620] sm:$0xff]
    %v1195 = vld [vmem:[#allocation10 + $0x628] sm:$0xff]
    %v1196 = vld [vmem:[#allocation10 + $0x630] sm:$0xff]
    %v1197 = vld [vmem:[#allocation10 + $0x638] sm:$0xff]
    %v1198 = vld [vmem:[#allocation10 + $0x640] sm:$0xff]
    %v1199 = vld [vmem:[#allocation10 + $0x648] sm:$0xff]
    %v1200 = vld [vmem:[#allocation10 + $0x650] sm:$0xff]
    %v1201 = vld [vmem:[#allocation10 + $0x658] sm:$0xff]
    %v1202 = vld [vmem:[#allocation10 + $0x660] sm:$0xff]
    %v1203 = vld [vmem:[#allocation10 + $0x668] sm:$0xff]
    %v1204 = vld [vmem:[#allocation10 + $0x670] sm:$0xff]
    %v1205 = vld [vmem:[#allocation10 + $0x678] sm:$0xff]
    %v1206 = vld [vmem:[#allocation10 + $0x680] sm:$0xff]
    %v1207 = vld [vmem:[#allocation10 + $0x688] sm:$0xff]
    %v1208 = vld [vmem:[#allocation10 + $0x690] sm:$0xff]
    %v1209 = vld [vmem:[#allocation10 + $0x698] sm:$0xff]
    %v1210 = vld [vmem:[#allocation10 + $0x6a0] sm:$0xff]
    %v1211 = vld [vmem:[#allocation10 + $0x6a8] sm:$0xff]
    %v1212 = vld [vmem:[#allocation10 + $0x6b0] sm:$0xff]
    %v1213 = vld [vmem:[#allocation10 + $0x6b8] sm:$0xff]
    %v1214 = vld [vmem:[#allocation10 + $0x6c0] sm:$0xff]
    %v1215 = vld [vmem:[#allocation10 + $0x6c8] sm:$0xff]
    %v1216 = vld [vmem:[#allocation10 + $0x6d0] sm:$0xff]
    %v1217 = vld [vmem:[#allocation10 + $0x6d8] sm:$0xff]
    %v1218 = vld [vmem:[#allocation10 + $0x6e0] sm:$0xff]
    %v1219 = vld [vmem:[#allocation10 + $0x6e8] sm:$0xff]
    %v1220 = vld [vmem:[#allocation10 + $0x6f0] sm:$0xff]
    %v1221 = vld [vmem:[#allocation10 + $0x6f8] sm:$0xff]
    %v1222 = vld [vmem:[#allocation10 + $0x700] sm:$0xff]
    %v1223 = vld [vmem:[#allocation10 + $0x708] sm:$0xff]
    %v1224 = vld [vmem:[#allocation10 + $0x710] sm:$0xff]
    %v1225 = vld [vmem:[#allocation10 + $0x718] sm:$0xff]
    %v1226 = vld [vmem:[#allocation10 + $0x720] sm:$0xff]
    %v1227 = vld [vmem:[#allocation10 + $0x728] sm:$0xff]
    %v1228 = vld [vmem:[#allocation10 + $0x730] sm:$0xff]
    %v1229 = vld [vmem:[#allocation10 + $0x738] sm:$0xff]
    %v1230 = vld [vmem:[#allocation10 + $0x740] sm:$0xff]
    %v1231 = vld [vmem:[#allocation10 + $0x748] sm:$0xff]
    %v1232 = vld [vmem:[#allocation10 + $0x750] sm:$0xff]
    %v1233 = vld [vmem:[#allocation10 + $0x758] sm:$0xff]
    %v1234 = vld [vmem:[#allocation10 + $0x760] sm:$0xff]
    %v1235 = vld [vmem:[#allocation10 + $0x768] sm:$0xff]
    %v1236 = vld [vmem:[#allocation10 + $0x770] sm:$0xff]
    %v1237 = vld [vmem:[#allocation10 + $0x778] sm:$0xff]
    %v1238 = vld [vmem:[#allocation10 + $0x780] sm:$0xff]
    %v1239 = vld [vmem:[#allocation10 + $0x788] sm:$0xff]
    %v1240 = vld [vmem:[#allocation10 + $0x790] sm:$0xff]
    %v1241 = vld [vmem:[#allocation10 + $0x798] sm:$0xff]
    %v1242 = vld [vmem:[#allocation10 + $0x7a0] sm:$0xff]
    %v1243 = vld [vmem:[#allocation10 + $0x7a8] sm:$0xff]
    %v1244 = vld [vmem:[#allocation10 + $0x7b0] sm:$0xff]
    %v1245 = vld [vmem:[#allocation10 + $0x7b8] sm:$0xff]
    %v1246 = vld [vmem:[#allocation10 + $0x7c0] sm:$0xff]
    %v1247 = vld [vmem:[#allocation10 + $0x7c8] sm:$0xff]
    %v1248 = vld [vmem:[#allocation10 + $0x7d0] sm:$0xff]
    %v1249 = vld [vmem:[#allocation10 + $0x7d8] sm:$0xff]
    %v1250 = vld [vmem:[#allocation10 + $0x7e0] sm:$0xff]
    %v1251 = vld [vmem:[#allocation10 + $0x7e8] sm:$0xff]
    %v1252 = vld [vmem:[#allocation10 + $0x7f0] sm:$0xff]
    %v1253 = vld [vmem:[#allocation10 + $0x7f8] sm:$0xff]
    %v1254 = vld [vmem:[#allocation3] sm:$0xfe]
    %v1255 = vld [vmem:[#allocation3 + $0x8] sm:$0xfe]
    %v1256 = vld [vmem:[#allocation3 + $0x10] sm:$0xfe]
    %v1257 = vld [vmem:[#allocation3 + $0x18] sm:$0xfe]
    %v1258 = vld [vmem:[#allocation3 + $0x40] sm:$0x1]
    %v1259 = vld [vmem:[#allocation3 + $0x48] sm:$0x1]
    %v1260 = vld [vmem:[#allocation3 + $0x50] sm:$0x1]
    %v1261 = vld [vmem:[#allocation3 + $0x58] sm:$0x1]
    %v1262 = vld [vmem:[#allocation3 + $0x60] sm:$0xfe]
    %v1263 = vld [vmem:[#allocation3 + $0x68] sm:$0xfe]
    %v1264 = vld [vmem:[#allocation3 + $0x70] sm:$0xfe]
    %v1265 = vld [vmem:[#allocation3 + $0x78] sm:$0xfe]
    %v1266 = vld [vmem:[#allocation3 + $0xa0] sm:$0x1]
    %v1267 = vld [vmem:[#allocation3 + $0xa8] sm:$0x1]
    %v1268 = vld [vmem:[#allocation3 + $0xb0] sm:$0x1]
    %v1269 = vld [vmem:[#allocation3 + $0xb8] sm:$0x1]
    %vm1294 = vcmask 1046528
    %v1295 = vrot.slane %v1254, 1
    %v1296 = vrot.slane %v986, 1
    %v1297 = vsel %vm1294, %v1295, %v1296
    %v1298 = vrot.slane %v1255, 1
    %v1299 = vrot.slane %v987, 1
    %v1300 = vsel %vm1294, %v1298, %v1299
    %v1301 = vrot.slane %v1256, 1
    %v1302 = vrot.slane %v988, 1
    %v1303 = vsel %vm1294, %v1301, %v1302
    %v1304 = vrot.slane %v1257, 1
    %v1305 = vrot.slane %v989, 1
    %v1306 = vsel %vm1294, %v1304, %v1305
    %v1307 = vrot.slane %v1258, 1
    %v1308 = vsel %vm1294, %v1296, %v1307
    %v1309 = vrot.slane %v1259, 1
    %v1310 = vsel %vm1294, %v1299, %v1309
    %v1311 = vrot.slane %v1260, 1
    %v1312 = vsel %vm1294, %v1302, %v1311
    %v1313 = vrot.slane %v1261, 1
    %v1314 = vsel %vm1294, %v1305, %v1313
    %v1315 = vrot.slane %v1262, 1
    %v1316 = vrot.slane %v994, 1
    %v1317 = vsel %vm1294, %v1315, %v1316
    %v1318 = vrot.slane %v1263, 1
    %v1319 = vrot.slane %v995, 1
    %v1320 = vsel %vm1294, %v1318, %v1319
    %v1321 = vrot.slane %v1264, 1
    %v1322 = vrot.slane %v996, 1
    %v1323 = vsel %vm1294, %v1321, %v1322
    %v1324 = vrot.slane %v1265, 1
    %v1325 = vrot.slane %v997, 1
    %v1326 = vsel %vm1294, %v1324, %v1325
    %v1327 = vrot.slane %v1266, 1
    %v1328 = vsel %vm1294, %v1316, %v1327
    %v1329 = vrot.slane %v1267, 1
    %v1330 = vsel %vm1294, %v1319, %v1329
    %v1331 = vrot.slane %v1268, 1
    %v1332 = vsel %vm1294, %v1322, %v1331
    %v1333 = vrot.slane %v1269, 1
    %v1334 = vsel %vm1294, %v1325, %v1333
    %v1351 = vld [vmem:[#allocation10 + $0x800] sm:$0xff]
    %v1352 = vld [vmem:[#allocation10 + $0x808] sm:$0xff]
    %v1353 = vld [vmem:[#allocation10 + $0x810] sm:$0xff]
    %v1354 = vld [vmem:[#allocation10 + $0x818] sm:$0xff]
    %v1355 = vld [vmem:[#allocation10 + $0x820] sm:$0xff]
    %v1356 = vld [vmem:[#allocation10 + $0x828] sm:$0xff]
    %v1357 = vld [vmem:[#allocation10 + $0x830] sm:$0xff]
    %v1358 = vld [vmem:[#allocation10 + $0x838] sm:$0xff]
    %v1359 = vld [vmem:[#allocation10 + $0x840] sm:$0xff]
    %v1360 = vld [vmem:[#allocation10 + $0x848] sm:$0xff]
    %v1361 = vld [vmem:[#allocation10 + $0x850] sm:$0xff]
    %v1362 = vld [vmem:[#allocation10 + $0x858] sm:$0xff]
    %v1363 = vld [vmem:[#allocation10 + $0x860] sm:$0xff]
    %v1364 = vld [vmem:[#allocation10 + $0x868] sm:$0xff]
    %v1365 = vld [vmem:[#allocation10 + $0x870] sm:$0xff]
    %v1366 = vld [vmem:[#allocation10 + $0x878] sm:$0xff]
    %v1367 = vld [vmem:[#allocation10 + $0x880] sm:$0xff]
    %v1368 = vld [vmem:[#allocation10 + $0x888] sm:$0xff]
    %v1369 = vld [vmem:[#allocation10 + $0x890] sm:$0xff]
    %v1370 = vld [vmem:[#allocation10 + $0x898] sm:$0xff]
    %v1371 = vld [vmem:[#allocation10 + $0x8a0] sm:$0xff]
    %v1372 = vld [vmem:[#allocation10 + $0x8a8] sm:$0xff]
    %v1373 = vld [vmem:[#allocation10 + $0x8b0] sm:$0xff]
    %v1374 = vld [vmem:[#allocation10 + $0x8b8] sm:$0xff]
    %v1375 = vld [vmem:[#allocation10 + $0x8c0] sm:$0xff]
    %v1376 = vld [vmem:[#allocation10 + $0x8c8] sm:$0xff]
    %v1377 = vld [vmem:[#allocation10 + $0x8d0] sm:$0xff]
    %v1378 = vld [vmem:[#allocation10 + $0x8d8] sm:$0xff]
    %v1379 = vld [vmem:[#allocation10 + $0x8e0] sm:$0xff]
    %v1380 = vld [vmem:[#allocation10 + $0x8e8] sm:$0xff]
    %v1381 = vld [vmem:[#allocation10 + $0x8f0] sm:$0xff]
    %v1382 = vld [vmem:[#allocation10 + $0x8f8] sm:$0xff]
    %v1383 = vld [vmem:[#allocation10 + $0x900] sm:$0xff]
    %v1384 = vld [vmem:[#allocation10 + $0x908] sm:$0xff]
    %v1385 = vld [vmem:[#allocation10 + $0x910] sm:$0xff]
    %v1386 = vld [vmem:[#allocation10 + $0x918] sm:$0xff]
    %v1387 = vld [vmem:[#allocation10 + $0x920] sm:$0xff]
    %v1388 = vld [vmem:[#allocation10 + $0x928] sm:$0xff]
    %v1389 = vld [vmem:[#allocation10 + $0x930] sm:$0xff]
    %v1390 = vld [vmem:[#allocation10 + $0x938] sm:$0xff]
    %v1391 = vld [vmem:[#allocation10 + $0x940] sm:$0xff]
    %v1392 = vld [vmem:[#allocation10 + $0x948] sm:$0xff]
    %v1393 = vld [vmem:[#allocation10 + $0x950] sm:$0xff]
    %v1394 = vld [vmem:[#allocation10 + $0x958] sm:$0xff]
    %v1395 = vld [vmem:[#allocation10 + $0x960] sm:$0xff]
    %v1396 = vld [vmem:[#allocation10 + $0x968] sm:$0xff]
    %v1397 = vld [vmem:[#allocation10 + $0x970] sm:$0xff]
    %v1398 = vld [vmem:[#allocation10 + $0x978] sm:$0xff]
    %v1399 = vld [vmem:[#allocation10 + $0x980] sm:$0xff]
    %v1400 = vld [vmem:[#allocation10 + $0x988] sm:$0xff]
    %v1401 = vld [vmem:[#allocation10 + $0x990] sm:$0xff]
    %v1402 = vld [vmem:[#allocation10 + $0x998] sm:$0xff]
    %v1403 = vld [vmem:[#allocation10 + $0x9a0] sm:$0xff]
    %v1404 = vld [vmem:[#allocation10 + $0x9a8] sm:$0xff]
    %v1405 = vld [vmem:[#allocation10 + $0x9b0] sm:$0xff]
    %v1406 = vld [vmem:[#allocation10 + $0x9b8] sm:$0xff]
    %v1407 = vld [vmem:[#allocation10 + $0x9c0] sm:$0xff]
    %v1408 = vld [vmem:[#allocation10 + $0x9c8] sm:$0xff]
    %v1409 = vld [vmem:[#allocation10 + $0x9d0] sm:$0xff]
    %v1410 = vld [vmem:[#allocation10 + $0x9d8] sm:$0xff]
    %v1411 = vld [vmem:[#allocation10 + $0x9e0] sm:$0xff]
    %v1412 = vld [vmem:[#allocation10 + $0x9e8] sm:$0xff]
    %v1413 = vld [vmem:[#allocation10 + $0x9f0] sm:$0xff]
    %v1414 = vld [vmem:[#allocation10 + $0x9f8] sm:$0xff]
    %v1415 = vld [vmem:[#allocation10 + $0xa00] sm:$0xff]
    %v1416 = vld [vmem:[#allocation10 + $0xa08] sm:$0xff]
    %v1417 = vld [vmem:[#allocation10 + $0xa10] sm:$0xff]
    %v1418 = vld [vmem:[#allocation10 + $0xa18] sm:$0xff]
    %v1419 = vld [vmem:[#allocation10 + $0xa20] sm:$0xff]
    %v1420 = vld [vmem:[#allocation10 + $0xa28] sm:$0xff]
    %v1421 = vld [vmem:[#allocation10 + $0xa30] sm:$0xff]
    %v1422 = vld [vmem:[#allocation10 + $0xa38] sm:$0xff]
    %v1423 = vld [vmem:[#allocation10 + $0xa40] sm:$0xff]
    %v1424 = vld [vmem:[#allocation10 + $0xa48] sm:$0xff]
    %v1425 = vld [vmem:[#allocation10 + $0xa50] sm:$0xff]
    %v1426 = vld [vmem:[#allocation10 + $0xa58] sm:$0xff]
    %v1427 = vld [vmem:[#allocation10 + $0xa60] sm:$0xff]
    %v1428 = vld [vmem:[#allocation10 + $0xa68] sm:$0xff]
    %v1429 = vld [vmem:[#allocation10 + $0xa70] sm:$0xff]
    %v1430 = vld [vmem:[#allocation10 + $0xa78] sm:$0xff]
    %v1431 = vld [vmem:[#allocation10 + $0xa80] sm:$0xff]
    %v1432 = vld [vmem:[#allocation10 + $0xa88] sm:$0xff]
    %v1433 = vld [vmem:[#allocation10 + $0xa90] sm:$0xff]
    %v1434 = vld [vmem:[#allocation10 + $0xa98] sm:$0xff]
    %v1435 = vld [vmem:[#allocation10 + $0xaa0] sm:$0xff]
    %v1436 = vld [vmem:[#allocation10 + $0xaa8] sm:$0xff]
    %v1437 = vld [vmem:[#allocation10 + $0xab0] sm:$0xff]
    %v1438 = vld [vmem:[#allocation10 + $0xab8] sm:$0xff]
    %v1439 = vld [vmem:[#allocation10 + $0xac0] sm:$0xff]
    %v1440 = vld [vmem:[#allocation10 + $0xac8] sm:$0xff]
    %v1441 = vld [vmem:[#allocation10 + $0xad0] sm:$0xff]
    %v1442 = vld [vmem:[#allocation10 + $0xad8] sm:$0xff]
    %v1443 = vld [vmem:[#allocation10 + $0xae0] sm:$0xff]
    %v1444 = vld [vmem:[#allocation10 + $0xae8] sm:$0xff]
    %v1445 = vld [vmem:[#allocation10 + $0xaf0] sm:$0xff]
    %v1446 = vld [vmem:[#allocation10 + $0xaf8] sm:$0xff]
    %v1447 = vld [vmem:[#allocation10 + $0xb00] sm:$0xff]
    %v1448 = vld [vmem:[#allocation10 + $0xb08] sm:$0xff]
    %v1449 = vld [vmem:[#allocation10 + $0xb10] sm:$0xff]
    %v1450 = vld [vmem:[#allocation10 + $0xb18] sm:$0xff]
    %v1451 = vld [vmem:[#allocation10 + $0xb20] sm:$0xff]
    %v1452 = vld [vmem:[#allocation10 + $0xb28] sm:$0xff]
    %v1453 = vld [vmem:[#allocation10 + $0xb30] sm:$0xff]
    %v1454 = vld [vmem:[#allocation10 + $0xb38] sm:$0xff]
    %v1455 = vld [vmem:[#allocation10 + $0xb40] sm:$0xff]
    %v1456 = vld [vmem:[#allocation10 + $0xb48] sm:$0xff]
    %v1457 = vld [vmem:[#allocation10 + $0xb50] sm:$0xff]
    %v1458 = vld [vmem:[#allocation10 + $0xb58] sm:$0xff]
    %v1459 = vld [vmem:[#allocation10 + $0xb60] sm:$0xff]
    %v1460 = vld [vmem:[#allocation10 + $0xb68] sm:$0xff]
    %v1461 = vld [vmem:[#allocation10 + $0xb70] sm:$0xff]
    %v1462 = vld [vmem:[#allocation10 + $0xb78] sm:$0xff]
    %v1463 = vld [vmem:[#allocation10 + $0xb80] sm:$0xff]
    %v1464 = vld [vmem:[#allocation10 + $0xb88] sm:$0xff]
    %v1465 = vld [vmem:[#allocation10 + $0xb90] sm:$0xff]
    %v1466 = vld [vmem:[#allocation10 + $0xb98] sm:$0xff]
    %v1467 = vld [vmem:[#allocation10 + $0xba0] sm:$0xff]
    %v1468 = vld [vmem:[#allocation10 + $0xba8] sm:$0xff]
    %v1469 = vld [vmem:[#allocation10 + $0xbb0] sm:$0xff]
    %v1470 = vld [vmem:[#allocation10 + $0xbb8] sm:$0xff]
    %v1471 = vld [vmem:[#allocation10 + $0xbc0] sm:$0xff]
    %v1472 = vld [vmem:[#allocation10 + $0xbc8] sm:$0xff]
    %v1473 = vld [vmem:[#allocation10 + $0xbd0] sm:$0xff]
    %v1474 = vld [vmem:[#allocation10 + $0xbd8] sm:$0xff]
    %v1475 = vld [vmem:[#allocation10 + $0xbe0] sm:$0xff]
    %v1476 = vld [vmem:[#allocation10 + $0xbe8] sm:$0xff]
    %v1477 = vld [vmem:[#allocation10 + $0xbf0] sm:$0xff]
    %v1478 = vld [vmem:[#allocation10 + $0xbf8] sm:$0xff]
    %v1479 = vld [vmem:[#allocation10 + $0xc00] sm:$0xff]
    %v1480 = vld [vmem:[#allocation10 + $0xc08] sm:$0xff]
    %v1481 = vld [vmem:[#allocation10 + $0xc10] sm:$0xff]
    %v1482 = vld [vmem:[#allocation10 + $0xc18] sm:$0xff]
    %v1483 = vld [vmem:[#allocation10 + $0xc20] sm:$0xff]
    %v1484 = vld [vmem:[#allocation10 + $0xc28] sm:$0xff]
    %v1485 = vld [vmem:[#allocation10 + $0xc30] sm:$0xff]
    %v1486 = vld [vmem:[#allocation10 + $0xc38] sm:$0xff]
    %v1487 = vld [vmem:[#allocation10 + $0xc40] sm:$0xff]
    %v1488 = vld [vmem:[#allocation10 + $0xc48] sm:$0xff]
    %v1489 = vld [vmem:[#allocation10 + $0xc50] sm:$0xff]
    %v1490 = vld [vmem:[#allocation10 + $0xc58] sm:$0xff]
    %v1491 = vld [vmem:[#allocation10 + $0xc60] sm:$0xff]
    %v1492 = vld [vmem:[#allocation10 + $0xc68] sm:$0xff]
    %v1493 = vld [vmem:[#allocation10 + $0xc70] sm:$0xff]
    %v1494 = vld [vmem:[#allocation10 + $0xc78] sm:$0xff]
    %v1495 = vld [vmem:[#allocation10 + $0xc80] sm:$0xff]
    %v1496 = vld [vmem:[#allocation10 + $0xc88] sm:$0xff]
    %v1497 = vld [vmem:[#allocation10 + $0xc90] sm:$0xff]
    %v1498 = vld [vmem:[#allocation10 + $0xc98] sm:$0xff]
    %v1499 = vld [vmem:[#allocation10 + $0xca0] sm:$0xff]
    %v1500 = vld [vmem:[#allocation10 + $0xca8] sm:$0xff]
    %v1501 = vld [vmem:[#allocation10 + $0xcb0] sm:$0xff]
    %v1502 = vld [vmem:[#allocation10 + $0xcb8] sm:$0xff]
    %v1503 = vld [vmem:[#allocation10 + $0xcc0] sm:$0xff]
    %v1504 = vld [vmem:[#allocation10 + $0xcc8] sm:$0xff]
    %v1505 = vld [vmem:[#allocation10 + $0xcd0] sm:$0xff]
    %v1506 = vld [vmem:[#allocation10 + $0xcd8] sm:$0xff]
    %v1507 = vld [vmem:[#allocation10 + $0xce0] sm:$0xff]
    %v1508 = vld [vmem:[#allocation10 + $0xce8] sm:$0xff]
    %v1509 = vld [vmem:[#allocation10 + $0xcf0] sm:$0xff]
    %v1510 = vld [vmem:[#allocation10 + $0xcf8] sm:$0xff]
    %v1511 = vld [vmem:[#allocation10 + $0xd00] sm:$0xff]
    %v1512 = vld [vmem:[#allocation10 + $0xd08] sm:$0xff]
    %v1513 = vld [vmem:[#allocation10 + $0xd10] sm:$0xff]
    %v1514 = vld [vmem:[#allocation10 + $0xd18] sm:$0xff]
    %v1515 = vld [vmem:[#allocation10 + $0xd20] sm:$0xff]
    %v1516 = vld [vmem:[#allocation10 + $0xd28] sm:$0xff]
    %v1517 = vld [vmem:[#allocation10 + $0xd30] sm:$0xff]
    %v1518 = vld [vmem:[#allocation10 + $0xd38] sm:$0xff]
    %v1519 = vld [vmem:[#allocation10 + $0xd40] sm:$0xff]
    %v1520 = vld [vmem:[#allocation10 + $0xd48] sm:$0xff]
    %v1521 = vld [vmem:[#allocation10 + $0xd50] sm:$0xff]
    %v1522 = vld [vmem:[#allocation10 + $0xd58] sm:$0xff]
    %v1523 = vld [vmem:[#allocation10 + $0xd60] sm:$0xff]
    %v1524 = vld [vmem:[#allocation10 + $0xd68] sm:$0xff]
    %v1525 = vld [vmem:[#allocation10 + $0xd70] sm:$0xff]
    %v1526 = vld [vmem:[#allocation10 + $0xd78] sm:$0xff]
    %v1527 = vld [vmem:[#allocation10 + $0xd80] sm:$0xff]
    %v1528 = vld [vmem:[#allocation10 + $0xd88] sm:$0xff]
    %v1529 = vld [vmem:[#allocation10 + $0xd90] sm:$0xff]
    %v1530 = vld [vmem:[#allocation10 + $0xd98] sm:$0xff]
    %v1531 = vld [vmem:[#allocation10 + $0xda0] sm:$0xff]
    %v1532 = vld [vmem:[#allocation10 + $0xda8] sm:$0xff]
    %v1533 = vld [vmem:[#allocation10 + $0xdb0] sm:$0xff]
    %v1534 = vld [vmem:[#allocation10 + $0xdb8] sm:$0xff]
    %v1535 = vld [vmem:[#allocation10 + $0xdc0] sm:$0xff]
    %v1536 = vld [vmem:[#allocation10 + $0xdc8] sm:$0xff]
    %v1537 = vld [vmem:[#allocation10 + $0xdd0] sm:$0xff]
    %v1538 = vld [vmem:[#allocation10 + $0xdd8] sm:$0xff]
    %v1539 = vld [vmem:[#allocation10 + $0xde0] sm:$0xff]
    %v1540 = vld [vmem:[#allocation10 + $0xde8] sm:$0xff]
    %v1541 = vld [vmem:[#allocation10 + $0xdf0] sm:$0xff]
    %v1542 = vld [vmem:[#allocation10 + $0xdf8] sm:$0xff]
    %v1543 = vld [vmem:[#allocation10 + $0xe00] sm:$0xff]
    %v1544 = vld [vmem:[#allocation10 + $0xe08] sm:$0xff]
    %v1545 = vld [vmem:[#allocation10 + $0xe10] sm:$0xff]
    %v1546 = vld [vmem:[#allocation10 + $0xe18] sm:$0xff]
    %v1547 = vld [vmem:[#allocation10 + $0xe20] sm:$0xff]
    %v1548 = vld [vmem:[#allocation10 + $0xe28] sm:$0xff]
    %v1549 = vld [vmem:[#allocation10 + $0xe30] sm:$0xff]
    %v1550 = vld [vmem:[#allocation10 + $0xe38] sm:$0xff]
    %v1551 = vld [vmem:[#allocation10 + $0xe40] sm:$0xff]
    %v1552 = vld [vmem:[#allocation10 + $0xe48] sm:$0xff]
    %v1553 = vld [vmem:[#allocation10 + $0xe50] sm:$0xff]
    %v1554 = vld [vmem:[#allocation10 + $0xe58] sm:$0xff]
    %v1555 = vld [vmem:[#allocation10 + $0xe60] sm:$0xff]
    %v1556 = vld [vmem:[#allocation10 + $0xe68] sm:$0xff]
    %v1557 = vld [vmem:[#allocation10 + $0xe70] sm:$0xff]
    %v1558 = vld [vmem:[#allocation10 + $0xe78] sm:$0xff]
    %v1559 = vld [vmem:[#allocation10 + $0xe80] sm:$0xff]
    %v1560 = vld [vmem:[#allocation10 + $0xe88] sm:$0xff]
    %v1561 = vld [vmem:[#allocation10 + $0xe90] sm:$0xff]
    %v1562 = vld [vmem:[#allocation10 + $0xe98] sm:$0xff]
    %v1563 = vld [vmem:[#allocation10 + $0xea0] sm:$0xff]
    %v1564 = vld [vmem:[#allocation10 + $0xea8] sm:$0xff]
    %v1565 = vld [vmem:[#allocation10 + $0xeb0] sm:$0xff]
    %v1566 = vld [vmem:[#allocation10 + $0xeb8] sm:$0xff]
    %v1567 = vld [vmem:[#allocation10 + $0xec0] sm:$0xff]
    %v1568 = vld [vmem:[#allocation10 + $0xec8] sm:$0xff]
    %v1569 = vld [vmem:[#allocation10 + $0xed0] sm:$0xff]
    %v1570 = vld [vmem:[#allocation10 + $0xed8] sm:$0xff]
    %v1571 = vld [vmem:[#allocation10 + $0xee0] sm:$0xff]
    %v1572 = vld [vmem:[#allocation10 + $0xee8] sm:$0xff]
    %v1573 = vld [vmem:[#allocation10 + $0xef0] sm:$0xff]
    %v1574 = vld [vmem:[#allocation10 + $0xef8] sm:$0xff]
    %v1575 = vld [vmem:[#allocation10 + $0xf00] sm:$0xff]
    %v1576 = vld [vmem:[#allocation10 + $0xf08] sm:$0xff]
    %v1577 = vld [vmem:[#allocation10 + $0xf10] sm:$0xff]
    %v1578 = vld [vmem:[#allocation10 + $0xf18] sm:$0xff]
    %v1579 = vld [vmem:[#allocation10 + $0xf20] sm:$0xff]
    %v1580 = vld [vmem:[#allocation10 + $0xf28] sm:$0xff]
    %v1581 = vld [vmem:[#allocation10 + $0xf30] sm:$0xff]
    %v1582 = vld [vmem:[#allocation10 + $0xf38] sm:$0xff]
    %v1583 = vld [vmem:[#allocation10 + $0xf40] sm:$0xff]
    %v1584 = vld [vmem:[#allocation10 + $0xf48] sm:$0xff]
    %v1585 = vld [vmem:[#allocation10 + $0xf50] sm:$0xff]
    %v1586 = vld [vmem:[#allocation10 + $0xf58] sm:$0xff]
    %v1587 = vld [vmem:[#allocation10 + $0xf60] sm:$0xff]
    %v1588 = vld [vmem:[#allocation10 + $0xf68] sm:$0xff]
    %v1589 = vld [vmem:[#allocation10 + $0xf70] sm:$0xff]
    %v1590 = vld [vmem:[#allocation10 + $0xf78] sm:$0xff]
    %v1591 = vld [vmem:[#allocation10 + $0xf80] sm:$0xff]
    %v1592 = vld [vmem:[#allocation10 + $0xf88] sm:$0xff]
    %v1593 = vld [vmem:[#allocation10 + $0xf90] sm:$0xff]
    %v1594 = vld [vmem:[#allocation10 + $0xf98] sm:$0xff]
    %v1595 = vld [vmem:[#allocation10 + $0xfa0] sm:$0xff]
    %v1596 = vld [vmem:[#allocation10 + $0xfa8] sm:$0xff]
    %v1597 = vld [vmem:[#allocation10 + $0xfb0] sm:$0xff]
    %v1598 = vld [vmem:[#allocation10 + $0xfb8] sm:$0xff]
    %v1599 = vld [vmem:[#allocation10 + $0xfc0] sm:$0xff]
    %v1600 = vld [vmem:[#allocation10 + $0xfc8] sm:$0xff]
    %v1601 = vld [vmem:[#allocation10 + $0xfd0] sm:$0xff]
    %v1602 = vld [vmem:[#allocation10 + $0xfd8] sm:$0xff]
    %v1603 = vld [vmem:[#allocation10 + $0xfe0] sm:$0xff]
    %v1604 = vld [vmem:[#allocation10 + $0xfe8] sm:$0xff]
    %v1605 = vld [vmem:[#allocation10 + $0xff0] sm:$0xff]
    %v1606 = vld [vmem:[#allocation10 + $0xff8] sm:$0xff]
    %1607 = vmatprep.subr.mxu0 %v1352
    %1608 = vmatpush1.msra.mxu0 %v1351
    %1609 = vmatprep.subr.mxu0 %v1356
    %1610 = vmatpush1.msra.mxu0 %v1355
    %1611 = vmatprep.subr.mxu0 %v1360
    %1612 = vmatpush1.msra.mxu0 %v1359
    %1613 = vmatprep.subr.mxu0 %v1364
    %1614 = vmatpush1.msra.mxu0 %v1363
    %1615 = vmatprep.subr.mxu0 %v1368
    %1616 = vmatpush1.msra.mxu0 %v1367
    %1617 = vmatprep.subr.mxu0 %v1372
    %1618 = vmatpush1.msra.mxu0 %v1371
    %1619 = vmatprep.subr.mxu0 %v1376
    %1620 = vmatpush1.msra.mxu0 %v1375
    %1621 = vmatprep.subr.mxu0 %v1380
    %1622 = vmatpush1.msra.mxu0 %v1379
    %1623 = vmatprep.subr.mxu0 %v1384
    %1624 = vmatpush1.msra.mxu0 %v1383
    %1625 = vmatprep.subr.mxu0 %v1388
    %1626 = vmatpush1.msra.mxu0 %v1387
    %1627 = vmatprep.subr.mxu0 %v1392
    %1628 = vmatpush1.msra.mxu0 %v1391
    %1629 = vmatprep.subr.mxu0 %v1396
    %1630 = vmatpush1.msra.mxu0 %v1395
    %1631 = vmatprep.subr.mxu0 %v1400
    %1632 = vmatpush1.msra.mxu0 %v1399
    %1633 = vmatprep.subr.mxu0 %v1404
    %1634 = vmatpush1.msra.mxu0 %v1403
    %1635 = vmatprep.subr.mxu0 %v1408
    %1636 = vmatpush1.msra.mxu0 %v1407
    %1637 = vmatprep.subr.mxu0 %v1412
    %1638 = vmatpush1.msra.mxu0 %v1411
    %1639 = vmatprep.subr.mxu0 %v1416
    %1640 = vmatpush1.msra.mxu0 %v1415
    %1641 = vmatprep.subr.mxu0 %v1420
    %1642 = vmatpush1.msra.mxu0 %v1419
    %1643 = vmatprep.subr.mxu0 %v1424
    %1644 = vmatpush1.msra.mxu0 %v1423
    %1645 = vmatprep.subr.mxu0 %v1428
    %1646 = vmatpush1.msra.mxu0 %v1427
    %1647 = vmatprep.subr.mxu0 %v1432
    %1648 = vmatpush1.msra.mxu0 %v1431
    %1649 = vmatprep.subr.mxu0 %v1436
    %1650 = vmatpush1.msra.mxu0 %v1435
    %1651 = vmatprep.subr.mxu0 %v1440
    %1652 = vmatpush1.msra.mxu0 %v1439
    %1653 = vmatprep.subr.mxu0 %v1444
    %1654 = vmatpush1.msra.mxu0 %v1443
    %1655 = vmatprep.subr.mxu0 %v1448
    %1656 = vmatpush1.msra.mxu0 %v1447
    %1657 = vmatprep.subr.mxu0 %v1452
    %1658 = vmatpush1.msra.mxu0 %v1451
    %1659 = vmatprep.subr.mxu0 %v1456
    %1660 = vmatpush1.msra.mxu0 %v1455
    %1661 = vmatprep.subr.mxu0 %v1460
    %1662 = vmatpush1.msra.mxu0 %v1459
    %1663 = vmatprep.subr.mxu0 %v1464
    %1664 = vmatpush1.msra.mxu0 %v1463
    %1665 = vmatprep.subr.mxu0 %v1468
    %1666 = vmatpush1.msra.mxu0 %v1467
    %1667 = vmatprep.subr.mxu0 %v1472
    %1668 = vmatpush1.msra.mxu0 %v1471
    %1669 = vmatprep.subr.mxu0 %v1476
    %1670 = vmatpush1.msra.mxu0 %v1475
    %1671 = vmatprep.mubr.f32.mxu0 %v1300
    %1672 = vmatmul.mubr.f32.gmra.mrb[0].mxu0 %v1297
    %v1673 = vpop.f32.mrb[0].mxu0
    %v1674 = vadd.f32 0.0, %v1673
    %v1675 = vpop.f32.mrb[0].mxu0
    %v1676 = vadd.f32 0.0, %v1675
    %1677 = vmatprep.mubr.f32.mxu0 %v1310
    %1678 = vmatmul.mubr.f32.gmra.mrb[0].mxu0 %v1308
    %v1679 = vpop.f32.mrb[0].mxu0
    %v1680 = vadd.f32 0.0, %v1679
    %v1681 = vpop.f32.mrb[0].mxu0
    %v1682 = vadd.f32 0.0, %v1681
    %1683 = vmatprep.mubr.f32.mxu0 %v1320
    %1684 = vmatmul.mubr.f32.gmra.mrb[0].mxu0 %v1317
    %v1685 = vpop.f32.mrb[0].mxu0
    %v1686 = vadd.f32 0.0, %v1685
    %v1687 = vpop.f32.mrb[0].mxu0
    %v1688 = vadd.f32 0.0, %v1687
    %1689 = vmatprep.mubr.f32.mxu0 %v1330
    %1690 = vmatmul.mubr.f32.gmra.mrb[0].mxu0 %v1328
    %v1691 = vpop.f32.mrb[0].mxu0
    %v1692 = vadd.f32 0.0, %v1691
    %v1693 = vpop.f32.mrb[0].mxu0
    %v1694 = vadd.f32 0.0, %v1693
    %1695 = vdwg.mxu0
    %1696 = vmatprep.subr.mxu0 %v1480
    %1697 = vmatpush1.msra.mxu0 %v1479
    %1698 = vmatprep.subr.mxu0 %v1484
    %1699 = vmatpush1.msra.mxu0 %v1483
    %1700 = vmatprep.subr.mxu0 %v1488
    %1701 = vmatpush1.msra.mxu0 %v1487
    %1702 = vmatprep.subr.mxu0 %v1492
    %1703 = vmatpush1.msra.mxu0 %v1491
    %1704 = vmatprep.subr.mxu0 %v1496
    %1705 = vmatpush1.msra.mxu0 %v1495
    %1706 = vmatprep.subr.mxu0 %v1500
    %1707 = vmatpush1.msra.mxu0 %v1499
    %1708 = vmatprep.subr.mxu0 %v1504
    %1709 = vmatpush1.msra.mxu0 %v1503
    %1710 = vmatprep.subr.mxu0 %v1508
    %1711 = vmatpush1.msra.mxu0 %v1507
    %1712 = vmatprep.subr.mxu0 %v1512
    %1713 = vmatpush1.msra.mxu0 %v1511
    %1714 = vmatprep.subr.mxu0 %v1516
    %1715 = vmatpush1.msra.mxu0 %v1515
    %1716 = vmatprep.subr.mxu0 %v1520
    %1717 = vmatpush1.msra.mxu0 %v1519
    %1718 = vmatprep.subr.mxu0 %v1524
    %1719 = vmatpush1.msra.mxu0 %v1523
    %1720 = vmatprep.subr.mxu0 %v1528
    %1721 = vmatpush1.msra.mxu0 %v1527
    %1722 = vmatprep.subr.mxu0 %v1532
    %1723 = vmatpush1.msra.mxu0 %v1531
    %1724 = vmatprep.subr.mxu0 %v1536
    %1725 = vmatpush1.msra.mxu0 %v1535
    %1726 = vmatprep.subr.mxu0 %v1540
    %1727 = vmatpush1.msra.mxu0 %v1539
    %1728 = vmatprep.subr.mxu0 %v1544
    %1729 = vmatpush1.msra.mxu0 %v1543
    %1730 = vmatprep.subr.mxu0 %v1548
    %1731 = vmatpush1.msra.mxu0 %v1547
    %1732 = vmatprep.subr.mxu0 %v1552
    %1733 = vmatpush1.msra.mxu0 %v1551
    %1734 = vmatprep.subr.mxu0 %v1556
    %1735 = vmatpush1.msra.mxu0 %v1555
    %1736 = vmatprep.subr.mxu0 %v1560
    %1737 = vmatpush1.msra.mxu0 %v1559
    %1738 = vmatprep.subr.mxu0 %v1564
    %1739 = vmatpush1.msra.mxu0 %v1563
    %1740 = vmatprep.subr.mxu0 %v1568
    %1741 = vmatpush1.msra.mxu0 %v1567
    %1742 = vmatprep.subr.mxu0 %v1572
    %1743 = vmatpush1.msra.mxu0 %v1571
    %1744 = vmatprep.subr.mxu0 %v1576
    %1745 = vmatpush1.msra.mxu0 %v1575
    %1746 = vmatprep.subr.mxu0 %v1580
    %1747 = vmatpush1.msra.mxu0 %v1579
    %1748 = vmatprep.subr.mxu0 %v1584
    %1749 = vmatpush1.msra.mxu0 %v1583
    %1750 = vmatprep.subr.mxu0 %v1588
    %1751 = vmatpush1.msra.mxu0 %v1587
    %1752 = vmatprep.subr.mxu0 %v1592
    %1753 = vmatpush1.msra.mxu0 %v1591
    %1754 = vmatprep.subr.mxu0 %v1596
    %1755 = vmatpush1.msra.mxu0 %v1595
    %1756 = vmatprep.subr.mxu0 %v1600
    %1757 = vmatpush1.msra.mxu0 %v1599
    %1758 = vmatprep.subr.mxu0 %v1604
    %1759 = vmatpush1.msra.mxu0 %v1603
    %1760 = vmatprep.mubr.f32.mxu0 %v1306
    %1761 = vmatmul.mubr.f32.gmra.mrb[0].mxu0 %v1303
    %v1762 = vpop.f32.mrb[0].mxu0
    %v1763 = vadd.f32 %v1674, %v1762
    %v1764 = vpop.f32.mrb[0].mxu0
    %v1765 = vadd.f32 %v1676, %v1764
    %1766 = vmatprep.mubr.f32.mxu0 %v1314
    %1767 = vmatmul.mubr.f32.gmra.mrb[0].mxu0 %v1312
    %v1768 = vpop.f32.mrb[0].mxu0
    %v1769 = vadd.f32 %v1680, %v1768
    %v1770 = vpop.f32.mrb[0].mxu0
    %v1771 = vadd.f32 %v1682, %v1770
    %1772 = vmatprep.mubr.f32.mxu0 %v1326
    %1773 = vmatmul.mubr.f32.gmra.mrb[0].mxu0 %v1323
    %v1774 = vpop.f32.mrb[0].mxu0
    %v1775 = vadd.f32 %v1686, %v1774
    %v1776 = vpop.f32.mrb[0].mxu0
    %v1777 = vadd.f32 %v1688, %v1776
    %1778 = vmatprep.mubr.f32.mxu0 %v1334
    %1779 = vmatmul.mubr.f32.gmra.mrb[0].mxu0 %v1332
    %v1780 = vpop.f32.mrb[0].mxu0
    %v1781 = vadd.f32 %v1692, %v1780
    %v1782 = vpop.f32.mrb[0].mxu0
    %v1783 = vadd.f32 %v1694, %v1782
    %1784 = vdwg.mxu0
    %1785 = vmatprep.subr.mxu0 %v1354
    %1786 = vmatpush1.msra.mxu0 %v1353
    %1787 = vmatprep.subr.mxu0 %v1358
    %1788 = vmatpush1.msra.mxu0 %v1357
    %1789 = vmatprep.subr.mxu0 %v1362
    %1790 = vmatpush1.msra.mxu0 %v1361
    %1791 = vmatprep.subr.mxu0 %v1366
    %1792 = vmatpush1.msra.mxu0 %v1365
    %1793 = vmatprep.subr.mxu0 %v1370
    %1794 = vmatpush1.msra.mxu0 %v1369
    %1795 = vmatprep.subr.mxu0 %v1374
    %1796 = vmatpush1.msra.mxu0 %v1373
    %1797 = vmatprep.subr.mxu0 %v1378
    %1798 = vmatpush1.msra.mxu0 %v1377
    %1799 = vmatprep.subr.mxu0 %v1382
    %1800 = vmatpush1.msra.mxu0 %v1381
    %1801 = vmatprep.subr.mxu0 %v1386
    %1802 = vmatpush1.msra.mxu0 %v1385
    %1803 = vmatprep.subr.mxu0 %v1390
    %1804 = vmatpush1.msra.mxu0 %v1389
    %1805 = vmatprep.subr.mxu0 %v1394
    %1806 = vmatpush1.msra.mxu0 %v1393
    %1807 = vmatprep.subr.mxu0 %v1398
    %1808 = vmatpush1.msra.mxu0 %v1397
    %1809 = vmatprep.subr.mxu0 %v1402
    %1810 = vmatpush1.msra.mxu0 %v1401
    %1811 = vmatprep.subr.mxu0 %v1406
    %1812 = vmatpush1.msra.mxu0 %v1405
    %1813 = vmatprep.subr.mxu0 %v1410
    %1814 = vmatpush1.msra.mxu0 %v1409
    %1815 = vmatprep.subr.mxu0 %v1414
    %1816 = vmatpush1.msra.mxu0 %v1413
    %1817 = vmatprep.subr.mxu0 %v1418
    %1818 = vmatpush1.msra.mxu0 %v1417
    %1819 = vmatprep.subr.mxu0 %v1422
    %1820 = vmatpush1.msra.mxu0 %v1421
    %1821 = vmatprep.subr.mxu0 %v1426
    %1822 = vmatpush1.msra.mxu0 %v1425
    %1823 = vmatprep.subr.mxu0 %v1430
    %1824 = vmatpush1.msra.mxu0 %v1429
    %1825 = vmatprep.subr.mxu0 %v1434
    %1826 = vmatpush1.msra.mxu0 %v1433
    %1827 = vmatprep.subr.mxu0 %v1438
    %1828 = vmatpush1.msra.mxu0 %v1437
    %1829 = vmatprep.subr.mxu0 %v1442
    %1830 = vmatpush1.msra.mxu0 %v1441
    %1831 = vmatprep.subr.mxu0 %v1446
    %1832 = vmatpush1.msra.mxu0 %v1445
    %1833 = vmatprep.subr.mxu0 %v1450
    %1834 = vmatpush1.msra.mxu0 %v1449
    %1835 = vmatprep.subr.mxu0 %v1454
    %1836 = vmatpush1.msra.mxu0 %v1453
    %1837 = vmatprep.subr.mxu0 %v1458
    %1838 = vmatpush1.msra.mxu0 %v1457
    %1839 = vmatprep.subr.mxu0 %v1462
    %1840 = vmatpush1.msra.mxu0 %v1461
    %1841 = vmatprep.subr.mxu0 %v1466
    %1842 = vmatpush1.msra.mxu0 %v1465
    %1843 = vmatprep.subr.mxu0 %v1470
    %1844 = vmatpush1.msra.mxu0 %v1469
    %1845 = vmatprep.subr.mxu0 %v1474
    %1846 = vmatpush1.msra.mxu0 %v1473
    %1847 = vmatprep.subr.mxu0 %v1478
    %1848 = vmatpush1.msra.mxu0 %v1477
    %1849 = vmatprep.mubr.f32.mxu0 %v1300
    %1850 = vmatmul.mubr.f32.gmra.mrb[0].mxu0 %v1297
    %v1851 = vpop.f32.mrb[0].mxu0
    %v1852 = vadd.f32 0.0, %v1851
    %v1853 = vpop.f32.mrb[0].mxu0
    %v1854 = vadd.f32 0.0, %v1853
    %1855 = vmatprep.mubr.f32.mxu0 %v1310
    %1856 = vmatmul.mubr.f32.gmra.mrb[0].mxu0 %v1308
    %v1857 = vpop.f32.mrb[0].mxu0
    %v1858 = vadd.f32 0.0, %v1857
    %v1859 = vpop.f32.mrb[0].mxu0
    %v1860 = vadd.f32 0.0, %v1859
    %1861 = vmatprep.mubr.f32.mxu0 %v1320
    %1862 = vmatmul.mubr.f32.gmra.mrb[0].mxu0 %v1317
    %v1863 = vpop.f32.mrb[0].mxu0
    %v1864 = vadd.f32 0.0, %v1863
    %v1865 = vpop.f32.mrb[0].mxu0
    %v1866 = vadd.f32 0.0, %v1865
    %1867 = vmatprep.mubr.f32.mxu0 %v1330
    %1868 = vmatmul.mubr.f32.gmra.mrb[0].mxu0 %v1328
    %v1869 = vpop.f32.mrb[0].mxu0
    %v1870 = vadd.f32 0.0, %v1869
    %v1871 = vpop.f32.mrb[0].mxu0
    %v1872 = vadd.f32 0.0, %v1871
    %1873 = vdwg.mxu0
    %1874 = vmatprep.subr.mxu0 %v1482
    %1875 = vmatpush1.msra.mxu0 %v1481
    %1876 = vmatprep.subr.mxu0 %v1486
    %1877 = vmatpush1.msra.mxu0 %v1485
    %1878 = vmatprep.subr.mxu0 %v1490
    %1879 = vmatpush1.msra.mxu0 %v1489
    %1880 = vmatprep.subr.mxu0 %v1494
    %1881 = vmatpush1.msra.mxu0 %v1493
    %1882 = vmatprep.subr.mxu0 %v1498
    %1883 = vmatpush1.msra.mxu0 %v1497
    %1884 = vmatprep.subr.mxu0 %v1502
    %1885 = vmatpush1.msra.mxu0 %v1501
    %1886 = vmatprep.subr.mxu0 %v1506
    %1887 = vmatpush1.msra.mxu0 %v1505
    %1888 = vmatprep.subr.mxu0 %v1510
    %1889 = vmatpush1.msra.mxu0 %v1509
    %1890 = vmatprep.subr.mxu0 %v1514
    %1891 = vmatpush1.msra.mxu0 %v1513
    %1892 = vmatprep.subr.mxu0 %v1518
    %1893 = vmatpush1.msra.mxu0 %v1517
    %1894 = vmatprep.subr.mxu0 %v1522
    %1895 = vmatpush1.msra.mxu0 %v1521
    %1896 = vmatprep.subr.mxu0 %v1526
    %1897 = vmatpush1.msra.mxu0 %v1525
    %1898 = vmatprep.subr.mxu0 %v1530
    %1899 = vmatpush1.msra.mxu0 %v1529
    %1900 = vmatprep.subr.mxu0 %v1534
    %1901 = vmatpush1.msra.mxu0 %v1533
    %1902 = vmatprep.subr.mxu0 %v1538
    %1903 = vmatpush1.msra.mxu0 %v1537
    %1904 = vmatprep.subr.mxu0 %v1542
    %1905 = vmatpush1.msra.mxu0 %v1541
    %1906 = vmatprep.subr.mxu0 %v1546
    %1907 = vmatpush1.msra.mxu0 %v1545
    %1908 = vmatprep.subr.mxu0 %v1550
    %1909 = vmatpush1.msra.mxu0 %v1549
    %1910 = vmatprep.subr.mxu0 %v1554
    %1911 = vmatpush1.msra.mxu0 %v1553
    %1912 = vmatprep.subr.mxu0 %v1558
    %1913 = vmatpush1.msra.mxu0 %v1557
    %1914 = vmatprep.subr.mxu0 %v1562
    %1915 = vmatpush1.msra.mxu0 %v1561
    %1916 = vmatprep.subr.mxu0 %v1566
    %1917 = vmatpush1.msra.mxu0 %v1565
    %1918 = vmatprep.subr.mxu0 %v1570
    %1919 = vmatpush1.msra.mxu0 %v1569
    %1920 = vmatprep.subr.mxu0 %v1574
    %1921 = vmatpush1.msra.mxu0 %v1573
    %1922 = vmatprep.subr.mxu0 %v1578
    %1923 = vmatpush1.msra.mxu0 %v1577
    %1924 = vmatprep.subr.mxu0 %v1582
    %1925 = vmatpush1.msra.mxu0 %v1581
    %1926 = vmatprep.subr.mxu0 %v1586
    %1927 = vmatpush1.msra.mxu0 %v1585
    %1928 = vmatprep.subr.mxu0 %v1590
    %1929 = vmatpush1.msra.mxu0 %v1589
    %1930 = vmatprep.subr.mxu0 %v1594
    %1931 = vmatpush1.msra.mxu0 %v1593
    %1932 = vmatprep.subr.mxu0 %v1598
    %1933 = vmatpush1.msra.mxu0 %v1597
    %1934 = vmatprep.subr.mxu0 %v1602
    %1935 = vmatpush1.msra.mxu0 %v1601
    %1936 = vmatprep.subr.mxu0 %v1606
    %1937 = vmatpush1.msra.mxu0 %v1605
    %1938 = vmatprep.mubr.f32.mxu0 %v1306
    %1939 = vmatmul.mubr.f32.gmra.mrb[0].mxu0 %v1303
    %v1940 = vpop.f32.mrb[0].mxu0
    %v1941 = vadd.f32 %v1852, %v1940
    %v1942 = vpop.f32.mrb[0].mxu0
    %v1943 = vadd.f32 %v1854, %v1942
    %1944 = vmatprep.mubr.f32.mxu0 %v1314
    %1945 = vmatmul.mubr.f32.gmra.mrb[0].mxu0 %v1312
    %v1946 = vpop.f32.mrb[0].mxu0
    %v1947 = vadd.f32 %v1858, %v1946
    %v1948 = vpop.f32.mrb[0].mxu0
    %v1949 = vadd.f32 %v1860, %v1948
    %1950 = vmatprep.mubr.f32.mxu0 %v1326
    %1951 = vmatmul.mubr.f32.gmra.mrb[0].mxu0 %v1323
    %v1952 = vpop.f32.mrb[0].mxu0
    %v1953 = vadd.f32 %v1864, %v1952
    %v1954 = vpop.f32.mrb[0].mxu0
    %v1955 = vadd.f32 %v1866, %v1954
    %1956 = vmatprep.mubr.f32.mxu0 %v1334
    %1957 = vmatmul.mubr.f32.gmra.mrb[0].mxu0 %v1332
    %v1958 = vpop.f32.mrb[0].mxu0
    %v1959 = vadd.f32 %v1870, %v1958
    %v1960 = vpop.f32.mrb[0].mxu0
    %v1961 = vadd.f32 %v1872, %v1960
    %1962 = vdwg.mxu0
    %1963 = vmatprep.subr.mxu0 %v999
    %1964 = vmatpush1.msra.mxu0 %v998
    %1965 = vmatprep.subr.mxu0 %v1003
    %1966 = vmatpush1.msra.mxu0 %v1002
    %1967 = vmatprep.subr.mxu0 %v1007
    %1968 = vmatpush1.msra.mxu0 %v1006
    %1969 = vmatprep.subr.mxu0 %v1011
    %1970 = vmatpush1.msra.mxu0 %v1010
    %1971 = vmatprep.subr.mxu0 %v1015
    %1972 = vmatpush1.msra.mxu0 %v1014
    %1973 = vmatprep.subr.mxu0 %v1019
    %1974 = vmatpush1.msra.mxu0 %v1018
    %1975 = vmatprep.subr.mxu0 %v1023
    %1976 = vmatpush1.msra.mxu0 %v1022
    %1977 = vmatprep.subr.mxu0 %v1027
    %1978 = vmatpush1.msra.mxu0 %v1026
    %1979 = vmatprep.subr.mxu0 %v1031
    %1980 = vmatpush1.msra.mxu0 %v1030
    %1981 = vmatprep.subr.mxu0 %v1035
    %1982 = vmatpush1.msra.mxu0 %v1034
    %1983 = vmatprep.subr.mxu0 %v1039
    %1984 = vmatpush1.msra.mxu0 %v1038
    %1985 = vmatprep.subr.mxu0 %v1043
    %1986 = vmatpush1.msra.mxu0 %v1042
    %1987 = vmatprep.subr.mxu0 %v1047
    %1988 = vmatpush1.msra.mxu0 %v1046
    %1989 = vmatprep.subr.mxu0 %v1051
    %1990 = vmatpush1.msra.mxu0 %v1050
    %1991 = vmatprep.subr.mxu0 %v1055
    %1992 = vmatpush1.msra.mxu0 %v1054
    %1993 = vmatprep.subr.mxu0 %v1059
    %1994 = vmatpush1.msra.mxu0 %v1058
    %1995 = vmatprep.subr.mxu0 %v1063
    %1996 = vmatpush1.msra.mxu0 %v1062
    %1997 = vmatprep.subr.mxu0 %v1067
    %1998 = vmatpush1.msra.mxu0 %v1066
    %1999 = vmatprep.subr.mxu0 %v1071
    %2000 = vmatpush1.msra.mxu0 %v1070
    %2001 = vmatprep.subr.mxu0 %v1075
    %2002 = vmatpush1.msra.mxu0 %v1074
    %2003 = vmatprep.subr.mxu0 %v1079
    %2004 = vmatpush1.msra.mxu0 %v1078
    %2005 = vmatprep.subr.mxu0 %v1083
    %2006 = vmatpush1.msra.mxu0 %v1082
    %2007 = vmatprep.subr.mxu0 %v1087
    %2008 = vmatpush1.msra.mxu0 %v1086
    %2009 = vmatprep.subr.mxu0 %v1091
    %2010 = vmatpush1.msra.mxu0 %v1090
    %2011 = vmatprep.subr.mxu0 %v1095
    %2012 = vmatpush1.msra.mxu0 %v1094
    %2013 = vmatprep.subr.mxu0 %v1099
    %2014 = vmatpush1.msra.mxu0 %v1098
    %2015 = vmatprep.subr.mxu0 %v1103
    %2016 = vmatpush1.msra.mxu0 %v1102
    %2017 = vmatprep.subr.mxu0 %v1107
    %2018 = vmatpush1.msra.mxu0 %v1106
    %2019 = vmatprep.subr.mxu0 %v1111
    %2020 = vmatpush1.msra.mxu0 %v1110
    %2021 = vmatprep.subr.mxu0 %v1115
    %2022 = vmatpush1.msra.mxu0 %v1114
    %2023 = vmatprep.subr.mxu0 %v1119
    %2024 = vmatpush1.msra.mxu0 %v1118
    %2025 = vmatprep.subr.mxu0 %v1123
    %2026 = vmatpush1.msra.mxu0 %v1122
    %2027 = vmatprep.mubr.f32.mxu0 %v983
    %2028 = vmatmul.mubr.f32.gmra.mrb[0].mxu0 %v982
    %v2029 = vpop.f32.mrb[0].mxu0
    %v2030 = vadd.f32 %v1763, %v2029
    %v2031 = vpop.f32.mrb[0].mxu0
    %v2032 = vadd.f32 %v1765, %v2031
    %2033 = vmatprep.mubr.f32.mxu0 %v987
    %2034 = vmatmul.mubr.f32.gmra.mrb[0].mxu0 %v986
    %v2035 = vpop.f32.mrb[0].mxu0
    %v2036 = vadd.f32 %v1769, %v2035
    %v2037 = vpop.f32.mrb[0].mxu0
    %v2038 = vadd.f32 %v1771, %v2037
    %2039 = vmatprep.mubr.f32.mxu0 %v991
    %2040 = vmatmul.mubr.f32.gmra.mrb[0].mxu0 %v990
    %v2041 = vpop.f32.mrb[0].mxu0
    %v2042 = vadd.f32 %v1775, %v2041
    %v2043 = vpop.f32.mrb[0].mxu0
    %v2044 = vadd.f32 %v1777, %v2043
    %2045 = vmatprep.mubr.f32.mxu0 %v995
    %2046 = vmatmul.mubr.f32.gmra.mrb[0].mxu0 %v994
    %v2047 = vpop.f32.mrb[0].mxu0
    %v2048 = vadd.f32 %v1781, %v2047
    %v2049 = vpop.f32.mrb[0].mxu0
    %v2050 = vadd.f32 %v1783, %v2049
    %2051 = vdwg.mxu0
    %2052 = vmatprep.subr.mxu0 %v1127
    %2053 = vmatpush1.msra.mxu0 %v1126
    %2054 = vmatprep.subr.mxu0 %v1131
    %2055 = vmatpush1.msra.mxu0 %v1130
    %2056 = vmatprep.subr.mxu0 %v1135
    %2057 = vmatpush1.msra.mxu0 %v1134
    %2058 = vmatprep.subr.mxu0 %v1139
    %2059 = vmatpush1.msra.mxu0 %v1138
    %2060 = vmatprep.subr.mxu0 %v1143
    %2061 = vmatpush1.msra.mxu0 %v1142
    %2062 = vmatprep.subr.mxu0 %v1147
    %2063 = vmatpush1.msra.mxu0 %v1146
    %2064 = vmatprep.subr.mxu0 %v1151
    %2065 = vmatpush1.msra.mxu0 %v1150
    %2066 = vmatprep.subr.mxu0 %v1155
    %2067 = vmatpush1.msra.mxu0 %v1154
    %2068 = vmatprep.subr.mxu0 %v1159
    %2069 = vmatpush1.msra.mxu0 %v1158
    %2070 = vmatprep.subr.mxu0 %v1163
    %2071 = vmatpush1.msra.mxu0 %v1162
    %2072 = vmatprep.subr.mxu0 %v1167
    %2073 = vmatpush1.msra.mxu0 %v1166
    %2074 = vmatprep.subr.mxu0 %v1171
    %2075 = vmatpush1.msra.mxu0 %v1170
    %2076 = vmatprep.subr.mxu0 %v1175
    %2077 = vmatpush1.msra.mxu0 %v1174
    %2078 = vmatprep.subr.mxu0 %v1179
    %2079 = vmatpush1.msra.mxu0 %v1178
    %2080 = vmatprep.subr.mxu0 %v1183
    %2081 = vmatpush1.msra.mxu0 %v1182
    %2082 = vmatprep.subr.mxu0 %v1187
    %2083 = vmatpush1.msra.mxu0 %v1186
    %2084 = vmatprep.subr.mxu0 %v1191
    %2085 = vmatpush1.msra.mxu0 %v1190
    %2086 = vmatprep.subr.mxu0 %v1195
    %2087 = vmatpush1.msra.mxu0 %v1194
    %2088 = vmatprep.subr.mxu0 %v1199
    %2089 = vmatpush1.msra.mxu0 %v1198
    %2090 = vmatprep.subr.mxu0 %v1203
    %2091 = vmatpush1.msra.mxu0 %v1202
    %2092 = vmatprep.subr.mxu0 %v1207
    %2093 = vmatpush1.msra.mxu0 %v1206
    %2094 = vmatprep.subr.mxu0 %v1211
    %2095 = vmatpush1.msra.mxu0 %v1210
    %2096 = vmatprep.subr.mxu0 %v1215
    %2097 = vmatpush1.msra.mxu0 %v1214
    %2098 = vmatprep.subr.mxu0 %v1219
    %2099 = vmatpush1.msra.mxu0 %v1218
    %2100 = vmatprep.subr.mxu0 %v1223
    %2101 = vmatpush1.msra.mxu0 %v1222
    %2102 = vmatprep.subr.mxu0 %v1227
    %2103 = vmatpush1.msra.mxu0 %v1226
    %2104 = vmatprep.subr.mxu0 %v1231
    %2105 = vmatpush1.msra.mxu0 %v1230
    %2106 = vmatprep.subr.mxu0 %v1235
    %2107 = vmatpush1.msra.mxu0 %v1234
    %2108 = vmatprep.subr.mxu0 %v1239
    %2109 = vmatpush1.msra.mxu0 %v1238
    %2110 = vmatprep.subr.mxu0 %v1243
    %2111 = vmatpush1.msra.mxu0 %v1242
    %2112 = vmatprep.subr.mxu0 %v1247
    %2113 = vmatpush1.msra.mxu0 %v1246
    %2114 = vmatprep.subr.mxu0 %v1251
    %2115 = vmatpush1.msra.mxu0 %v1250
    %2116 = vmatprep.mubr.f32.mxu0 %v985
    %2117 = vmatmul.mubr.f32.gmra.mrb[0].mxu0 %v984
    %v2118 = vpop.f32.mrb[0].mxu0
    %v2119 = vadd.f32 %v2030, %v2118
    %v2120 = vpop.f32.mrb[0].mxu0
    %v2121 = vadd.f32 %v2032, %v2120
    %2122 = vmatprep.mubr.f32.mxu0 %v989
    %2123 = vmatmul.mubr.f32.gmra.mrb[0].mxu0 %v988
    %v2124 = vpop.f32.mrb[0].mxu0
    %v2125 = vadd.f32 %v2036, %v2124
    %v2126 = vpop.f32.mrb[0].mxu0
    %v2127 = vadd.f32 %v2038, %v2126
    %2128 = vmatprep.mubr.f32.mxu0 %v993
    %2129 = vmatmul.mubr.f32.gmra.mrb[0].mxu0 %v992
    %v2130 = vpop.f32.mrb[0].mxu0
    %v2131 = vadd.f32 %v2042, %v2130
    %v2132 = vpop.f32.mrb[0].mxu0
    %v2133 = vadd.f32 %v2044, %v2132
    %2134 = vmatprep.mubr.f32.mxu0 %v997
    %2135 = vmatmul.mubr.f32.gmra.mrb[0].mxu0 %v996
    %v2136 = vpop.f32.mrb[0].mxu0
    %v2137 = vadd.f32 %v2048, %v2136
    %v2138 = vpop.f32.mrb[0].mxu0
    %v2139 = vadd.f32 %v2050, %v2138
    %2140 = vdwg.mxu0
    %2141 = vmatprep.subr.mxu0 %v1001
    %2142 = vmatpush1.msra.mxu0 %v1000
    %2143 = vmatprep.subr.mxu0 %v1005
    %2144 = vmatpush1.msra.mxu0 %v1004
    %2145 = vmatprep.subr.mxu0 %v1009
    %2146 = vmatpush1.msra.mxu0 %v1008
    %2147 = vmatprep.subr.mxu0 %v1013
    %2148 = vmatpush1.msra.mxu0 %v1012
    %2149 = vmatprep.subr.mxu0 %v1017
    %2150 = vmatpush1.msra.mxu0 %v1016
    %2151 = vmatprep.subr.mxu0 %v1021
    %2152 = vmatpush1.msra.mxu0 %v1020
    %2153 = vmatprep.subr.mxu0 %v1025
    %2154 = vmatpush1.msra.mxu0 %v1024
    %2155 = vmatprep.subr.mxu0 %v1029
    %2156 = vmatpush1.msra.mxu0 %v1028
    %2157 = vmatprep.subr.mxu0 %v1033
    %2158 = vmatpush1.msra.mxu0 %v1032
    %2159 = vmatprep.subr.mxu0 %v1037
    %2160 = vmatpush1.msra.mxu0 %v1036
    %2161 = vmatprep.subr.mxu0 %v1041
    %2162 = vmatpush1.msra.mxu0 %v1040
    %2163 = vmatprep.subr.mxu0 %v1045
    %2164 = vmatpush1.msra.mxu0 %v1044
    %2165 = vmatprep.subr.mxu0 %v1049
    %2166 = vmatpush1.msra.mxu0 %v1048
    %2167 = vmatprep.subr.mxu0 %v1053
    %2168 = vmatpush1.msra.mxu0 %v1052
    %2169 = vmatprep.subr.mxu0 %v1057
    %2170 = vmatpush1.msra.mxu0 %v1056
    %2171 = vmatprep.subr.mxu0 %v1061
    %2172 = vmatpush1.msra.mxu0 %v1060
    %2173 = vmatprep.subr.mxu0 %v1065
    %2174 = vmatpush1.msra.mxu0 %v1064
    %2175 = vmatprep.subr.mxu0 %v1069
    %2176 = vmatpush1.msra.mxu0 %v1068
    %2177 = vmatprep.subr.mxu0 %v1073
    %2178 = vmatpush1.msra.mxu0 %v1072
    %2179 = vmatprep.subr.mxu0 %v1077
    %2180 = vmatpush1.msra.mxu0 %v1076
    %2181 = vmatprep.subr.mxu0 %v1081
    %2182 = vmatpush1.msra.mxu0 %v1080
    %2183 = vmatprep.subr.mxu0 %v1085
    %2184 = vmatpush1.msra.mxu0 %v1084
    %2185 = vmatprep.subr.mxu0 %v1089
    %2186 = vmatpush1.msra.mxu0 %v1088
    %2187 = vmatprep.subr.mxu0 %v1093
    %2188 = vmatpush1.msra.mxu0 %v1092
    %2189 = vmatprep.subr.mxu0 %v1097
    %2190 = vmatpush1.msra.mxu0 %v1096
    %2191 = vmatprep.subr.mxu0 %v1101
    %2192 = vmatpush1.msra.mxu0 %v1100
    %2193 = vmatprep.subr.mxu0 %v1105
    %2194 = vmatpush1.msra.mxu0 %v1104
    %2195 = vmatprep.subr.mxu0 %v1109
    %2196 = vmatpush1.msra.mxu0 %v1108
    %2197 = vmatprep.subr.mxu0 %v1113
    %2198 = vmatpush1.msra.mxu0 %v1112
    %2199 = vmatprep.subr.mxu0 %v1117
    %2200 = vmatpush1.msra.mxu0 %v1116
    %2201 = vmatprep.subr.mxu0 %v1121
    %2202 = vmatpush1.msra.mxu0 %v1120
    %2203 = vmatprep.subr.mxu0 %v1125
    %2204 = vmatpush1.msra.mxu0 %v1124
    %2205 = vmatprep.mubr.f32.mxu0 %v983
    %2206 = vmatmul.mubr.f32.gmra.mrb[0].mxu0 %v982
    %v2207 = vpop.f32.mrb[0].mxu0
    %v2208 = vadd.f32 %v1941, %v2207
    %v2209 = vpop.f32.mrb[0].mxu0
    %v2210 = vadd.f32 %v1943, %v2209
    %2211 = vmatprep.mubr.f32.mxu0 %v987
    %2212 = vmatmul.mubr.f32.gmra.mrb[0].mxu0 %v986
    %v2213 = vpop.f32.mrb[0].mxu0
    %v2214 = vadd.f32 %v1947, %v2213
    %v2215 = vpop.f32.mrb[0].mxu0
    %v2216 = vadd.f32 %v1949, %v2215
    %2217 = vmatprep.mubr.f32.mxu0 %v991
    %2218 = vmatmul.mubr.f32.gmra.mrb[0].mxu0 %v990
    %v2219 = vpop.f32.mrb[0].mxu0
    %v2220 = vadd.f32 %v1953, %v2219
    %v2221 = vpop.f32.mrb[0].mxu0
    %v2222 = vadd.f32 %v1955, %v2221
    %2223 = vmatprep.mubr.f32.mxu0 %v995
    %2224 = vmatmul.mubr.f32.gmra.mrb[0].mxu0 %v994
    %v2225 = vpop.f32.mrb[0].mxu0
    %v2226 = vadd.f32 %v1959, %v2225
    %v2227 = vpop.f32.mrb[0].mxu0
    %v2228 = vadd.f32 %v1961, %v2227
    %2229 = vdwg.mxu0
    %2230 = vmatprep.subr.mxu0 %v1129
    %2231 = vmatpush1.msra.mxu0 %v1128
    %2232 = vmatprep.subr.mxu0 %v1133
    %2233 = vmatpush1.msra.mxu0 %v1132
    %2234 = vmatprep.subr.mxu0 %v1137
    %2235 = vmatpush1.msra.mxu0 %v1136
    %2236 = vmatprep.subr.mxu0 %v1141
    %2237 = vmatpush1.msra.mxu0 %v1140
    %2238 = vmatprep.subr.mxu0 %v1145
    %2239 = vmatpush1.msra.mxu0 %v1144
    %2240 = vmatprep.subr.mxu0 %v1149
    %2241 = vmatpush1.msra.mxu0 %v1148
    %2242 = vmatprep.subr.mxu0 %v1153
    %2243 = vmatpush1.msra.mxu0 %v1152
    %2244 = vmatprep.subr.mxu0 %v1157
    %2245 = vmatpush1.msra.mxu0 %v1156
    %2246 = vmatprep.subr.mxu0 %v1161
    %2247 = vmatpush1.msra.mxu0 %v1160
    %2248 = vmatprep.subr.mxu0 %v1165
    %2249 = vmatpush1.msra.mxu0 %v1164
    %2250 = vmatprep.subr.mxu0 %v1169
    %2251 = vmatpush1.msra.mxu0 %v1168
    %2252 = vmatprep.subr.mxu0 %v1173
    %2253 = vmatpush1.msra.mxu0 %v1172
    %2254 = vmatprep.subr.mxu0 %v1177
    %2255 = vmatpush1.msra.mxu0 %v1176
    %2256 = vmatprep.subr.mxu0 %v1181
    %2257 = vmatpush1.msra.mxu0 %v1180
    %2258 = vmatprep.subr.mxu0 %v1185
    %2259 = vmatpush1.msra.mxu0 %v1184
    %2260 = vmatprep.subr.mxu0 %v1189
    %2261 = vmatpush1.msra.mxu0 %v1188
    %2262 = vmatprep.subr.mxu0 %v1193
    %2263 = vmatpush1.msra.mxu0 %v1192
    %2264 = vmatprep.subr.mxu0 %v1197
    %2265 = vmatpush1.msra.mxu0 %v1196
    %2266 = vmatprep.subr.mxu0 %v1201
    %2267 = vmatpush1.msra.mxu0 %v1200
    %2268 = vmatprep.subr.mxu0 %v1205
    %2269 = vmatpush1.msra.mxu0 %v1204
    %2270 = vmatprep.subr.mxu0 %v1209
    %2271 = vmatpush1.msra.mxu0 %v1208
    %2272 = vmatprep.subr.mxu0 %v1213
    %2273 = vmatpush1.msra.mxu0 %v1212
    %2274 = vmatprep.subr.mxu0 %v1217
    %2275 = vmatpush1.msra.mxu0 %v1216
    %2276 = vmatprep.subr.mxu0 %v1221
    %2277 = vmatpush1.msra.mxu0 %v1220
    %2278 = vmatprep.subr.mxu0 %v1225
    %2279 = vmatpush1.msra.mxu0 %v1224
    %2280 = vmatprep.subr.mxu0 %v1229
    %2281 = vmatpush1.msra.mxu0 %v1228
    %2282 = vmatprep.subr.mxu0 %v1233
    %2283 = vmatpush1.msra.mxu0 %v1232
    %2284 = vmatprep.subr.mxu0 %v1237
    %2285 = vmatpush1.msra.mxu0 %v1236
    %2286 = vmatprep.subr.mxu0 %v1241
    %2287 = vmatpush1.msra.mxu0 %v1240
    %2288 = vmatprep.subr.mxu0 %v1245
    %2289 = vmatpush1.msra.mxu0 %v1244
    %2290 = vmatprep.subr.mxu0 %v1249
    %2291 = vmatpush1.msra.mxu0 %v1248
    %2292 = vmatprep.subr.mxu0 %v1253
    %2293 = vmatpush1.msra.mxu0 %v1252
    %2294 = vmatprep.mubr.f32.mxu0 %v985
    %2295 = vmatmul.mubr.f32.gmra.mrb[0].mxu0 %v984
    %v2296 = vpop.f32.mrb[0].mxu0
    %v2297 = vadd.f32 %v2208, %v2296
    %v2298 = vpop.f32.mrb[0].mxu0
    %v2299 = vadd.f32 %v2210, %v2298
    %2300 = vmatprep.mubr.f32.mxu0 %v989
    %2301 = vmatmul.mubr.f32.gmra.mrb[0].mxu0 %v988
    %v2302 = vpop.f32.mrb[0].mxu0
    %v2303 = vadd.f32 %v2214, %v2302
    %v2304 = vpop.f32.mrb[0].mxu0
    %v2305 = vadd.f32 %v2216, %v2304
    %2306 = vmatprep.mubr.f32.mxu0 %v993
    %2307 = vmatmul.mubr.f32.gmra.mrb[0].mxu0 %v992
    %v2308 = vpop.f32.mrb[0].mxu0
    %v2309 = vadd.f32 %v2220, %v2308
    %v2310 = vpop.f32.mrb[0].mxu0
    %v2311 = vadd.f32 %v2222, %v2310
    %2312 = vmatprep.mubr.f32.mxu0 %v997
    %2313 = vmatmul.mubr.f32.gmra.mrb[0].mxu0 %v996
    %v2314 = vpop.f32.mrb[0].mxu0
    %v2315 = vadd.f32 %v2226, %v2314
    %v2316 = vpop.f32.mrb[0].mxu0
    %v2317 = vadd.f32 %v2228, %v2316
    %2318 = vdwg.mxu0
    %v2319 = vld [vmem:[#allocation3] sm:$0xfc]
    %v2320 = vld [vmem:[#allocation3 + $0x8] sm:$0xfc]
    %v2321 = vld [vmem:[#allocation3 + $0x10] sm:$0xfc]
    %v2322 = vld [vmem:[#allocation3 + $0x18] sm:$0xfc]
    %v2323 = vld [vmem:[#allocation3 + $0x40] sm:$0x3]
    %v2324 = vld [vmem:[#allocation3 + $0x48] sm:$0x3]
    %v2325 = vld [vmem:[#allocation3 + $0x50] sm:$0x3]
    %v2326 = vld [vmem:[#allocation3 + $0x58] sm:$0x3]
    %v2327 = vld [vmem:[#allocation3 + $0x60] sm:$0xfc]
    %v2328 = vld [vmem:[#allocation3 + $0x68] sm:$0xfc]
    %v2329 = vld [vmem:[#allocation3 + $0x70] sm:$0xfc]
    %v2330 = vld [vmem:[#allocation3 + $0x78] sm:$0xfc]
    %v2331 = vld [vmem:[#allocation3 + $0xa0] sm:$0x3]
    %v2332 = vld [vmem:[#allocation3 + $0xa8] sm:$0x3]
    %v2333 = vld [vmem:[#allocation3 + $0xb0] sm:$0x3]
    %v2334 = vld [vmem:[#allocation3 + $0xb8] sm:$0x3]
    %vm2351 = vcmask 1045504
    %v2352 = vrot.slane %v2319, 2
    %v2353 = vrot.slane %v986, 2
    %v2354 = vsel %vm2351, %v2352, %v2353
    %v2355 = vrot.slane %v2320, 2
    %v2356 = vrot.slane %v987, 2
    %v2357 = vsel %vm2351, %v2355, %v2356
    %v2358 = vrot.slane %v2321, 2
    %v2359 = vrot.slane %v988, 2
    %v2360 = vsel %vm2351, %v2358, %v2359
    %v2361 = vrot.slane %v2322, 2
    %v2362 = vrot.slane %v989, 2
    %v2363 = vsel %vm2351, %v2361, %v2362
    %v2364 = vrot.slane %v2323, 2
    %v2365 = vsel %vm2351, %v2353, %v2364
    %v2366 = vrot.slane %v2324, 2
    %v2367 = vsel %vm2351, %v2356, %v2366
    %v2368 = vrot.slane %v2325, 2
    %v2369 = vsel %vm2351, %v2359, %v2368
    %v2370 = vrot.slane %v2326, 2
    %v2371 = vsel %vm2351, %v2362, %v2370
    %v2372 = vrot.slane %v2327, 2
    %v2373 = vrot.slane %v994, 2
    %v2374 = vsel %vm2351, %v2372, %v2373
    %v2375 = vrot.slane %v2328, 2
    %v2376 = vrot.slane %v995, 2
    %v2377 = vsel %vm2351, %v2375, %v2376
    %v2378 = vrot.slane %v2329, 2
    %v2379 = vrot.slane %v996, 2
    %v2380 = vsel %vm2351, %v2378, %v2379
    %v2381 = vrot.slane %v2330, 2
    %v2382 = vrot.slane %v997, 2
    %v2383 = vsel %vm2351, %v2381, %v2382
    %v2384 = vrot.slane %v2331, 2
    %v2385 = vsel %vm2351, %v2373, %v2384
    %v2386 = vrot.slane %v2332, 2
    %v2387 = vsel %vm2351, %v2376, %v2386
    %v2388 = vrot.slane %v2333, 2
    %v2389 = vsel %vm2351, %v2379, %v2388
    %v2390 = vrot.slane %v2334, 2
    %v2391 = vsel %vm2351, %v2382, %v2390
    %v2408 = vld [vmem:[#allocation10 + $0x1000] sm:$0xff]
    %v2409 = vld [vmem:[#allocation10 + $0x1008] sm:$0xff]
    %v2410 = vld [vmem:[#allocation10 + $0x1010] sm:$0xff]
    %v2411 = vld [vmem:[#allocation10 + $0x1018] sm:$0xff]
    %v2412 = vld [vmem:[#allocation10 + $0x1020] sm:$0xff]
    %v2413 = vld [vmem:[#allocation10 + $0x1028] sm:$0xff]
    %v2414 = vld [vmem:[#allocation10 + $0x1030] sm:$0xff]
    %v2415 = vld [vmem:[#allocation10 + $0x1038] sm:$0xff]
    %v2416 = vld [vmem:[#allocation10 + $0x1040] sm:$0xff]
    %v2417 = vld [vmem:[#allocation10 + $0x1048] sm:$0xff]
    %v2418 = vld [vmem:[#allocation10 + $0x1050] sm:$0xff]
    %v2419 = vld [vmem:[#allocation10 + $0x1058] sm:$0xff]
    %v2420 = vld [vmem:[#allocation10 + $0x1060] sm:$0xff]
    %v2421 = vld [vmem:[#allocation10 + $0x1068] sm:$0xff]
    %v2422 = vld [vmem:[#allocation10 + $0x1070] sm:$0xff]
    %v2423 = vld [vmem:[#allocation10 + $0x1078] sm:$0xff]
    %v2424 = vld [vmem:[#allocation10 + $0x1080] sm:$0xff]
    %v2425 = vld [vmem:[#allocation10 + $0x1088] sm:$0xff]
    %v2426 = vld [vmem:[#allocation10 + $0x1090] sm:$0xff]
    %v2427 = vld [vmem:[#allocation10 + $0x1098] sm:$0xff]
    %v2428 = vld [vmem:[#allocation10 + $0x10a0] sm:$0xff]
    %v2429 = vld [vmem:[#allocation10 + $0x10a8] sm:$0xff]
    %v2430 = vld [vmem:[#allocation10 + $0x10b0] sm:$0xff]
    %v2431 = vld [vmem:[#allocation10 + $0x10b8] sm:$0xff]
    %v2432 = vld [vmem:[#allocation10 + $0x10c0] sm:$0xff]
    %v2433 = vld [vmem:[#allocation10 + $0x10c8] sm:$0xff]
    %v2434 = vld [vmem:[#allocation10 + $0x10d0] sm:$0xff]
    %v2435 = vld [vmem:[#allocation10 + $0x10d8] sm:$0xff]
    %v2436 = vld [vmem:[#allocation10 + $0x10e0] sm:$0xff]
    %v2437 = vld [vmem:[#allocation10 + $0x10e8] sm:$0xff]
    %v2438 = vld [vmem:[#allocation10 + $0x10f0] sm:$0xff]
    %v2439 = vld [vmem:[#allocation10 + $0x10f8] sm:$0xff]
    %v2440 = vld [vmem:[#allocation10 + $0x1100] sm:$0xff]
    %v2441 = vld [vmem:[#allocation10 + $0x1108] sm:$0xff]
    %v2442 = vld [vmem:[#allocation10 + $0x1110] sm:$0xff]
    %v2443 = vld [vmem:[#allocation10 + $0x1118] sm:$0xff]
    %v2444 = vld [vmem:[#allocation10 + $0x1120] sm:$0xff]
    %v2445 = vld [vmem:[#allocation10 + $0x1128] sm:$0xff]
    %v2446 = vld [vmem:[#allocation10 + $0x1130] sm:$0xff]
    %v2447 = vld [vmem:[#allocation10 + $0x1138] sm:$0xff]
    %v2448 = vld [vmem:[#allocation10 + $0x1140] sm:$0xff]
    %v2449 = vld [vmem:[#allocation10 + $0x1148] sm:$0xff]
    %v2450 = vld [vmem:[#allocation10 + $0x1150] sm:$0xff]
    %v2451 = vld [vmem:[#allocation10 + $0x1158] sm:$0xff]
    %v2452 = vld [vmem:[#allocation10 + $0x1160] sm:$0xff]
    %v2453 = vld [vmem:[#allocation10 + $0x1168] sm:$0xff]
    %v2454 = vld [vmem:[#allocation10 + $0x1170] sm:$0xff]
    %v2455 = vld [vmem:[#allocation10 + $0x1178] sm:$0xff]
    %v2456 = vld [vmem:[#allocation10 + $0x1180] sm:$0xff]
    %v2457 = vld [vmem:[#allocation10 + $0x1188] sm:$0xff]
    %v2458 = vld [vmem:[#allocation10 + $0x1190] sm:$0xff]
    %v2459 = vld [vmem:[#allocation10 + $0x1198] sm:$0xff]
    %v2460 = vld [vmem:[#allocation10 + $0x11a0] sm:$0xff]
    %v2461 = vld [vmem:[#allocation10 + $0x11a8] sm:$0xff]
    %v2462 = vld [vmem:[#allocation10 + $0x11b0] sm:$0xff]
    %v2463 = vld [vmem:[#allocation10 + $0x11b8] sm:$0xff]
    %v2464 = vld [vmem:[#allocation10 + $0x11c0] sm:$0xff]
    %v2465 = vld [vmem:[#allocation10 + $0x11c8] sm:$0xff]
    %v2466 = vld [vmem:[#allocation10 + $0x11d0] sm:$0xff]
    %v2467 = vld [vmem:[#allocation10 + $0x11d8] sm:$0xff]
    %v2468 = vld [vmem:[#allocation10 + $0x11e0] sm:$0xff]
    %v2469 = vld [vmem:[#allocation10 + $0x11e8] sm:$0xff]
    %v2470 = vld [vmem:[#allocation10 + $0x11f0] sm:$0xff]
    %v2471 = vld [vmem:[#allocation10 + $0x11f8] sm:$0xff]
    %v2472 = vld [vmem:[#allocation10 + $0x1200] sm:$0xff]
    %v2473 = vld [vmem:[#allocation10 + $0x1208] sm:$0xff]
    %v2474 = vld [vmem:[#allocation10 + $0x1210] sm:$0xff]
    %v2475 = vld [vmem:[#allocation10 + $0x1218] sm:$0xff]
    %v2476 = vld [vmem:[#allocation10 + $0x1220] sm:$0xff]
    %v2477 = vld [vmem:[#allocation10 + $0x1228] sm:$0xff]
    %v2478 = vld [vmem:[#allocation10 + $0x1230] sm:$0xff]
    %v2479 = vld [vmem:[#allocation10 + $0x1238] sm:$0xff]
    %v2480 = vld [vmem:[#allocation10 + $0x1240] sm:$0xff]
    %v2481 = vld [vmem:[#allocation10 + $0x1248] sm:$0xff]
    %v2482 = vld [vmem:[#allocation10 + $0x1250] sm:$0xff]
    %v2483 = vld [vmem:[#allocation10 + $0x1258] sm:$0xff]
    %v2484 = vld [vmem:[#allocation10 + $0x1260] sm:$0xff]
    %v2485 = vld [vmem:[#allocation10 + $0x1268] sm:$0xff]
    %v2486 = vld [vmem:[#allocation10 + $0x1270] sm:$0xff]
    %v2487 = vld [vmem:[#allocation10 + $0x1278] sm:$0xff]
    %v2488 = vld [vmem:[#allocation10 + $0x1280] sm:$0xff]
    %v2489 = vld [vmem:[#allocation10 + $0x1288] sm:$0xff]
    %v2490 = vld [vmem:[#allocation10 + $0x1290] sm:$0xff]
    %v2491 = vld [vmem:[#allocation10 + $0x1298] sm:$0xff]
    %v2492 = vld [vmem:[#allocation10 + $0x12a0] sm:$0xff]
    %v2493 = vld [vmem:[#allocation10 + $0x12a8] sm:$0xff]
    %v2494 = vld [vmem:[#allocation10 + $0x12b0] sm:$0xff]
    %v2495 = vld [vmem:[#allocation10 + $0x12b8] sm:$0xff]
    %v2496 = vld [vmem:[#allocation10 + $0x12c0] sm:$0xff]
    %v2497 = vld [vmem:[#allocation10 + $0x12c8] sm:$0xff]
    %v2498 = vld [vmem:[#allocation10 + $0x12d0] sm:$0xff]
    %v2499 = vld [vmem:[#allocation10 + $0x12d8] sm:$0xff]
    %v2500 = vld [vmem:[#allocation10 + $0x12e0] sm:$0xff]
    %v2501 = vld [vmem:[#allocation10 + $0x12e8] sm:$0xff]
    %v2502 = vld [vmem:[#allocation10 + $0x12f0] sm:$0xff]
    %v2503 = vld [vmem:[#allocation10 + $0x12f8] sm:$0xff]
    %v2504 = vld [vmem:[#allocation10 + $0x1300] sm:$0xff]
    %v2505 = vld [vmem:[#allocation10 + $0x1308] sm:$0xff]
    %v2506 = vld [vmem:[#allocation10 + $0x1310] sm:$0xff]
    %v2507 = vld [vmem:[#allocation10 + $0x1318] sm:$0xff]
    %v2508 = vld [vmem:[#allocation10 + $0x1320] sm:$0xff]
    %v2509 = vld [vmem:[#allocation10 + $0x1328] sm:$0xff]
    %v2510 = vld [vmem:[#allocation10 + $0x1330] sm:$0xff]
    %v2511 = vld [vmem:[#allocation10 + $0x1338] sm:$0xff]
    %v2512 = vld [vmem:[#allocation10 + $0x1340] sm:$0xff]
    %v2513 = vld [vmem:[#allocation10 + $0x1348] sm:$0xff]
    %v2514 = vld [vmem:[#allocation10 + $0x1350] sm:$0xff]
    %v2515 = vld [vmem:[#allocation10 + $0x1358] sm:$0xff]
    %v2516 = vld [vmem:[#allocation10 + $0x1360] sm:$0xff]
    %v2517 = vld [vmem:[#allocation10 + $0x1368] sm:$0xff]
    %v2518 = vld [vmem:[#allocation10 + $0x1370] sm:$0xff]
    %v2519 = vld [vmem:[#allocation10 + $0x1378] sm:$0xff]
    %v2520 = vld [vmem:[#allocation10 + $0x1380] sm:$0xff]
    %v2521 = vld [vmem:[#allocation10 + $0x1388] sm:$0xff]
    %v2522 = vld [vmem:[#allocation10 + $0x1390] sm:$0xff]
    %v2523 = vld [vmem:[#allocation10 + $0x1398] sm:$0xff]
    %v2524 = vld [vmem:[#allocation10 + $0x13a0] sm:$0xff]
    %v2525 = vld [vmem:[#allocation10 + $0x13a8] sm:$0xff]
    %v2526 = vld [vmem:[#allocation10 + $0x13b0] sm:$0xff]
    %v2527 = vld [vmem:[#allocation10 + $0x13b8] sm:$0xff]
    %v2528 = vld [vmem:[#allocation10 + $0x13c0] sm:$0xff]
    %v2529 = vld [vmem:[#allocation10 + $0x13c8] sm:$0xff]
    %v2530 = vld [vmem:[#allocation10 + $0x13d0] sm:$0xff]
    %v2531 = vld [vmem:[#allocation10 + $0x13d8] sm:$0xff]
    %v2532 = vld [vmem:[#allocation10 + $0x13e0] sm:$0xff]
    %v2533 = vld [vmem:[#allocation10 + $0x13e8] sm:$0xff]
    %v2534 = vld [vmem:[#allocation10 + $0x13f0] sm:$0xff]
    %v2535 = vld [vmem:[#allocation10 + $0x13f8] sm:$0xff]
    %v2536 = vld [vmem:[#allocation10 + $0x1400] sm:$0xff]
    %v2537 = vld [vmem:[#allocation10 + $0x1408] sm:$0xff]
    %v2538 = vld [vmem:[#allocation10 + $0x1410] sm:$0xff]
    %v2539 = vld [vmem:[#allocation10 + $0x1418] sm:$0xff]
    %v2540 = vld [vmem:[#allocation10 + $0x1420] sm:$0xff]
    %v2541 = vld [vmem:[#allocation10 + $0x1428] sm:$0xff]
    %v2542 = vld [vmem:[#allocation10 + $0x1430] sm:$0xff]
    %v2543 = vld [vmem:[#allocation10 + $0x1438] sm:$0xff]
    %v2544 = vld [vmem:[#allocation10 + $0x1440] sm:$0xff]
    %v2545 = vld [vmem:[#allocation10 + $0x1448] sm:$0xff]
    %v2546 = vld [vmem:[#allocation10 + $0x1450] sm:$0xff]
    %v2547 = vld [vmem:[#allocation10 + $0x1458] sm:$0xff]
    %v2548 = vld [vmem:[#allocation10 + $0x1460] sm:$0xff]
    %v2549 = vld [vmem:[#allocation10 + $0x1468] sm:$0xff]
    %v2550 = vld [vmem:[#allocation10 + $0x1470] sm:$0xff]
    %v2551 = vld [vmem:[#allocation10 + $0x1478] sm:$0xff]
    %v2552 = vld [vmem:[#allocation10 + $0x1480] sm:$0xff]
    %v2553 = vld [vmem:[#allocation10 + $0x1488] sm:$0xff]
    %v2554 = vld [vmem:[#allocation10 + $0x1490] sm:$0xff]
    %v2555 = vld [vmem:[#allocation10 + $0x1498] sm:$0xff]
    %v2556 = vld [vmem:[#allocation10 + $0x14a0] sm:$0xff]
    %v2557 = vld [vmem:[#allocation10 + $0x14a8] sm:$0xff]
    %v2558 = vld [vmem:[#allocation10 + $0x14b0] sm:$0xff]
    %v2559 = vld [vmem:[#allocation10 + $0x14b8] sm:$0xff]
    %v2560 = vld [vmem:[#allocation10 + $0x14c0] sm:$0xff]
    %v2561 = vld [vmem:[#allocation10 + $0x14c8] sm:$0xff]
    %v2562 = vld [vmem:[#allocation10 + $0x14d0] sm:$0xff]
    %v2563 = vld [vmem:[#allocation10 + $0x14d8] sm:$0xff]
    %v2564 = vld [vmem:[#allocation10 + $0x14e0] sm:$0xff]
    %v2565 = vld [vmem:[#allocation10 + $0x14e8] sm:$0xff]
    %v2566 = vld [vmem:[#allocation10 + $0x14f0] sm:$0xff]
    %v2567 = vld [vmem:[#allocation10 + $0x14f8] sm:$0xff]
    %v2568 = vld [vmem:[#allocation10 + $0x1500] sm:$0xff]
    %v2569 = vld [vmem:[#allocation10 + $0x1508] sm:$0xff]
    %v2570 = vld [vmem:[#allocation10 + $0x1510] sm:$0xff]
    %v2571 = vld [vmem:[#allocation10 + $0x1518] sm:$0xff]
    %v2572 = vld [vmem:[#allocation10 + $0x1520] sm:$0xff]
    %v2573 = vld [vmem:[#allocation10 + $0x1528] sm:$0xff]
    %v2574 = vld [vmem:[#allocation10 + $0x1530] sm:$0xff]
    %v2575 = vld [vmem:[#allocation10 + $0x1538] sm:$0xff]
    %v2576 = vld [vmem:[#allocation10 + $0x1540] sm:$0xff]
    %v2577 = vld [vmem:[#allocation10 + $0x1548] sm:$0xff]
    %v2578 = vld [vmem:[#allocation10 + $0x1550] sm:$0xff]
    %v2579 = vld [vmem:[#allocation10 + $0x1558] sm:$0xff]
    %v2580 = vld [vmem:[#allocation10 + $0x1560] sm:$0xff]
    %v2581 = vld [vmem:[#allocation10 + $0x1568] sm:$0xff]
    %v2582 = vld [vmem:[#allocation10 + $0x1570] sm:$0xff]
    %v2583 = vld [vmem:[#allocation10 + $0x1578] sm:$0xff]
    %v2584 = vld [vmem:[#allocation10 + $0x1580] sm:$0xff]
    %v2585 = vld [vmem:[#allocation10 + $0x1588] sm:$0xff]
    %v2586 = vld [vmem:[#allocation10 + $0x1590] sm:$0xff]
    %v2587 = vld [vmem:[#allocation10 + $0x1598] sm:$0xff]
    %v2588 = vld [vmem:[#allocation10 + $0x15a0] sm:$0xff]
    %v2589 = vld [vmem:[#allocation10 + $0x15a8] sm:$0xff]
    %v2590 = vld [vmem:[#allocation10 + $0x15b0] sm:$0xff]
    %v2591 = vld [vmem:[#allocation10 + $0x15b8] sm:$0xff]
    %v2592 = vld [vmem:[#allocation10 + $0x15c0] sm:$0xff]
    %v2593 = vld [vmem:[#allocation10 + $0x15c8] sm:$0xff]
    %v2594 = vld [vmem:[#allocation10 + $0x15d0] sm:$0xff]
    %v2595 = vld [vmem:[#allocation10 + $0x15d8] sm:$0xff]
    %v2596 = vld [vmem:[#allocation10 + $0x15e0] sm:$0xff]
    %v2597 = vld [vmem:[#allocation10 + $0x15e8] sm:$0xff]
    %v2598 = vld [vmem:[#allocation10 + $0x15f0] sm:$0xff]
    %v2599 = vld [vmem:[#allocation10 + $0x15f8] sm:$0xff]
    %v2600 = vld [vmem:[#allocation10 + $0x1600] sm:$0xff]
    %v2601 = vld [vmem:[#allocation10 + $0x1608] sm:$0xff]
    %v2602 = vld [vmem:[#allocation10 + $0x1610] sm:$0xff]
    %v2603 = vld [vmem:[#allocation10 + $0x1618] sm:$0xff]
    %v2604 = vld [vmem:[#allocation10 + $0x1620] sm:$0xff]
    %v2605 = vld [vmem:[#allocation10 + $0x1628] sm:$0xff]
    %v2606 = vld [vmem:[#allocation10 + $0x1630] sm:$0xff]
    %v2607 = vld [vmem:[#allocation10 + $0x1638] sm:$0xff]
    %v2608 = vld [vmem:[#allocation10 + $0x1640] sm:$0xff]
    %v2609 = vld [vmem:[#allocation10 + $0x1648] sm:$0xff]
    %v2610 = vld [vmem:[#allocation10 + $0x1650] sm:$0xff]
    %v2611 = vld [vmem:[#allocation10 + $0x1658] sm:$0xff]
    %v2612 = vld [vmem:[#allocation10 + $0x1660] sm:$0xff]
    %v2613 = vld [vmem:[#allocation10 + $0x1668] sm:$0xff]
    %v2614 = vld [vmem:[#allocation10 + $0x1670] sm:$0xff]
    %v2615 = vld [vmem:[#allocation10 + $0x1678] sm:$0xff]
    %v2616 = vld [vmem:[#allocation10 + $0x1680] sm:$0xff]
    %v2617 = vld [vmem:[#allocation10 + $0x1688] sm:$0xff]
    %v2618 = vld [vmem:[#allocation10 + $0x1690] sm:$0xff]
    %v2619 = vld [vmem:[#allocation10 + $0x1698] sm:$0xff]
    %v2620 = vld [vmem:[#allocation10 + $0x16a0] sm:$0xff]
    %v2621 = vld [vmem:[#allocation10 + $0x16a8] sm:$0xff]
    %v2622 = vld [vmem:[#allocation10 + $0x16b0] sm:$0xff]
    %v2623 = vld [vmem:[#allocation10 + $0x16b8] sm:$0xff]
    %v2624 = vld [vmem:[#allocation10 + $0x16c0] sm:$0xff]
    %v2625 = vld [vmem:[#allocation10 + $0x16c8] sm:$0xff]
    %v2626 = vld [vmem:[#allocation10 + $0x16d0] sm:$0xff]
    %v2627 = vld [vmem:[#allocation10 + $0x16d8] sm:$0xff]
    %v2628 = vld [vmem:[#allocation10 + $0x16e0] sm:$0xff]
    %v2629 = vld [vmem:[#allocation10 + $0x16e8] sm:$0xff]
    %v2630 = vld [vmem:[#allocation10 + $0x16f0] sm:$0xff]
    %v2631 = vld [vmem:[#allocation10 + $0x16f8] sm:$0xff]
    %v2632 = vld [vmem:[#allocation10 + $0x1700] sm:$0xff]
    %v2633 = vld [vmem:[#allocation10 + $0x1708] sm:$0xff]
    %v2634 = vld [vmem:[#allocation10 + $0x1710] sm:$0xff]
    %v2635 = vld [vmem:[#allocation10 + $0x1718] sm:$0xff]
    %v2636 = vld [vmem:[#allocation10 + $0x1720] sm:$0xff]
    %v2637 = vld [vmem:[#allocation10 + $0x1728] sm:$0xff]
    %v2638 = vld [vmem:[#allocation10 + $0x1730] sm:$0xff]
    %v2639 = vld [vmem:[#allocation10 + $0x1738] sm:$0xff]
    %v2640 = vld [vmem:[#allocation10 + $0x1740] sm:$0xff]
    %v2641 = vld [vmem:[#allocation10 + $0x1748] sm:$0xff]
    %v2642 = vld [vmem:[#allocation10 + $0x1750] sm:$0xff]
    %v2643 = vld [vmem:[#allocation10 + $0x1758] sm:$0xff]
    %v2644 = vld [vmem:[#allocation10 + $0x1760] sm:$0xff]
    %v2645 = vld [vmem:[#allocation10 + $0x1768] sm:$0xff]
    %v2646 = vld [vmem:[#allocation10 + $0x1770] sm:$0xff]
    %v2647 = vld [vmem:[#allocation10 + $0x1778] sm:$0xff]
    %v2648 = vld [vmem:[#allocation10 + $0x1780] sm:$0xff]
    %v2649 = vld [vmem:[#allocation10 + $0x1788] sm:$0xff]
    %v2650 = vld [vmem:[#allocation10 + $0x1790] sm:$0xff]
    %v2651 = vld [vmem:[#allocation10 + $0x1798] sm:$0xff]
    %v2652 = vld [vmem:[#allocation10 + $0x17a0] sm:$0xff]
    %v2653 = vld [vmem:[#allocation10 + $0x17a8] sm:$0xff]
    %v2654 = vld [vmem:[#allocation10 + $0x17b0] sm:$0xff]
    %v2655 = vld [vmem:[#allocation10 + $0x17b8] sm:$0xff]
    %v2656 = vld [vmem:[#allocation10 + $0x17c0] sm:$0xff]
    %v2657 = vld [vmem:[#allocation10 + $0x17c8] sm:$0xff]
    %v2658 = vld [vmem:[#allocation10 + $0x17d0] sm:$0xff]
    %v2659 = vld [vmem:[#allocation10 + $0x17d8] sm:$0xff]
    %v2660 = vld [vmem:[#allocation10 + $0x17e0] sm:$0xff]
    %v2661 = vld [vmem:[#allocation10 + $0x17e8] sm:$0xff]
    %v2662 = vld [vmem:[#allocation10 + $0x17f0] sm:$0xff]
    %v2663 = vld [vmem:[#allocation10 + $0x17f8] sm:$0xff]
    %2664 = vmatprep.subr.mxu0 %v2409
    %2665 = vmatpush1.msra.mxu0 %v2408
    %2666 = vmatprep.subr.mxu0 %v2413
    %2667 = vmatpush1.msra.mxu0 %v2412
    %2668 = vmatprep.subr.mxu0 %v2417
    %2669 = vmatpush1.msra.mxu0 %v2416
    %2670 = vmatprep.subr.mxu0 %v2421
    %2671 = vmatpush1.msra.mxu0 %v2420
    %2672 = vmatprep.subr.mxu0 %v2425
    %2673 = vmatpush1.msra.mxu0 %v2424
    %2674 = vmatprep.subr.mxu0 %v2429
    %2675 = vmatpush1.msra.mxu0 %v2428
    %2676 = vmatprep.subr.mxu0 %v2433
    %2677 = vmatpush1.msra.mxu0 %v2432
    %2678 = vmatprep.subr.mxu0 %v2437
    %2679 = vmatpush1.msra.mxu0 %v2436
    %2680 = vmatprep.subr.mxu0 %v2441
    %2681 = vmatpush1.msra.mxu0 %v2440
    %2682 = vmatprep.subr.mxu0 %v2445
    %2683 = vmatpush1.msra.mxu0 %v2444
    %2684 = vmatprep.subr.mxu0 %v2449
    %2685 = vmatpush1.msra.mxu0 %v2448
    %2686 = vmatprep.subr.mxu0 %v2453
    %2687 = vmatpush1.msra.mxu0 %v2452
    %2688 = vmatprep.subr.mxu0 %v2457
    %2689 = vmatpush1.msra.mxu0 %v2456
    %2690 = vmatprep.subr.mxu0 %v2461
    %2691 = vmatpush1.msra.mxu0 %v2460
    %2692 = vmatprep.subr.mxu0 %v2465
    %2693 = vmatpush1.msra.mxu0 %v2464
    %2694 = vmatprep.subr.mxu0 %v2469
    %2695 = vmatpush1.msra.mxu0 %v2468
    %2696 = vmatprep.subr.mxu0 %v2473
    %2697 = vmatpush1.msra.mxu0 %v2472
    %2698 = vmatprep.subr.mxu0 %v2477
    %2699 = vmatpush1.msra.mxu0 %v2476
    %2700 = vmatprep.subr.mxu0 %v2481
    %2701 = vmatpush1.msra.mxu0 %v2480
    %2702 = vmatprep.subr.mxu0 %v2485
    %2703 = vmatpush1.msra.mxu0 %v2484
    %2704 = vmatprep.subr.mxu0 %v2489
    %2705 = vmatpush1.msra.mxu0 %v2488
    %2706 = vmatprep.subr.mxu0 %v2493
    %2707 = vmatpush1.msra.mxu0 %v2492
    %2708 = vmatprep.subr.mxu0 %v2497
    %2709 = vmatpush1.msra.mxu0 %v2496
    %2710 = vmatprep.subr.mxu0 %v2501
    %2711 = vmatpush1.msra.mxu0 %v2500
    %2712 = vmatprep.subr.mxu0 %v2505
    %2713 = vmatpush1.msra.mxu0 %v2504
    %2714 = vmatprep.subr.mxu0 %v2509
    %2715 = vmatpush1.msra.mxu0 %v2508
    %2716 = vmatprep.subr.mxu0 %v2513
    %2717 = vmatpush1.msra.mxu0 %v2512
    %2718 = vmatprep.subr.mxu0 %v2517
    %2719 = vmatpush1.msra.mxu0 %v2516
    %2720 = vmatprep.subr.mxu0 %v2521
    %2721 = vmatpush1.msra.mxu0 %v2520
    %2722 = vmatprep.subr.mxu0 %v2525
    %2723 = vmatpush1.msra.mxu0 %v2524
    %2724 = vmatprep.subr.mxu0 %v2529
    %2725 = vmatpush1.msra.mxu0 %v2528
    %2726 = vmatprep.subr.mxu0 %v2533
    %2727 = vmatpush1.msra.mxu0 %v2532
    %2728 = vmatprep.mubr.f32.mxu0 %v2357
    %2729 = vmatmul.mubr.f32.gmra.mrb[0].mxu0 %v2354
    %v2730 = vpop.f32.mrb[0].mxu0
    %v2731 = vadd.f32 0.0, %v2730
    %v2732 = vpop.f32.mrb[0].mxu0
    %v2733 = vadd.f32 0.0, %v2732
    %2734 = vmatprep.mubr.f32.mxu0 %v2367
    %2735 = vmatmul.mubr.f32.gmra.mrb[0].mxu0 %v2365
    %v2736 = vpop.f32.mrb[0].mxu0
    %v2737 = vadd.f32 0.0, %v2736
    %v2738 = vpop.f32.mrb[0].mxu0
    %v2739 = vadd.f32 0.0, %v2738
    %2740 = vmatprep.mubr.f32.mxu0 %v2377
    %2741 = vmatmul.mubr.f32.gmra.mrb[0].mxu0 %v2374
    %v2742 = vpop.f32.mrb[0].mxu0
    %v2743 = vadd.f32 0.0, %v2742
    %v2744 = vpop.f32.mrb[0].mxu0
    %v2745 = vadd.f32 0.0, %v2744
    %2746 = vmatprep.mubr.f32.mxu0 %v2387
    %2747 = vmatmul.mubr.f32.gmra.mrb[0].mxu0 %v2385
    %v2748 = vpop.f32.mrb[0].mxu0
    %v2749 = vadd.f32 0.0, %v2748
    %v2750 = vpop.f32.mrb[0].mxu0
    %v2751 = vadd.f32 0.0, %v2750
    %2752 = vdwg.mxu0
    %2753 = vmatprep.subr.mxu0 %v2537
    %2754 = vmatpush1.msra.mxu0 %v2536
    %2755 = vmatprep.subr.mxu0 %v2541
    %2756 = vmatpush1.msra.mxu0 %v2540
    %2757 = vmatprep.subr.mxu0 %v2545
    %2758 = vmatpush1.msra.mxu0 %v2544
    %2759 = vmatprep.subr.mxu0 %v2549
    %2760 = vmatpush1.msra.mxu0 %v2548
    %2761 = vmatprep.subr.mxu0 %v2553
    %2762 = vmatpush1.msra.mxu0 %v2552
    %2763 = vmatprep.subr.mxu0 %v2557
    %2764 = vmatpush1.msra.mxu0 %v2556
    %2765 = vmatprep.subr.mxu0 %v2561
    %2766 = vmatpush1.msra.mxu0 %v2560
    %2767 = vmatprep.subr.mxu0 %v2565
    %2768 = vmatpush1.msra.mxu0 %v2564
    %2769 = vmatprep.subr.mxu0 %v2569
    %2770 = vmatpush1.msra.mxu0 %v2568
    %2771 = vmatprep.subr.mxu0 %v2573
    %2772 = vmatpush1.msra.mxu0 %v2572
    %2773 = vmatprep.subr.mxu0 %v2577
    %2774 = vmatpush1.msra.mxu0 %v2576
    %2775 = vmatprep.subr.mxu0 %v2581
    %2776 = vmatpush1.msra.mxu0 %v2580
    %2777 = vmatprep.subr.mxu0 %v2585
    %2778 = vmatpush1.msra.mxu0 %v2584
    %2779 = vmatprep.subr.mxu0 %v2589
    %2780 = vmatpush1.msra.mxu0 %v2588
    %2781 = vmatprep.subr.mxu0 %v2593
    %2782 = vmatpush1.msra.mxu0 %v2592
    %2783 = vmatprep.subr.mxu0 %v2597
    %2784 = vmatpush1.msra.mxu0 %v2596
    %2785 = vmatprep.subr.mxu0 %v2601
    %2786 = vmatpush1.msra.mxu0 %v2600
    %2787 = vmatprep.subr.mxu0 %v2605
    %2788 = vmatpush1.msra.mxu0 %v2604
    %2789 = vmatprep.subr.mxu0 %v2609
    %2790 = vmatpush1.msra.mxu0 %v2608
    %2791 = vmatprep.subr.mxu0 %v2613
    %2792 = vmatpush1.msra.mxu0 %v2612
    %2793 = vmatprep.subr.mxu0 %v2617
    %2794 = vmatpush1.msra.mxu0 %v2616
    %2795 = vmatprep.subr.mxu0 %v2621
    %2796 = vmatpush1.msra.mxu0 %v2620
    %2797 = vmatprep.subr.mxu0 %v2625
    %2798 = vmatpush1.msra.mxu0 %v2624
    %2799 = vmatprep.subr.mxu0 %v2629
    %2800 = vmatpush1.msra.mxu0 %v2628
    %2801 = vmatprep.subr.mxu0 %v2633
    %2802 = vmatpush1.msra.mxu0 %v2632
    %2803 = vmatprep.subr.mxu0 %v2637
    %2804 = vmatpush1.msra.mxu0 %v2636
    %2805 = vmatprep.subr.mxu0 %v2641
    %2806 = vmatpush1.msra.mxu0 %v2640
    %2807 = vmatprep.subr.mxu0 %v2645
    %2808 = vmatpush1.msra.mxu0 %v2644
    %2809 = vmatprep.subr.mxu0 %v2649
    %2810 = vmatpush1.msra.mxu0 %v2648
    %2811 = vmatprep.subr.mxu0 %v2653
    %2812 = vmatpush1.msra.mxu0 %v2652
    %2813 = vmatprep.subr.mxu0 %v2657
    %2814 = vmatpush1.msra.mxu0 %v2656
    %2815 = vmatprep.subr.mxu0 %v2661
    %2816 = vmatpush1.msra.mxu0 %v2660
    %2817 = vmatprep.mubr.f32.mxu0 %v2363
    %2818 = vmatmul.mubr.f32.gmra.mrb[0].mxu0 %v2360
    %v2819 = vpop.f32.mrb[0].mxu0
    %v2820 = vadd.f32 %v2731, %v2819
    %v2821 = vpop.f32.mrb[0].mxu0
    %v2822 = vadd.f32 %v2733, %v2821
    %2823 = vmatprep.mubr.f32.mxu0 %v2371
    %2824 = vmatmul.mubr.f32.gmra.mrb[0].mxu0 %v2369
    %v2825 = vpop.f32.mrb[0].mxu0
    %v2826 = vadd.f32 %v2737, %v2825
    %v2827 = vpop.f32.mrb[0].mxu0
    %v2828 = vadd.f32 %v2739, %v2827
    %2829 = vmatprep.mubr.f32.mxu0 %v2383
    %2830 = vmatmul.mubr.f32.gmra.mrb[0].mxu0 %v2380
    %v2831 = vpop.f32.mrb[0].mxu0
    %v2832 = vadd.f32 %v2743, %v2831
    %v2833 = vpop.f32.mrb[0].mxu0
    %v2834 = vadd.f32 %v2745, %v2833
    %2835 = vmatprep.mubr.f32.mxu0 %v2391
    %2836 = vmatmul.mubr.f32.gmra.mrb[0].mxu0 %v2389
    %v2837 = vpop.f32.mrb[0].mxu0
    %v2838 = vadd.f32 %v2749, %v2837
    %v2839 = vpop.f32.mrb[0].mxu0
    %v2840 = vadd.f32 %v2751, %v2839
    %2841 = vdwg.mxu0
    %2842 = vmatprep.subr.mxu0 %v2411
    %2843 = vmatpush1.msra.mxu0 %v2410
    %2844 = vmatprep.subr.mxu0 %v2415
    %2845 = vmatpush1.msra.mxu0 %v2414
    %2846 = vmatprep.subr.mxu0 %v2419
    %2847 = vmatpush1.msra.mxu0 %v2418
    %2848 = vmatprep.subr.mxu0 %v2423
    %2849 = vmatpush1.msra.mxu0 %v2422
    %2850 = vmatprep.subr.mxu0 %v2427
    %2851 = vmatpush1.msra.mxu0 %v2426
    %2852 = vmatprep.subr.mxu0 %v2431
    %2853 = vmatpush1.msra.mxu0 %v2430
    %2854 = vmatprep.subr.mxu0 %v2435
    %2855 = vmatpush1.msra.mxu0 %v2434
    %2856 = vmatprep.subr.mxu0 %v2439
    %2857 = vmatpush1.msra.mxu0 %v2438
    %2858 = vmatprep.subr.mxu0 %v2443
    %2859 = vmatpush1.msra.mxu0 %v2442
    %2860 = vmatprep.subr.mxu0 %v2447
    %2861 = vmatpush1.msra.mxu0 %v2446
    %2862 = vmatprep.subr.mxu0 %v2451
    %2863 = vmatpush1.msra.mxu0 %v2450
    %2864 = vmatprep.subr.mxu0 %v2455
    %2865 = vmatpush1.msra.mxu0 %v2454
    %2866 = vmatprep.subr.mxu0 %v2459
    %2867 = vmatpush1.msra.mxu0 %v2458
    %2868 = vmatprep.subr.mxu0 %v2463
    %2869 = vmatpush1.msra.mxu0 %v2462
    %2870 = vmatprep.subr.mxu0 %v2467
    %2871 = vmatpush1.msra.mxu0 %v2466
    %2872 = vmatprep.subr.mxu0 %v2471
    %2873 = vmatpush1.msra.mxu0 %v2470
    %2874 = vmatprep.subr.mxu0 %v2475
    %2875 = vmatpush1.msra.mxu0 %v2474
    %2876 = vmatprep.subr.mxu0 %v2479
    %2877 = vmatpush1.msra.mxu0 %v2478
    %2878 = vmatprep.subr.mxu0 %v2483
    %2879 = vmatpush1.msra.mxu0 %v2482
    %2880 = vmatprep.subr.mxu0 %v2487
    %2881 = vmatpush1.msra.mxu0 %v2486
    %2882 = vmatprep.subr.mxu0 %v2491
    %2883 = vmatpush1.msra.mxu0 %v2490
    %2884 = vmatprep.subr.mxu0 %v2495
    %2885 = vmatpush1.msra.mxu0 %v2494
    %2886 = vmatprep.subr.mxu0 %v2499
    %2887 = vmatpush1.msra.mxu0 %v2498
    %2888 = vmatprep.subr.mxu0 %v2503
    %2889 = vmatpush1.msra.mxu0 %v2502
    %2890 = vmatprep.subr.mxu0 %v2507
    %2891 = vmatpush1.msra.mxu0 %v2506
    %2892 = vmatprep.subr.mxu0 %v2511
    %2893 = vmatpush1.msra.mxu0 %v2510
    %2894 = vmatprep.subr.mxu0 %v2515
    %2895 = vmatpush1.msra.mxu0 %v2514
    %2896 = vmatprep.subr.mxu0 %v2519
    %2897 = vmatpush1.msra.mxu0 %v2518
    %2898 = vmatprep.subr.mxu0 %v2523
    %2899 = vmatpush1.msra.mxu0 %v2522
    %2900 = vmatprep.subr.mxu0 %v2527
    %2901 = vmatpush1.msra.mxu0 %v2526
    %2902 = vmatprep.subr.mxu0 %v2531
    %2903 = vmatpush1.msra.mxu0 %v2530
    %2904 = vmatprep.subr.mxu0 %v2535
    %2905 = vmatpush1.msra.mxu0 %v2534
    %2906 = vmatprep.mubr.f32.mxu0 %v2357
    %2907 = vmatmul.mubr.f32.gmra.mrb[0].mxu0 %v2354
    %v2908 = vpop.f32.mrb[0].mxu0
    %v2909 = vadd.f32 0.0, %v2908
    %v2910 = vpop.f32.mrb[0].mxu0
    %v2911 = vadd.f32 0.0, %v2910
    %2912 = vmatprep.mubr.f32.mxu0 %v2367
    %2913 = vmatmul.mubr.f32.gmra.mrb[0].mxu0 %v2365
    %v2914 = vpop.f32.mrb[0].mxu0
    %v2915 = vadd.f32 0.0, %v2914
    %v2916 = vpop.f32.mrb[0].mxu0
    %v2917 = vadd.f32 0.0, %v2916
    %2918 = vmatprep.mubr.f32.mxu0 %v2377
    %2919 = vmatmul.mubr.f32.gmra.mrb[0].mxu0 %v2374
    %v2920 = vpop.f32.mrb[0].mxu0
    %v2921 = vadd.f32 0.0, %v2920
    %v2922 = vpop.f32.mrb[0].mxu0
    %v2923 = vadd.f32 0.0, %v2922
    %2924 = vmatprep.mubr.f32.mxu0 %v2387
    %2925 = vmatmul.mubr.f32.gmra.mrb[0].mxu0 %v2385
    %v2926 = vpop.f32.mrb[0].mxu0
    %v2927 = vadd.f32 0.0, %v2926
    %v2928 = vpop.f32.mrb[0].mxu0
    %v2929 = vadd.f32 0.0, %v2928
    %2930 = vdwg.mxu0
    %2931 = vmatprep.subr.mxu0 %v2539
    %2932 = vmatpush1.msra.mxu0 %v2538
    %2933 = vmatprep.subr.mxu0 %v2543
    %2934 = vmatpush1.msra.mxu0 %v2542
    %2935 = vmatprep.subr.mxu0 %v2547
    %2936 = vmatpush1.msra.mxu0 %v2546
    %2937 = vmatprep.subr.mxu0 %v2551
    %2938 = vmatpush1.msra.mxu0 %v2550
    %2939 = vmatprep.subr.mxu0 %v2555
    %2940 = vmatpush1.msra.mxu0 %v2554
    %2941 = vmatprep.subr.mxu0 %v2559
    %2942 = vmatpush1.msra.mxu0 %v2558
    %2943 = vmatprep.subr.mxu0 %v2563
    %2944 = vmatpush1.msra.mxu0 %v2562
    %2945 = vmatprep.subr.mxu0 %v2567
    %2946 = vmatpush1.msra.mxu0 %v2566
    %2947 = vmatprep.subr.mxu0 %v2571
    %2948 = vmatpush1.msra.mxu0 %v2570
    %2949 = vmatprep.subr.mxu0 %v2575
    %2950 = vmatpush1.msra.mxu0 %v2574
    %2951 = vmatprep.subr.mxu0 %v2579
    %2952 = vmatpush1.msra.mxu0 %v2578
    %2953 = vmatprep.subr.mxu0 %v2583
    %2954 = vmatpush1.msra.mxu0 %v2582
    %2955 = vmatprep.subr.mxu0 %v2587
    %2956 = vmatpush1.msra.mxu0 %v2586
    %2957 = vmatprep.subr.mxu0 %v2591
    %2958 = vmatpush1.msra.mxu0 %v2590
    %2959 = vmatprep.subr.mxu0 %v2595
    %2960 = vmatpush1.msra.mxu0 %v2594
    %2961 = vmatprep.subr.mxu0 %v2599
    %2962 = vmatpush1.msra.mxu0 %v2598
    %2963 = vmatprep.subr.mxu0 %v2603
    %2964 = vmatpush1.msra.mxu0 %v2602
    %2965 = vmatprep.subr.mxu0 %v2607
    %2966 = vmatpush1.msra.mxu0 %v2606
    %2967 = vmatprep.subr.mxu0 %v2611
    %2968 = vmatpush1.msra.mxu0 %v2610
    %2969 = vmatprep.subr.mxu0 %v2615
    %2970 = vmatpush1.msra.mxu0 %v2614
    %2971 = vmatprep.subr.mxu0 %v2619
    %2972 = vmatpush1.msra.mxu0 %v2618
    %2973 = vmatprep.subr.mxu0 %v2623
    %2974 = vmatpush1.msra.mxu0 %v2622
    %2975 = vmatprep.subr.mxu0 %v2627
    %2976 = vmatpush1.msra.mxu0 %v2626
    %2977 = vmatprep.subr.mxu0 %v2631
    %2978 = vmatpush1.msra.mxu0 %v2630
    %2979 = vmatprep.subr.mxu0 %v2635
    %2980 = vmatpush1.msra.mxu0 %v2634
    %2981 = vmatprep.subr.mxu0 %v2639
    %2982 = vmatpush1.msra.mxu0 %v2638
    %2983 = vmatprep.subr.mxu0 %v2643
    %2984 = vmatpush1.msra.mxu0 %v2642
    %2985 = vmatprep.subr.mxu0 %v2647
    %2986 = vmatpush1.msra.mxu0 %v2646
    %2987 = vmatprep.subr.mxu0 %v2651
    %2988 = vmatpush1.msra.mxu0 %v2650
    %2989 = vmatprep.subr.mxu0 %v2655
    %2990 = vmatpush1.msra.mxu0 %v2654
    %2991 = vmatprep.subr.mxu0 %v2659
    %2992 = vmatpush1.msra.mxu0 %v2658
    %2993 = vmatprep.subr.mxu0 %v2663
    %2994 = vmatpush1.msra.mxu0 %v2662
    %2995 = vmatprep.mubr.f32.mxu0 %v2363
    %2996 = vmatmul.mubr.f32.gmra.mrb[0].mxu0 %v2360
    %v2997 = vpop.f32.mrb[0].mxu0
    %v2998 = vadd.f32 %v2909, %v2997
    %v2999 = vpop.f32.mrb[0].mxu0
    %v3000 = vadd.f32 %v2911, %v2999
    %3001 = vmatprep.mubr.f32.mxu0 %v2371
    %3002 = vmatmul.mubr.f32.gmra.mrb[0].mxu0 %v2369
    %v3003 = vpop.f32.mrb[0].mxu0
    %v3004 = vadd.f32 %v2915, %v3003
    %v3005 = vpop.f32.mrb[0].mxu0
    %v3006 = vadd.f32 %v2917, %v3005
    %3007 = vmatprep.mubr.f32.mxu0 %v2383
    %3008 = vmatmul.mubr.f32.gmra.mrb[0].mxu0 %v2380
    %v3009 = vpop.f32.mrb[0].mxu0
    %v3010 = vadd.f32 %v2921, %v3009
    %v3011 = vpop.f32.mrb[0].mxu0
    %v3012 = vadd.f32 %v2923, %v3011
    %3013 = vmatprep.mubr.f32.mxu0 %v2391
    %3014 = vmatmul.mubr.f32.gmra.mrb[0].mxu0 %v2389
    %v3015 = vpop.f32.mrb[0].mxu0
    %v3016 = vadd.f32 %v2927, %v3015
    %v3017 = vpop.f32.mrb[0].mxu0
    %v3018 = vadd.f32 %v2929, %v3017
    %3019 = vdwg.mxu0
    %v3020 = vadd.f32 %v2119, %v2820
    %v3021 = vadd.f32 %v2121, %v2822
    %v3022 = vadd.f32 %v2297, %v2998
    %v3023 = vadd.f32 %v2299, %v3000
    %v3024 = vadd.f32 %v2125, %v2826
    %v3025 = vadd.f32 %v2127, %v2828
    %v3026 = vadd.f32 %v2303, %v3004
    %v3027 = vadd.f32 %v2305, %v3006
    %v3028 = vadd.f32 %v2131, %v2832
    %v3029 = vadd.f32 %v2133, %v2834
    %v3030 = vadd.f32 %v2309, %v3010
    %v3031 = vadd.f32 %v2311, %v3012
    %v3032 = vadd.f32 %v2137, %v2838
    %v3033 = vadd.f32 %v2139, %v2840
    %v3034 = vadd.f32 %v2315, %v3016
    %v3035 = vadd.f32 %v2317, %v3018
    %v3036 = vld [vmem:[#allocation12] sm:$0xf]
    %v3038 = vlaneseq
    %v3039 = vshrl.u32 %v3038, 7
    %v3040 = vsub.s32 0, %v3039
    %v3041 = vrot.slane %v3036, %v3040
    %v3042 = vlaneseq
    %v3043 = vshrl.u32 %v3042, 7
    %v3044 = vsub.s32 1, %v3043
    %v3045 = vrot.slane %v3036, %v3044
    %v3046 = vlaneseq
    %v3047 = vshrl.u32 %v3046, 7
    %v3048 = vsub.s32 2, %v3047
    %v3049 = vrot.slane %v3036, %v3048
    %v3050 = vlaneseq
    %v3051 = vshrl.u32 %v3050, 7
    %v3052 = vsub.s32 3, %v3051
    %v3053 = vrot.slane %v3036, %v3052
    %v3058 = vadd.f32 %v3020, %v3041
    %v3059 = vadd.f32 %v3021, %v3045
    %v3060 = vadd.f32 %v3022, %v3049
    %v3061 = vadd.f32 %v3023, %v3053
    %v3062 = vadd.f32 %v3024, %v3041
    %v3063 = vadd.f32 %v3025, %v3045
    %v3064 = vadd.f32 %v3026, %v3049
    %v3065 = vadd.f32 %v3027, %v3053
    %v3066 = vadd.f32 %v3028, %v3041
    %v3067 = vadd.f32 %v3029, %v3045
    %v3068 = vadd.f32 %v3030, %v3049
    %v3069 = vadd.f32 %v3031, %v3053
    %v3070 = vadd.f32 %v3032, %v3041
    %v3071 = vadd.f32 %v3033, %v3045
    %v3072 = vadd.f32 %v3034, %v3049
    %v3073 = vadd.f32 %v3035, %v3053
    %v3074 = vmax.f32 %v3058, 0.0
    %v3075 = vmax.f32 %v3059, 0.0
    %v3076 = vmax.f32 %v3060, 0.0
    %v3077 = vmax.f32 %v3061, 0.0
    %v3078 = vmax.f32 %v3062, 0.0
    %v3079 = vmax.f32 %v3063, 0.0
    %v3080 = vmax.f32 %v3064, 0.0
    %v3081 = vmax.f32 %v3065, 0.0
    %v3082 = vmax.f32 %v3066, 0.0
    %v3083 = vmax.f32 %v3067, 0.0
    %v3084 = vmax.f32 %v3068, 0.0
    %v3085 = vmax.f32 %v3069, 0.0
    %v3086 = vmax.f32 %v3070, 0.0
    %v3087 = vmax.f32 %v3071, 0.0
    %v3088 = vmax.f32 %v3072, 0.0
    %v3089 = vmax.f32 %v3073, 0.0
    %v3090 = vadd.f32 %v3074, %v3078
    %v3091 = vrot.slane %v3090, 4
    %v3092 = vadd.f32 %v3090, %v3091
    %v3093 = vrot.slane %v3092, 2
    %v3094 = vadd.f32 %v3092, %v3093
    %v3095 = vrot.slane %v3094, 1
    %v3096 = vadd.f32 %v3094, %v3095
    %v3097 = vadd.f32 %v3075, %v3079
    %v3098 = vrot.slane %v3097, 4
    %v3099 = vadd.f32 %v3097, %v3098
    %v3100 = vrot.slane %v3099, 2
    %v3101 = vadd.f32 %v3099, %v3100
    %v3102 = vrot.slane %v3101, 1
    %v3103 = vadd.f32 %v3101, %v3102
    %v3104 = vadd.f32 %v3076, %v3080
    %v3105 = vrot.slane %v3104, 4
    %v3106 = vadd.f32 %v3104, %v3105
    %v3107 = vrot.slane %v3106, 2
    %v3108 = vadd.f32 %v3106, %v3107
    %v3109 = vrot.slane %v3108, 1
    %v3110 = vadd.f32 %v3108, %v3109
    %v3111 = vadd.f32 %v3077, %v3081
    %v3112 = vrot.slane %v3111, 4
    %v3113 = vadd.f32 %v3111, %v3112
    %v3114 = vrot.slane %v3113, 2
    %v3115 = vadd.f32 %v3113, %v3114
    %v3116 = vrot.slane %v3115, 1
    %v3117 = vadd.f32 %v3115, %v3116
    %v3118 = vadd.f32 %v3082, %v3086
    %v3119 = vrot.slane %v3118, 4
    %v3120 = vadd.f32 %v3118, %v3119
    %v3121 = vrot.slane %v3120, 2
    %v3122 = vadd.f32 %v3120, %v3121
    %v3123 = vrot.slane %v3122, 1
    %v3124 = vadd.f32 %v3122, %v3123
    %v3125 = vadd.f32 %v3083, %v3087
    %v3126 = vrot.slane %v3125, 4
    %v3127 = vadd.f32 %v3125, %v3126
    %v3128 = vrot.slane %v3127, 2
    %v3129 = vadd.f32 %v3127, %v3128
    %v3130 = vrot.slane %v3129, 1
    %v3131 = vadd.f32 %v3129, %v3130
    %v3132 = vadd.f32 %v3084, %v3088
    %v3133 = vrot.slane %v3132, 4
    %v3134 = vadd.f32 %v3132, %v3133
    %v3135 = vrot.slane %v3134, 2
    %v3136 = vadd.f32 %v3134, %v3135
    %v3137 = vrot.slane %v3136, 1
    %v3138 = vadd.f32 %v3136, %v3137
    %v3139 = vadd.f32 %v3085, %v3089
    %v3140 = vrot.slane %v3139, 4
    %v3141 = vadd.f32 %v3139, %v3140
    %v3142 = vrot.slane %v3141, 2
    %v3143 = vadd.f32 %v3141, %v3142
    %v3144 = vrot.slane %v3143, 1
    %v3145 = vadd.f32 %v3143, %v3144
    %v3146 = vld [vmem:[#allocation13] sm:$0xff]
    %v3147 = vld [vmem:[#allocation13 + $0x8] sm:$0xff]
    %v3148 = vld [vmem:[#allocation13 + $0x10] sm:$0xff]
    %v3149 = vld [vmem:[#allocation13 + $0x18] sm:$0xff]
    %v3150 = vld [vmem:[#allocation13 + $0x20] sm:$0xff]
    %v3151 = vld [vmem:[#allocation13 + $0x28] sm:$0xff]
    %v3152 = vld [vmem:[#allocation13 + $0x30] sm:$0xff]
    %v3153 = vld [vmem:[#allocation13 + $0x38] sm:$0xff]
    %v3154 = vld [vmem:[#allocation13 + $0x40] sm:$0xff]
    %v3155 = vld [vmem:[#allocation13 + $0x48] sm:$0xff]
    %v3156 = vld [vmem:[#allocation13 + $0x50] sm:$0xff]
    %v3157 = vld [vmem:[#allocation13 + $0x58] sm:$0xff]
    %v3158 = vld [vmem:[#allocation13 + $0x60] sm:$0xff]
    %v3159 = vld [vmem:[#allocation13 + $0x68] sm:$0xff]
    %v3160 = vld [vmem:[#allocation13 + $0x70] sm:$0xff]
    %v3161 = vld [vmem:[#allocation13 + $0x78] sm:$0xff]
    %v3162 = vld [vmem:[#allocation13 + $0x80] sm:$0xff]
    %v3163 = vld [vmem:[#allocation13 + $0x88] sm:$0xff]
    %v3164 = vld [vmem:[#allocation13 + $0x90] sm:$0xff]
    %v3165 = vld [vmem:[#allocation13 + $0x98] sm:$0xff]
    %v3166 = vld [vmem:[#allocation13 + $0xa0] sm:$0xff]
    %v3167 = vld [vmem:[#allocation13 + $0xa8] sm:$0xff]
    %v3168 = vld [vmem:[#allocation13 + $0xb0] sm:$0xff]
    %v3169 = vld [vmem:[#allocation13 + $0xb8] sm:$0xff]
    %v3170 = vld [vmem:[#allocation13 + $0xc0] sm:$0xff]
    %v3171 = vld [vmem:[#allocation13 + $0xc8] sm:$0xff]
    %v3172 = vld [vmem:[#allocation13 + $0xd0] sm:$0xff]
    %v3173 = vld [vmem:[#allocation13 + $0xd8] sm:$0xff]
    %v3174 = vld [vmem:[#allocation13 + $0xe0] sm:$0xff]
    %v3175 = vld [vmem:[#allocation13 + $0xe8] sm:$0xff]
    %v3176 = vld [vmem:[#allocation13 + $0xf0] sm:$0xff]
    %v3177 = vld [vmem:[#allocation13 + $0xf8] sm:$0xff]
    %v3178 = vld [vmem:[#allocation13 + $0x100] sm:$0xff]
    %v3179 = vld [vmem:[#allocation13 + $0x108] sm:$0xff]
    %v3180 = vld [vmem:[#allocation13 + $0x110] sm:$0xff]
    %v3181 = vld [vmem:[#allocation13 + $0x118] sm:$0xff]
    %v3182 = vld [vmem:[#allocation13 + $0x120] sm:$0xff]
    %v3183 = vld [vmem:[#allocation13 + $0x128] sm:$0xff]
    %v3184 = vld [vmem:[#allocation13 + $0x130] sm:$0xff]
    %v3185 = vld [vmem:[#allocation13 + $0x138] sm:$0xff]
    %v3186 = vld [vmem:[#allocation13 + $0x140] sm:$0xff]
    %v3187 = vld [vmem:[#allocation13 + $0x148] sm:$0xff]
    %v3188 = vld [vmem:[#allocation13 + $0x150] sm:$0xff]
    %v3189 = vld [vmem:[#allocation13 + $0x158] sm:$0xff]
    %v3190 = vld [vmem:[#allocation13 + $0x160] sm:$0xff]
    %v3191 = vld [vmem:[#allocation13 + $0x168] sm:$0xff]
    %v3192 = vld [vmem:[#allocation13 + $0x170] sm:$0xff]
    %v3193 = vld [vmem:[#allocation13 + $0x178] sm:$0xff]
    %v3194 = vld [vmem:[#allocation13 + $0x180] sm:$0xff]
    %v3195 = vld [vmem:[#allocation13 + $0x188] sm:$0xff]
    %v3196 = vld [vmem:[#allocation13 + $0x190] sm:$0xff]
    %v3197 = vld [vmem:[#allocation13 + $0x198] sm:$0xff]
    %v3198 = vld [vmem:[#allocation13 + $0x1a0] sm:$0xff]
    %v3199 = vld [vmem:[#allocation13 + $0x1a8] sm:$0xff]
    %v3200 = vld [vmem:[#allocation13 + $0x1b0] sm:$0xff]
    %v3201 = vld [vmem:[#allocation13 + $0x1b8] sm:$0xff]
    %v3202 = vld [vmem:[#allocation13 + $0x1c0] sm:$0xff]
    %v3203 = vld [vmem:[#allocation13 + $0x1c8] sm:$0xff]
    %v3204 = vld [vmem:[#allocation13 + $0x1d0] sm:$0xff]
    %v3205 = vld [vmem:[#allocation13 + $0x1d8] sm:$0xff]
    %v3206 = vld [vmem:[#allocation13 + $0x1e0] sm:$0xff]
    %v3207 = vld [vmem:[#allocation13 + $0x1e8] sm:$0xff]
    %v3208 = vld [vmem:[#allocation13 + $0x1f0] sm:$0xff]
    %v3209 = vld [vmem:[#allocation13 + $0x1f8] sm:$0xff]
    %v3210 = vld [vmem:[#allocation15] sm:$0x1]
    %v3212 = vlaneseq
    %v3213 = vshrl.u32 %v3212, 7
    %v3214 = vsub.s32 0, %v3213
    %v3215 = vrot.slane %v3210, %v3214
    %vm3225 = vcmask 1041409
    %v3226 = vsel %vm3225, %v3124, %v3096
    %v3227 = vsel %vm3225, %v3131, %v3103
    %v3228 = vsel %vm3225, %v3138, %v3110
    %v3229 = vsel %vm3225, %v3145, %v3117
    %3234 = vmatprep.subr.mxu0 0.0
    %3235 = vmatpush1.msra.mxu0 %v3146
    %3236 = vmatprep.subr.mxu0 0.0
    %3237 = vmatpush1.msra.mxu0 %v3147
    %3238 = vmatprep.subr.mxu0 0.0
    %3239 = vmatpush1.msra.mxu0 %v3148
    %3240 = vmatprep.subr.mxu0 0.0
    %3241 = vmatpush1.msra.mxu0 %v3149
    %3242 = vmatprep.subr.mxu0 0.0
    %3243 = vmatpush1.msra.mxu0 %v3150
    %3244 = vmatprep.subr.mxu0 0.0
    %3245 = vmatpush1.msra.mxu0 %v3151
    %3246 = vmatprep.subr.mxu0 0.0
    %3247 = vmatpush1.msra.mxu0 %v3152
    %3248 = vmatprep.subr.mxu0 0.0
    %3249 = vmatpush1.msra.mxu0 %v3153
    %3250 = vmatprep.subr.mxu0 0.0
    %3251 = vmatpush1.msra.mxu0 %v3154
    %3252 = vmatprep.subr.mxu0 0.0
    %3253 = vmatpush1.msra.mxu0 %v3155
    %3254 = vmatprep.subr.mxu0 0.0
    %3255 = vmatpush1.msra.mxu0 %v3156
    %3256 = vmatprep.subr.mxu0 0.0
    %3257 = vmatpush1.msra.mxu0 %v3157
    %3258 = vmatprep.subr.mxu0 0.0
    %3259 = vmatpush1.msra.mxu0 %v3158
    %3260 = vmatprep.subr.mxu0 0.0
    %3261 = vmatpush1.msra.mxu0 %v3159
    %3262 = vmatprep.subr.mxu0 0.0
    %3263 = vmatpush1.msra.mxu0 %v3160
    %3264 = vmatprep.subr.mxu0 0.0
    %3265 = vmatpush1.msra.mxu0 %v3161
    %3266 = vmatprep.subr.mxu0 0.0
    %3267 = vmatpush1.msra.mxu0 %v3162
    %3268 = vmatprep.subr.mxu0 0.0
    %3269 = vmatpush1.msra.mxu0 %v3163
    %3270 = vmatprep.subr.mxu0 0.0
    %3271 = vmatpush1.msra.mxu0 %v3164
    %3272 = vmatprep.subr.mxu0 0.0
    %3273 = vmatpush1.msra.mxu0 %v3165
    %3274 = vmatprep.subr.mxu0 0.0
    %3275 = vmatpush1.msra.mxu0 %v3166
    %3276 = vmatprep.subr.mxu0 0.0
    %3277 = vmatpush1.msra.mxu0 %v3167
    %3278 = vmatprep.subr.mxu0 0.0
    %3279 = vmatpush1.msra.mxu0 %v3168
    %3280 = vmatprep.subr.mxu0 0.0
    %3281 = vmatpush1.msra.mxu0 %v3169
    %3282 = vmatprep.subr.mxu0 0.0
    %3283 = vmatpush1.msra.mxu0 %v3170
    %3284 = vmatprep.subr.mxu0 0.0
    %3285 = vmatpush1.msra.mxu0 %v3171
    %3286 = vmatprep.subr.mxu0 0.0
    %3287 = vmatpush1.msra.mxu0 %v3172
    %3288 = vmatprep.subr.mxu0 0.0
    %3289 = vmatpush1.msra.mxu0 %v3173
    %3290 = vmatprep.subr.mxu0 0.0
    %3291 = vmatpush1.msra.mxu0 %v3174
    %3292 = vmatprep.subr.mxu0 0.0
    %3293 = vmatpush1.msra.mxu0 %v3175
    %3294 = vmatprep.subr.mxu0 0.0
    %3295 = vmatpush1.msra.mxu0 %v3176
    %3296 = vmatprep.subr.mxu0 0.0
    %3297 = vmatpush1.msra.mxu0 %v3177
    %3298 = vmatprep.mubr.f32.mxu0 %v3227
    %3299 = vmatmul.mubr.f32.gmra.mrb[0].mxu0 %v3226
    %v3300 = vpop.f32.mrb[0].mxu0
    %v3301 = vadd.f32 %v3215, %v3300
    %v3302 = vpop.f32.mrb[0].mxu0
    %3303 = vdwg.mxu0
    %3304 = vmatprep.subr.mxu0 0.0
    %3305 = vmatpush1.msra.mxu0 %v3178
    %3306 = vmatprep.subr.mxu0 0.0
    %3307 = vmatpush1.msra.mxu0 %v3179
    %3308 = vmatprep.subr.mxu0 0.0
    %3309 = vmatpush1.msra.mxu0 %v3180
    %3310 = vmatprep.subr.mxu0 0.0
    %3311 = vmatpush1.msra.mxu0 %v3181
    %3312 = vmatprep.subr.mxu0 0.0
    %3313 = vmatpush1.msra.mxu0 %v3182
    %3314 = vmatprep.subr.mxu0 0.0
    %3315 = vmatpush1.msra.mxu0 %v3183
    %3316 = vmatprep.subr.mxu0 0.0
    %3317 = vmatpush1.msra.mxu0 %v3184
    %3318 = vmatprep.subr.mxu0 0.0
    %3319 = vmatpush1.msra.mxu0 %v3185
    %3320 = vmatprep.subr.mxu0 0.0
    %3321 = vmatpush1.msra.mxu0 %v3186
    %3322 = vmatprep.subr.mxu0 0.0
    %3323 = vmatpush1.msra.mxu0 %v3187
    %3324 = vmatprep.subr.mxu0 0.0
    %3325 = vmatpush1.msra.mxu0 %v3188
    %3326 = vmatprep.subr.mxu0 0.0
    %3327 = vmatpush1.msra.mxu0 %v3189
    %3328 = vmatprep.subr.mxu0 0.0
    %3329 = vmatpush1.msra.mxu0 %v3190
    %3330 = vmatprep.subr.mxu0 0.0
    %3331 = vmatpush1.msra.mxu0 %v3191
    %3332 = vmatprep.subr.mxu0 0.0
    %3333 = vmatpush1.msra.mxu0 %v3192
    %3334 = vmatprep.subr.mxu0 0.0
    %3335 = vmatpush1.msra.mxu0 %v3193
    %3336 = vmatprep.subr.mxu0 0.0
    %3337 = vmatpush1.msra.mxu0 %v3194
    %3338 = vmatprep.subr.mxu0 0.0
    %3339 = vmatpush1.msra.mxu0 %v3195
    %3340 = vmatprep.subr.mxu0 0.0
    %3341 = vmatpush1.msra.mxu0 %v3196
    %3342 = vmatprep.subr.mxu0 0.0
    %3343 = vmatpush1.msra.mxu0 %v3197
    %3344 = vmatprep.subr.mxu0 0.0
    %3345 = vmatpush1.msra.mxu0 %v3198
    %3346 = vmatprep.subr.mxu0 0.0
    %3347 = vmatpush1.msra.mxu0 %v3199
    %3348 = vmatprep.subr.mxu0 0.0
    %3349 = vmatpush1.msra.mxu0 %v3200
    %3350 = vmatprep.subr.mxu0 0.0
    %3351 = vmatpush1.msra.mxu0 %v3201
    %3352 = vmatprep.subr.mxu0 0.0
    %3353 = vmatpush1.msra.mxu0 %v3202
    %3354 = vmatprep.subr.mxu0 0.0
    %3355 = vmatpush1.msra.mxu0 %v3203
    %3356 = vmatprep.subr.mxu0 0.0
    %3357 = vmatpush1.msra.mxu0 %v3204
    %3358 = vmatprep.subr.mxu0 0.0
    %3359 = vmatpush1.msra.mxu0 %v3205
    %3360 = vmatprep.subr.mxu0 0.0
    %3361 = vmatpush1.msra.mxu0 %v3206
    %3362 = vmatprep.subr.mxu0 0.0
    %3363 = vmatpush1.msra.mxu0 %v3207
    %3364 = vmatprep.subr.mxu0 0.0
    %3365 = vmatpush1.msra.mxu0 %v3208
    %3366 = vmatprep.subr.mxu0 0.0
    %3367 = vmatpush1.msra.mxu0 %v3209
    %3368 = vmatprep.mubr.f32.mxu0 %v3229
    %3369 = vmatmul.mubr.f32.gmra.mrb[0].mxu0 %v3228
    %v3370 = vpop.f32.mrb[0].mxu0
    %v3371 = vadd.f32 %v3301, %v3370
    %v3372 = vpop.f32.mrb[0].mxu0
    %3373 = vdwg.mxu0
    %3374 = vst [vmem:[#allocation16] sm:$0x3] %v3371
    // Predicated region
    $region58: #{tpu_custom_call.1} parent=1 // pred_check
      _
    $region59: #{tpu_custom_call.1} parent=1 // pred_check_branch
      %3376 = sbr.rel (0) target = $region61
    $region60: #{tpu_custom_call.1} parent=1 // pred_region
      %s3378 = ssub.s32 32, 32
      %3379 = vsyncadd [#allocation6], %s3378
      %s3381 = sshll.u32 [#allocation16], 4
      %s3382 = int_to_ptr.vmem [resolvable:$true] %s3381
      %3384 = dma.vmem_to_hbm [thread:$0]  %s3382, 32, %s7, [#allocation6]
    $region61: #{tpu_custom_call.1} parent=1 // pred_fallthru
      _
    // Predicated region
    $region62: #{tpu_custom_call.1} parent=1 // pred_check
      _
    $region63: #{tpu_custom_call.1} parent=1 // pred_check_branch
      %3386 = sbr.rel (0) target = $region65
    $region64: #{tpu_custom_call.1} parent=1 // pred_region
      %3387 = dma.done [#allocation6], 32
    $region65: #{tpu_custom_call.1} parent=1 // pred_fallthru
      _
    %3388 = vsyncpa [#allocation5], 1
    %3389 = vsyncpa [#allocation8], 1
    %3390 = vsyncpa [#allocation11], 1
    %3391 = vsyncpa [#allocation14], 1
    %3392 = vsyncpa [#allocation6], 1

</llo_original>
